<compile_context>
chip_gen: v6e
topology: v6e:2x2x1
jax: 0.10.0
libtpu: 0.0.40
codegen_flags: <defaults>
</compile_context>

<pallas_src>
import jax
import jax.numpy as jnp
from jax import lax
from jax.experimental import pallas as pl
from jax.experimental.pallas import tpu as pltpu

EPS = 1e-5          # PyTorch BatchNorm2d default eps
NEG_SLOPE = 0.2     # LeakyReLU(0.2)


# ------------------------------ Pallas kernel -------------------------------

def _fused_layer_kernel(w_ref, p_ref, o_ref):
    """Fused ConvTranspose-as-GEMM + train-mode BatchNorm + LeakyReLU.

    w_ref: (Cout, K)  bf16   flipped transposed-conv weight (GEMM LHS)
    p_ref: (K, M)     bf16   im2col patches^T (GEMM RHS), M = N*OH*OW on lanes
    o_ref: (Cout, M)  f32    normalized + activated output
    """
    # MXU: bf16 x bf16 -> f32 accumulation.
    y = jnp.dot(w_ref[...], p_ref[...], preferred_element_type=jnp.float32)

    # Per-channel (per sublane-row) batch statistics over the lane axis.
    mean = jnp.mean(y, axis=1, keepdims=True)            # (Cout, 1)
    yc = y - mean
    var = jnp.mean(yc * yc, axis=1, keepdims=True)       # centered: no cancellation
    yn = yc * lax.rsqrt(var + EPS)                       # gamma=1, beta=0

    o_ref[...] = jnp.where(yn >= 0, yn, NEG_SLOPE * yn)  # LeakyReLU(0.2)


# ------------------------------- layer call ---------------------------------

def _im2col_T(x_cf, k, stride, pad):
    """Channel-first im2col for the regular-conv equivalent of a transposed conv.

    x_cf: (Cin, N, H, W). Returns (patches^T of shape (Cin*k*k, N*OH*OW), OH, OW).
    """
    Cin, N, H, W = x_cf.shape
    pp = k - 1 - pad                      # padding of the equivalent regular conv
    Hd, Wd = (H - 1) * stride + 1, (W - 1) * stride + 1
    if stride > 1:
        # TODO(synk): stride-2 layers could use the 4-parity sub-pixel
        # decomposition to skip the 75% structural zeros introduced here.
        xd = jnp.zeros((Cin, N, Hd, Wd), x_cf.dtype)
        xd = xd.at[:, :, ::stride, ::stride].set(x_cf)
    else:
        xd = x_cf
    xp = jnp.pad(xd, ((0, 0), (0, 0), (pp, pp), (pp, pp)))
    OH = Hd + 2 * pp - k + 1
    OW = Wd + 2 * pp - k + 1
    cols = [xp[:, :, kh:kh + OH, kw:kw + OW] for kh in range(k) for kw in range(k)]
    pat = jnp.stack(cols, axis=1).reshape(Cin * k * k, N * OH * OW)  # (K, M)
    return pat, OH, OW


def conv_transpose_bn_lrelu(x_cf, wt, stride, pad):
    """x_cf: (Cin, N, H, W) channel-first f32; wt: (Cin, Cout, k, k) (PyTorch
    ConvTranspose2d layout). Returns (Cout, N, OH, OW) channel-first f32."""
    Cin, N, H, W = x_cf.shape
    _, Cout, k, _ = wt.shape

    # bf16 MXU inputs (halves glue + DMA bytes); kernel accumulates in f32.
    pat, OH, OW = _im2col_T(x_cf.astype(jnp.bfloat16), k, stride, pad)     # (K, M)
    w_t = (wt[:, :, ::-1, ::-1].transpose(1, 0, 2, 3)
           .reshape(Cout, Cin * k * k).astype(jnp.bfloat16))               # (Cout, K)
    K, M = pat.shape

    out = pl.pallas_call(
        _fused_layer_kernel,
        out_shape=jax.ShapeDtypeStruct((Cout, M), jnp.float32),
        grid=(1,),
        in_specs=[pl.BlockSpec((Cout, K), lambda i: (0, 0)),
                  pl.BlockSpec((K, M), lambda i: (0, 0))],
        out_specs=pl.BlockSpec((Cout, M), lambda i: (0, 0)),
        compiler_params=pltpu.CompilerParams(
            dimension_semantics=("arbitrary",)),
    )(w_t, pat)

    return out.reshape(Cout, N, OH, OW)


# --------------------------- Generator (4 layers) ----------------------------

_LAYER_CFG = [(1, 0), (2, 1), (2, 1), (2, 1)]   # (stride, pad) per layer, k=4


def init_generator_params(key, nz, nch_g):
    """Deterministic synthetic init of the ConvTranspose2d weights (Cin, Cout, 4, 4).
    (The module's _init_weight never touches ConvTranspose2d; BN has gamma=1, beta=0.)"""
    chans = [(nz, nch_g * 8), (nch_g * 8, nch_g * 4),
             (nch_g * 4, nch_g * 2), (nch_g * 2, nch_g)]
    params = []
    for cin, cout in chans:
        key, sub = jax.random.split(key)
        std = 1.0 / float(cin * 16) ** 0.5
        params.append(jax.random.normal(sub, (cin, cout, 4, 4), jnp.float32) * std)
    return params


def generator_forward(z, params):
    # NCHW -> channel-first (C, N, H, W) once at entry.
    x = z.transpose(1, 0, 2, 3)
    for wt, (s, p) in zip(params, _LAYER_CFG):
        x = conv_transpose_bn_lrelu(x, wt, s, p)
    # back to NCHW once at exit.
    return x.transpose(1, 0, 2, 3)


# ------------------------------ pure-JAX ref ---------------------------------
# Reference uses the same MXU precision (bf16 inputs, f32 accumulation) so the
# comparison isolates the kernel's correctness rather than bf16 rounding.

def _ref_layer(x, wt, stride, pad):
    k = wt.shape[-1]
    pp = k - 1 - pad
    w = wt[:, :, ::-1, ::-1].transpose(1, 0, 2, 3)  # OIHW, spatially flipped
    y = lax.conv_general_dilated(
        x.astype(jnp.bfloat16), w.astype(jnp.bfloat16),
        window_strides=(1, 1),
        padding=[(pp, pp), (pp, pp)],
        lhs_dilation=(stride, stride),
        dimension_numbers=('NCHW', 'OIHW', 'NCHW'),
        preferred_element_type=jnp.float32)
    mean = y.mean(axis=(0, 2, 3), keepdims=True)
    var = ((y - mean) ** 2).mean(axis=(0, 2, 3), keepdims=True)
    yn = (y - mean) * lax.rsqrt(var + EPS)
    return jnp.where(yn >= 0, yn, NEG_SLOPE * yn)


def generator_reference(z, params):
    x = z
    for wt, (s, p) in zip(params, _LAYER_CFG):
        x = _ref_layer(x, wt, s, p)
    return x


# ---------------------------------- main -------------------------------------

if __name__ == "__main__":
    key = jax.random.PRNGKey(0)
    kz, kp = jax.random.split(key)

    # small shapes consistent with the module: z is (N, nz, 1, 1)
    N, nz, nch_g = 2, 32, 8
    z = jax.random.normal(kz, (N, nz, 1, 1), jnp.float32)
    params = init_generator_params(kp, nz=nz, nch_g=nch_g)

    out = jax.jit(generator_forward)(z, params)
    out = jax.block_until_ready(out)
    assert out.shape == (N, nch_g, 32, 32), out.shape

    ref = generator_reference(z, params)
    err = float(jnp.max(jnp.abs(out - ref)))
    assert jnp.allclose(out, ref, rtol=1e-2, atol=1e-2), f"max abs err = {err}"

    print("KERNEL_OK")
</pallas_src>

<mosaic_0001>
module attributes {stable_mosaic.version = 11 : i64} {
  func.func @_fused_layer_kernel(%arg0: i32, %arg1: memref<64x512xbf16, #tpu.memory_space<vmem>>, %arg2: memref<512x32xbf16, #tpu.memory_space<vmem>>, %arg3: memref<64x32xf32, #tpu.memory_space<vmem>>) attributes {dimension_semantics = [#tpu.dimension_semantics<arbitrary>], iteration_bounds = array<i64: 1>, scalar_prefetch = 0 : i64, scratch_operands = 0 : i64, tpu.core_type = #tpu.core_type<tc>, window_params = [{pipeline_mode = #tpu.pipeline_mode<synchronous>, transform_indices = @transform_0, window_bounds = array<i64: 64, 512>}, {pipeline_mode = #tpu.pipeline_mode<synchronous>, transform_indices = @transform_1, window_bounds = array<i64: 512, 32>}, {pipeline_mode = #tpu.pipeline_mode<synchronous>, transform_indices = @transform_2, window_bounds = array<i64: 64, 32>}]} {
    %c0 = arith.constant 0 : index
    %c0_0 = arith.constant 0 : index
    %0 = vector.load %arg1[%c0, %c0_0] : memref<64x512xbf16, #tpu.memory_space<vmem>>, vector<64x512xbf16>
    %c0_1 = arith.constant 0 : index
    %c0_2 = arith.constant 0 : index
    %1 = vector.load %arg2[%c0_1, %c0_2] : memref<512x32xbf16, #tpu.memory_space<vmem>>, vector<512x32xbf16>
    %cst = arith.constant dense<0.000000e+00> : vector<64x32xf32>
    %2 = tpu.matmul %0, %1, %cst {dimension_numbers = #tpu.dot_dimension_numbers<[1], [0], [0], [1], [0, 0, 1, 1], [], []>} : vector<64x512xbf16>, vector<512x32xbf16>, vector<64x32xf32> -> vector<64x32xf32>
    %cst_3 = arith.constant dense<0.000000e+00> : vector<64xf32>
    %3 = vector.multi_reduction <add>, %2, %cst_3 [1] : vector<64x32xf32> to vector<64xf32>
    %4 = vector.shape_cast %3 : vector<64xf32> to vector<64x1xf32>
    %cst_4 = arith.constant 3.200000e+01 : f32
    %5 = vector.broadcast %cst_4 : f32 to vector<64x1xf32>
    %6 = arith.divf %4, %5 : vector<64x1xf32>
    %7 = vector.broadcast %6 : vector<64x1xf32> to vector<64x32xf32>
    %8 = arith.subf %2, %7 : vector<64x32xf32>
    %9 = arith.mulf %8, %8 : vector<64x32xf32>
    %cst_5 = arith.constant dense<0.000000e+00> : vector<64xf32>
    %10 = vector.multi_reduction <add>, %9, %cst_5 [1] : vector<64x32xf32> to vector<64xf32>
    %11 = vector.shape_cast %10 : vector<64xf32> to vector<64x1xf32>
    %cst_6 = arith.constant 3.200000e+01 : f32
    %12 = vector.broadcast %cst_6 : f32 to vector<64x1xf32>
    %13 = arith.divf %11, %12 : vector<64x1xf32>
    %cst_7 = arith.constant 9.99999974E-6 : f32
    %14 = vector.broadcast %cst_7 : f32 to vector<64x1xf32>
    %15 = arith.addf %13, %14 : vector<64x1xf32>
    %16 = math.rsqrt %15 : vector<64x1xf32>
    %17 = vector.broadcast %16 : vector<64x1xf32> to vector<64x32xf32>
    %18 = arith.mulf %8, %17 : vector<64x32xf32>
    %cst_8 = arith.constant 0.000000e+00 : f32
    %19 = vector.broadcast %cst_8 : f32 to vector<64x32xf32>
    %20 = arith.cmpf oge, %18, %19 : vector<64x32xf32>
    %cst_9 = arith.constant 2.000000e-01 : f32
    %21 = vector.broadcast %cst_9 : f32 to vector<64x32xf32>
    %22 = arith.mulf %21, %18 : vector<64x32xf32>
    %23 = arith.select %20, %18, %22 : vector<64x32xi1>, vector<64x32xf32>
    %c0_10 = arith.constant 0 : index
    %c0_11 = arith.constant 0 : index
    %24 = vector.load %arg3[%c0_10, %c0_11] : memref<64x32xf32, #tpu.memory_space<vmem>>, vector<64x32xf32>
    tpu.vector_store %arg3[%c0_10, %c0_11], %23 {strides = array<i32>} : memref<64x32xf32, #tpu.memory_space<vmem>>, vector<64x32xf32>,
    return
  }
  func.func @transform_0(%arg0: i32) -> (i32, i32) {
    %c0_i32 = arith.constant 0 : i32
    %c0_i32_0 = arith.constant 0 : i32
    %c0_i32_1 = arith.constant 0 : i32
    return %c0_i32, %c0_i32_0 : i32, i32
  }
  func.func @transform_1(%arg0: i32) -> (i32, i32) {
    %c0_i32 = arith.constant 0 : i32
    %c0_i32_0 = arith.constant 0 : i32
    %c0_i32_1 = arith.constant 0 : i32
    return %c0_i32, %c0_i32_0 : i32, i32
  }
  func.func @transform_2(%arg0: i32) -> (i32, i32) {
    %c0_i32 = arith.constant 0 : i32
    %c0_i32_0 = arith.constant 0 : i32
    %c0_i32_1 = arith.constant 0 : i32
    return %c0_i32, %c0_i32_0 : i32, i32
  }
}

module attributes {stable_mosaic.version = 11 : i64} {
  func.func @_fused_layer_kernel(%arg0: i32, %arg1: memref<32x1024xbf16, #tpu.memory_space<vmem>>, %arg2: memref<1024x128xbf16, #tpu.memory_space<vmem>>, %arg3: memref<32x128xf32, #tpu.memory_space<vmem>>) attributes {dimension_semantics = [#tpu.dimension_semantics<arbitrary>], iteration_bounds = array<i64: 1>, scalar_prefetch = 0 : i64, scratch_operands = 0 : i64, tpu.core_type = #tpu.core_type<tc>, window_params = [{pipeline_mode = #tpu.pipeline_mode<synchronous>, transform_indices = @transform_0, window_bounds = array<i64: 32, 1024>}, {pipeline_mode = #tpu.pipeline_mode<synchronous>, transform_indices = @transform_1, window_bounds = array<i64: 1024, 128>}, {pipeline_mode = #tpu.pipeline_mode<synchronous>, transform_indices = @transform_2, window_bounds = array<i64: 32, 128>}]} {
    %c0 = arith.constant 0 : index
    %c0_0 = arith.constant 0 : index
    %0 = vector.load %arg1[%c0, %c0_0] : memref<32x1024xbf16, #tpu.memory_space<vmem>>, vector<32x1024xbf16>
    %c0_1 = arith.constant 0 : index
    %c0_2 = arith.constant 0 : index
    %1 = vector.load %arg2[%c0_1, %c0_2] : memref<1024x128xbf16, #tpu.memory_space<vmem>>, vector<1024x128xbf16>
    %cst = arith.constant dense<0.000000e+00> : vector<32x128xf32>
    %2 = tpu.matmul %0, %1, %cst {dimension_numbers = #tpu.dot_dimension_numbers<[1], [0], [0], [1], [0, 0, 1, 1], [], []>} : vector<32x1024xbf16>, vector<1024x128xbf16>, vector<32x128xf32> -> vector<32x128xf32>
    %cst_3 = arith.constant dense<0.000000e+00> : vector<32xf32>
    %3 = vector.multi_reduction <add>, %2, %cst_3 [1] : vector<32x128xf32> to vector<32xf32>
    %4 = vector.shape_cast %3 : vector<32xf32> to vector<32x1xf32>
    %cst_4 = arith.constant 1.280000e+02 : f32
    %5 = vector.broadcast %cst_4 : f32 to vector<32x1xf32>
    %6 = arith.divf %4, %5 : vector<32x1xf32>
    %7 = vector.broadcast %6 : vector<32x1xf32> to vector<32x128xf32>
    %8 = arith.subf %2, %7 : vector<32x128xf32>
    %9 = arith.mulf %8, %8 : vector<32x128xf32>
    %cst_5 = arith.constant dense<0.000000e+00> : vector<32xf32>
    %10 = vector.multi_reduction <add>, %9, %cst_5 [1] : vector<32x128xf32> to vector<32xf32>
    %11 = vector.shape_cast %10 : vector<32xf32> to vector<32x1xf32>
    %cst_6 = arith.constant 1.280000e+02 : f32
    %12 = vector.broadcast %cst_6 : f32 to vector<32x1xf32>
    %13 = arith.divf %11, %12 : vector<32x1xf32>
    %cst_7 = arith.constant 9.99999974E-6 : f32
    %14 = vector.broadcast %cst_7 : f32 to vector<32x1xf32>
    %15 = arith.addf %13, %14 : vector<32x1xf32>
    %16 = math.rsqrt %15 : vector<32x1xf32>
    %17 = vector.broadcast %16 : vector<32x1xf32> to vector<32x128xf32>
    %18 = arith.mulf %8, %17 : vector<32x128xf32>
    %cst_8 = arith.constant 0.000000e+00 : f32
    %19 = vector.broadcast %cst_8 : f32 to vector<32x128xf32>
    %20 = arith.cmpf oge, %18, %19 : vector<32x128xf32>
    %cst_9 = arith.constant 2.000000e-01 : f32
    %21 = vector.broadcast %cst_9 : f32 to vector<32x128xf32>
    %22 = arith.mulf %21, %18 : vector<32x128xf32>
    %23 = arith.select %20, %18, %22 : vector<32x128xi1>, vector<32x128xf32>
    %c0_10 = arith.constant 0 : index
    %c0_11 = arith.constant 0 : index
    %24 = vector.load %arg3[%c0_10, %c0_11] : memref<32x128xf32, #tpu.memory_space<vmem>>, vector<32x128xf32>
    tpu.vector_store %arg3[%c0_10, %c0_11], %23 {strides = array<i32>} : memref<32x128xf32, #tpu.memory_space<vmem>>, vector<32x128xf32>,
    return
  }
  func.func @transform_0(%arg0: i32) -> (i32, i32) {
    %c0_i32 = arith.constant 0 : i32
    %c0_i32_0 = arith.constant 0 : i32
    %c0_i32_1 = arith.constant 0 : i32
    return %c0_i32, %c0_i32_0 : i32, i32
  }
  func.func @transform_1(%arg0: i32) -> (i32, i32) {
    %c0_i32 = arith.constant 0 : i32
    %c0_i32_0 = arith.constant 0 : i32
    %c0_i32_1 = arith.constant 0 : i32
    return %c0_i32, %c0_i32_0 : i32, i32
  }
  func.func @transform_2(%arg0: i32) -> (i32, i32) {
    %c0_i32 = arith.constant 0 : i32
    %c0_i32_0 = arith.constant 0 : i32
    %c0_i32_1 = arith.constant 0 : i32
    return %c0_i32, %c0_i32_0 : i32, i32
  }
}

module attributes {stable_mosaic.version = 11 : i64} {
  func.func @_fused_layer_kernel(%arg0: i32, %arg1: memref<16x512xbf16, #tpu.memory_space<vmem>>, %arg2: memref<512x512xbf16, #tpu.memory_space<vmem>>, %arg3: memref<16x512xf32, #tpu.memory_space<vmem>>) attributes {dimension_semantics = [#tpu.dimension_semantics<arbitrary>], iteration_bounds = array<i64: 1>, scalar_prefetch = 0 : i64, scratch_operands = 0 : i64, tpu.core_type = #tpu.core_type<tc>, window_params = [{pipeline_mode = #tpu.pipeline_mode<synchronous>, transform_indices = @transform_0, window_bounds = array<i64: 16, 512>}, {pipeline_mode = #tpu.pipeline_mode<synchronous>, transform_indices = @transform_1, window_bounds = array<i64: 512, 512>}, {pipeline_mode = #tpu.pipeline_mode<synchronous>, transform_indices = @transform_2, window_bounds = array<i64: 16, 512>}]} {
    %c0 = arith.constant 0 : index
    %c0_0 = arith.constant 0 : index
    %0 = vector.load %arg1[%c0, %c0_0] : memref<16x512xbf16, #tpu.memory_space<vmem>>, vector<16x512xbf16>
    %c0_1 = arith.constant 0 : index
    %c0_2 = arith.constant 0 : index
    %1 = vector.load %arg2[%c0_1, %c0_2] : memref<512x512xbf16, #tpu.memory_space<vmem>>, vector<512x512xbf16>
    %cst = arith.constant dense<0.000000e+00> : vector<16x512xf32>
    %2 = tpu.matmul %0, %1, %cst {dimension_numbers = #tpu.dot_dimension_numbers<[1], [0], [0], [1], [0, 0, 1, 1], [], []>} : vector<16x512xbf16>, vector<512x512xbf16>, vector<16x512xf32> -> vector<16x512xf32>
    %cst_3 = arith.constant dense<0.000000e+00> : vector<16xf32>
    %3 = vector.multi_reduction <add>, %2, %cst_3 [1] : vector<16x512xf32> to vector<16xf32>
    %4 = vector.shape_cast %3 : vector<16xf32> to vector<16x1xf32>
    %cst_4 = arith.constant 5.120000e+02 : f32
    %5 = vector.broadcast %cst_4 : f32 to vector<16x1xf32>
    %6 = arith.divf %4, %5 : vector<16x1xf32>
    %7 = vector.broadcast %6 : vector<16x1xf32> to vector<16x512xf32>
    %8 = arith.subf %2, %7 : vector<16x512xf32>
    %9 = arith.mulf %8, %8 : vector<16x512xf32>
    %cst_5 = arith.constant dense<0.000000e+00> : vector<16xf32>
    %10 = vector.multi_reduction <add>, %9, %cst_5 [1] : vector<16x512xf32> to vector<16xf32>
    %11 = vector.shape_cast %10 : vector<16xf32> to vector<16x1xf32>
    %cst_6 = arith.constant 5.120000e+02 : f32
    %12 = vector.broadcast %cst_6 : f32 to vector<16x1xf32>
    %13 = arith.divf %11, %12 : vector<16x1xf32>
    %cst_7 = arith.constant 9.99999974E-6 : f32
    %14 = vector.broadcast %cst_7 : f32 to vector<16x1xf32>
    %15 = arith.addf %13, %14 : vector<16x1xf32>
    %16 = math.rsqrt %15 : vector<16x1xf32>
    %17 = vector.broadcast %16 : vector<16x1xf32> to vector<16x512xf32>
    %18 = arith.mulf %8, %17 : vector<16x512xf32>
    %cst_8 = arith.constant 0.000000e+00 : f32
    %19 = vector.broadcast %cst_8 : f32 to vector<16x512xf32>
    %20 = arith.cmpf oge, %18, %19 : vector<16x512xf32>
    %cst_9 = arith.constant 2.000000e-01 : f32
    %21 = vector.broadcast %cst_9 : f32 to vector<16x512xf32>
    %22 = arith.mulf %21, %18 : vector<16x512xf32>
    %23 = arith.select %20, %18, %22 : vector<16x512xi1>, vector<16x512xf32>
    %c0_10 = arith.constant 0 : index
    %c0_11 = arith.constant 0 : index
    %24 = vector.load %arg3[%c0_10, %c0_11] : memref<16x512xf32, #tpu.memory_space<vmem>>, vector<16x512xf32>
    tpu.vector_store %arg3[%c0_10, %c0_11], %23 {strides = array<i32>} : memref<16x512xf32, #tpu.memory_space<vmem>>, vector<16x512xf32>,
    return
  }
  func.func @transform_0(%arg0: i32) -> (i32, i32) {
    %c0_i32 = arith.constant 0 : i32
    %c0_i32_0 = arith.constant 0 : i32
    %c0_i32_1 = arith.constant 0 : i32
    return %c0_i32, %c0_i32_0 : i32, i32
  }
  func.func @transform_1(%arg0: i32) -> (i32, i32) {
    %c0_i32 = arith.constant 0 : i32
    %c0_i32_0 = arith.constant 0 : i32
    %c0_i32_1 = arith.constant 0 : i32
    return %c0_i32, %c0_i32_0 : i32, i32
  }
  func.func @transform_2(%arg0: i32) -> (i32, i32) {
    %c0_i32 = arith.constant 0 : i32
    %c0_i32_0 = arith.constant 0 : i32
    %c0_i32_1 = arith.constant 0 : i32
    return %c0_i32, %c0_i32_0 : i32, i32
  }
}

module attributes {stable_mosaic.version = 11 : i64} {
  func.func @_fused_layer_kernel(%arg0: i32, %arg1: memref<8x256xbf16, #tpu.memory_space<vmem>>, %arg2: memref<256x2048xbf16, #tpu.memory_space<vmem>>, %arg3: memref<8x2048xf32, #tpu.memory_space<vmem>>) attributes {dimension_semantics = [#tpu.dimension_semantics<arbitrary>], iteration_bounds = array<i64: 1>, scalar_prefetch = 0 : i64, scratch_operands = 0 : i64, tpu.core_type = #tpu.core_type<tc>, window_params = [{pipeline_mode = #tpu.pipeline_mode<synchronous>, transform_indices = @transform_0, window_bounds = array<i64: 8, 256>}, {pipeline_mode = #tpu.pipeline_mode<synchronous>, transform_indices = @transform_1, window_bounds = array<i64: 256, 2048>}, {pipeline_mode = #tpu.pipeline_mode<synchronous>, transform_indices = @transform_2, window_bounds = array<i64: 8, 2048>}]} {
    %c0 = arith.constant 0 : index
    %c0_0 = arith.constant 0 : index
    %0 = vector.load %arg1[%c0, %c0_0] : memref<8x256xbf16, #tpu.memory_space<vmem>>, vector<8x256xbf16>
    %c0_1 = arith.constant 0 : index
    %c0_2 = arith.constant 0 : index
    %1 = vector.load %arg2[%c0_1, %c0_2] : memref<256x2048xbf16, #tpu.memory_space<vmem>>, vector<256x2048xbf16>
    %cst = arith.constant dense<0.000000e+00> : vector<8x2048xf32>
    %2 = tpu.matmul %0, %1, %cst {dimension_numbers = #tpu.dot_dimension_numbers<[1], [0], [0], [1], [0, 0, 1, 1], [], []>} : vector<8x256xbf16>, vector<256x2048xbf16>, vector<8x2048xf32> -> vector<8x2048xf32>
    %cst_3 = arith.constant dense<0.000000e+00> : vector<8xf32>
    %3 = vector.multi_reduction <add>, %2, %cst_3 [1] : vector<8x2048xf32> to vector<8xf32>
    %4 = vector.shape_cast %3 : vector<8xf32> to vector<8x1xf32>
    %cst_4 = arith.constant 2.048000e+03 : f32
    %5 = vector.broadcast %cst_4 : f32 to vector<8x1xf32>
    %6 = arith.divf %4, %5 : vector<8x1xf32>
    %7 = vector.broadcast %6 : vector<8x1xf32> to vector<8x2048xf32>
    %8 = arith.subf %2, %7 : vector<8x2048xf32>
    %9 = arith.mulf %8, %8 : vector<8x2048xf32>
    %cst_5 = arith.constant dense<0.000000e+00> : vector<8xf32>
    %10 = vector.multi_reduction <add>, %9, %cst_5 [1] : vector<8x2048xf32> to vector<8xf32>
    %11 = vector.shape_cast %10 : vector<8xf32> to vector<8x1xf32>
    %cst_6 = arith.constant 2.048000e+03 : f32
    %12 = vector.broadcast %cst_6 : f32 to vector<8x1xf32>
    %13 = arith.divf %11, %12 : vector<8x1xf32>
    %cst_7 = arith.constant 9.99999974E-6 : f32
    %14 = vector.broadcast %cst_7 : f32 to vector<8x1xf32>
    %15 = arith.addf %13, %14 : vector<8x1xf32>
    %16 = math.rsqrt %15 : vector<8x1xf32>
    %17 = vector.broadcast %16 : vector<8x1xf32> to vector<8x2048xf32>
    %18 = arith.mulf %8, %17 : vector<8x2048xf32>
    %cst_8 = arith.constant 0.000000e+00 : f32
    %19 = vector.broadcast %cst_8 : f32 to vector<8x2048xf32>
    %20 = arith.cmpf oge, %18, %19 : vector<8x2048xf32>
    %cst_9 = arith.constant 2.000000e-01 : f32
    %21 = vector.broadcast %cst_9 : f32 to vector<8x2048xf32>
    %22 = arith.mulf %21, %18 : vector<8x2048xf32>
    %23 = arith.select %20, %18, %22 : vector<8x2048xi1>, vector<8x2048xf32>
    %c0_10 = arith.constant 0 : index
    %c0_11 = arith.constant 0 : index
    %24 = vector.load %arg3[%c0_10, %c0_11] : memref<8x2048xf32, #tpu.memory_space<vmem>>, vector<8x2048xf32>
    tpu.vector_store %arg3[%c0_10, %c0_11], %23 {strides = array<i32>} : memref<8x2048xf32, #tpu.memory_space<vmem>>, vector<8x2048xf32>,
    return
  }
  func.func @transform_0(%arg0: i32) -> (i32, i32) {
    %c0_i32 = arith.constant 0 : i32
    %c0_i32_0 = arith.constant 0 : i32
    %c0_i32_1 = arith.constant 0 : i32
    return %c0_i32, %c0_i32_0 : i32, i32
  }
  func.func @transform_1(%arg0: i32) -> (i32, i32) {
    %c0_i32 = arith.constant 0 : i32
    %c0_i32_0 = arith.constant 0 : i32
    %c0_i32_1 = arith.constant 0 : i32
    return %c0_i32, %c0_i32_0 : i32, i32
  }
  func.func @transform_2(%arg0: i32) -> (i32, i32) {
    %c0_i32 = arith.constant 0 : i32
    %c0_i32_0 = arith.constant 0 : i32
    %c0_i32_1 = arith.constant 0 : i32
    return %c0_i32, %c0_i32_0 : i32, i32
  }
}

</mosaic_0001>

<llo_original>
// kernel: generator_forward.4
$region0: #{generator_forward.4}
  #allocation0 [shape = 'u32[]', space=smem, size = 0x4, offset = 0x4, fixed_abs, tag = 'smem constant byte address 0x4 - core index']
  #allocation1 [shape = 'u32[144,128]{1,0:T(1,128)}', space=vmem, size = 0x12000, scoped, tag = 'internal scratch']
  %s0 = inlined_call_operand.vmem [shape: bf16[64,512], index: 0, kind: input, shape index: {}]
  %s1 = inlined_call_operand.vmem [shape: bf16[512,32], index: 1, kind: input, shape index: {}]
  %s2 = inlined_call_operand.vmem [shape: f32[64,32], index: 2, kind: output, shape index: {}]
  %s3 = sld [smem:[#allocation0]]
  $region18: #{generator_forward.4} parent=0
    _
  %s5 = ssub.s32 1, %s3
  %s6 = scalar_select 0, %s5, %s3
  // Predicated region
  $region2: #{generator_forward.4} parent=0 // pred_check
    _
  $region3: #{generator_forward.4} parent=0 // pred_check_branch
    %8 = sbr.rel (0) target = $region5
  $region4: #{generator_forward.4} parent=0 // pred_region
    _
  $region5: #{generator_forward.4} parent=0 // pred_fallthru
    _
  // Predicated region
  $region6: #{generator_forward.4} parent=0 // pred_check
    _
  $region7: #{generator_forward.4} parent=0 // pred_check_branch
    %10 = sbr.rel (0) target = $region9
  $region8: #{generator_forward.4} parent=0 // pred_region
    _
  $region9: #{generator_forward.4} parent=0 // pred_fallthru
    _
  %v12 = vld [vmem:[%s0] sm:$0xff]
  %v13 = vld [vmem:[%s0 + $0x8] sm:$0xff]
  %v14 = vld [vmem:[%s0 + $0x10] sm:$0xff]
  %v15 = vld [vmem:[%s0 + $0x18] sm:$0xff]
  %v16 = vld [vmem:[%s0 + $0x20] sm:$0xff]
  %v17 = vld [vmem:[%s0 + $0x28] sm:$0xff]
  %v18 = vld [vmem:[%s0 + $0x30] sm:$0xff]
  %v19 = vld [vmem:[%s0 + $0x38] sm:$0xff]
  %v20 = vld [vmem:[%s0 + $0x40] sm:$0xff]
  %v21 = vld [vmem:[%s0 + $0x48] sm:$0xff]
  %v22 = vld [vmem:[%s0 + $0x50] sm:$0xff]
  %v23 = vld [vmem:[%s0 + $0x58] sm:$0xff]
  %v24 = vld [vmem:[%s0 + $0x60] sm:$0xff]
  %v25 = vld [vmem:[%s0 + $0x68] sm:$0xff]
  %v26 = vld [vmem:[%s0 + $0x70] sm:$0xff]
  %v27 = vld [vmem:[%s0 + $0x78] sm:$0xff]
  %v28 = vld [vmem:[%s1] sm:$0xf]
  %v29 = vld [vmem:[%s1 + $0x4] sm:$0xf]
  %v30 = vld [vmem:[%s1 + $0x8] sm:$0xf]
  %v31 = vld [vmem:[%s1 + $0xc] sm:$0xf]
  %v32 = vld [vmem:[%s1 + $0x10] sm:$0xf]
  %v33 = vld [vmem:[%s1 + $0x14] sm:$0xf]
  %v34 = vld [vmem:[%s1 + $0x18] sm:$0xf]
  %v35 = vld [vmem:[%s1 + $0x1c] sm:$0xf]
  %v36 = vld [vmem:[%s1 + $0x20] sm:$0xf]
  %v37 = vld [vmem:[%s1 + $0x24] sm:$0xf]
  %v38 = vld [vmem:[%s1 + $0x28] sm:$0xf]
  %v39 = vld [vmem:[%s1 + $0x2c] sm:$0xf]
  %v40 = vld [vmem:[%s1 + $0x30] sm:$0xf]
  %v41 = vld [vmem:[%s1 + $0x34] sm:$0xf]
  %v42 = vld [vmem:[%s1 + $0x38] sm:$0xf]
  %v43 = vld [vmem:[%s1 + $0x3c] sm:$0xf]
  %v44 = vld [vmem:[%s1 + $0x40] sm:$0xf]
  %v45 = vld [vmem:[%s1 + $0x44] sm:$0xf]
  %v46 = vld [vmem:[%s1 + $0x48] sm:$0xf]
  %v47 = vld [vmem:[%s1 + $0x4c] sm:$0xf]
  %v48 = vld [vmem:[%s1 + $0x50] sm:$0xf]
  %v49 = vld [vmem:[%s1 + $0x54] sm:$0xf]
  %v50 = vld [vmem:[%s1 + $0x58] sm:$0xf]
  %v51 = vld [vmem:[%s1 + $0x5c] sm:$0xf]
  %v52 = vld [vmem:[%s1 + $0x60] sm:$0xf]
  %v53 = vld [vmem:[%s1 + $0x64] sm:$0xf]
  %v54 = vld [vmem:[%s1 + $0x68] sm:$0xf]
  %v55 = vld [vmem:[%s1 + $0x6c] sm:$0xf]
  %v56 = vld [vmem:[%s1 + $0x70] sm:$0xf]
  %v57 = vld [vmem:[%s1 + $0x74] sm:$0xf]
  %v58 = vld [vmem:[%s1 + $0x78] sm:$0xf]
  %v59 = vld [vmem:[%s1 + $0x7c] sm:$0xf]
  %v60 = vld [vmem:[%s1 + $0x80] sm:$0xf]
  %v61 = vld [vmem:[%s1 + $0x84] sm:$0xf]
  %v62 = vld [vmem:[%s1 + $0x88] sm:$0xf]
  %v63 = vld [vmem:[%s1 + $0x8c] sm:$0xf]
  %v64 = vld [vmem:[%s1 + $0x90] sm:$0xf]
  %v65 = vld [vmem:[%s1 + $0x94] sm:$0xf]
  %v66 = vld [vmem:[%s1 + $0x98] sm:$0xf]
  %v67 = vld [vmem:[%s1 + $0x9c] sm:$0xf]
  %v68 = vld [vmem:[%s1 + $0xa0] sm:$0xf]
  %v69 = vld [vmem:[%s1 + $0xa4] sm:$0xf]
  %v70 = vld [vmem:[%s1 + $0xa8] sm:$0xf]
  %v71 = vld [vmem:[%s1 + $0xac] sm:$0xf]
  %v72 = vld [vmem:[%s1 + $0xb0] sm:$0xf]
  %v73 = vld [vmem:[%s1 + $0xb4] sm:$0xf]
  %v74 = vld [vmem:[%s1 + $0xb8] sm:$0xf]
  %v75 = vld [vmem:[%s1 + $0xbc] sm:$0xf]
  %v76 = vld [vmem:[%s1 + $0xc0] sm:$0xf]
  %v77 = vld [vmem:[%s1 + $0xc4] sm:$0xf]
  %v78 = vld [vmem:[%s1 + $0xc8] sm:$0xf]
  %v79 = vld [vmem:[%s1 + $0xcc] sm:$0xf]
  %v80 = vld [vmem:[%s1 + $0xd0] sm:$0xf]
  %v81 = vld [vmem:[%s1 + $0xd4] sm:$0xf]
  %v82 = vld [vmem:[%s1 + $0xd8] sm:$0xf]
  %v83 = vld [vmem:[%s1 + $0xdc] sm:$0xf]
  %v84 = vld [vmem:[%s1 + $0xe0] sm:$0xf]
  %v85 = vld [vmem:[%s1 + $0xe4] sm:$0xf]
  %v86 = vld [vmem:[%s1 + $0xe8] sm:$0xf]
  %v87 = vld [vmem:[%s1 + $0xec] sm:$0xf]
  %v88 = vld [vmem:[%s1 + $0xf0] sm:$0xf]
  %v89 = vld [vmem:[%s1 + $0xf4] sm:$0xf]
  %v90 = vld [vmem:[%s1 + $0xf8] sm:$0xf]
  %v91 = vld [vmem:[%s1 + $0xfc] sm:$0xf]
  %v108 = vunpack.c.l.b16 %v12
  %v109 = vunpack.c.h.b16 %v12
  %v110 = vunpack.c.l.b16 %v13
  %v111 = vunpack.c.h.b16 %v13
  %v112 = vunpack.c.l.b16 %v14
  %v113 = vunpack.c.h.b16 %v14
  %v114 = vunpack.c.l.b16 %v15
  %v115 = vunpack.c.h.b16 %v15
  %v116 = vunpack.c.l.b16 %v16
  %v117 = vunpack.c.h.b16 %v16
  %v118 = vunpack.c.l.b16 %v17
  %v119 = vunpack.c.h.b16 %v17
  %v120 = vunpack.c.l.b16 %v18
  %v121 = vunpack.c.h.b16 %v18
  %v122 = vunpack.c.l.b16 %v19
  %v123 = vunpack.c.h.b16 %v19
  %v124 = vunpack.c.l.b16 %v20
  %v125 = vunpack.c.h.b16 %v20
  %v126 = vunpack.c.l.b16 %v21
  %v127 = vunpack.c.h.b16 %v21
  %v128 = vunpack.c.l.b16 %v22
  %v129 = vunpack.c.h.b16 %v22
  %v130 = vunpack.c.l.b16 %v23
  %v131 = vunpack.c.h.b16 %v23
  %v132 = vunpack.c.l.b16 %v24
  %v133 = vunpack.c.h.b16 %v24
  %v134 = vunpack.c.l.b16 %v25
  %v135 = vunpack.c.h.b16 %v25
  %v136 = vunpack.c.l.b16 %v26
  %v137 = vunpack.c.h.b16 %v26
  %v138 = vunpack.c.l.b16 %v27
  %v139 = vunpack.c.h.b16 %v27
  %v140 = vpack.c.b16 %v112, %v108
  %v141 = vpack.c.b16 %v113, %v109
  %v142 = vpack.c.b16 %v114, %v110
  %v143 = vpack.c.b16 %v115, %v111
  %v144 = vpack.c.b16 %v120, %v116
  %v145 = vpack.c.b16 %v121, %v117
  %v146 = vpack.c.b16 %v122, %v118
  %v147 = vpack.c.b16 %v123, %v119
  %v148 = vpack.c.b16 %v128, %v124
  %v149 = vpack.c.b16 %v129, %v125
  %v150 = vpack.c.b16 %v130, %v126
  %v151 = vpack.c.b16 %v131, %v127
  %v152 = vpack.c.b16 %v136, %v132
  %v153 = vpack.c.b16 %v137, %v133
  %v154 = vpack.c.b16 %v138, %v134
  %v155 = vpack.c.b16 %v139, %v135
  %v236 = vunpack.c.l.b16 %v28
  %v237 = vunpack.c.l.b16 %v29
  %v238 = vunpack.c.l.b16 %v30
  %v239 = vunpack.c.l.b16 %v31
  %v240 = vunpack.c.l.b16 %v32
  %v241 = vunpack.c.l.b16 %v33
  %v242 = vunpack.c.l.b16 %v34
  %v243 = vunpack.c.l.b16 %v35
  %v244 = vunpack.c.l.b16 %v36
  %v245 = vunpack.c.l.b16 %v37
  %v246 = vunpack.c.l.b16 %v38
  %v247 = vunpack.c.l.b16 %v39
  %v248 = vunpack.c.l.b16 %v40
  %v249 = vunpack.c.l.b16 %v41
  %v250 = vunpack.c.l.b16 %v42
  %v251 = vunpack.c.l.b16 %v43
  %v252 = vunpack.c.l.b16 %v44
  %v253 = vunpack.c.l.b16 %v45
  %v254 = vunpack.c.l.b16 %v46
  %v255 = vunpack.c.l.b16 %v47
  %v256 = vunpack.c.l.b16 %v48
  %v257 = vunpack.c.l.b16 %v49
  %v258 = vunpack.c.l.b16 %v50
  %v259 = vunpack.c.l.b16 %v51
  %v260 = vunpack.c.l.b16 %v52
  %v261 = vunpack.c.l.b16 %v53
  %v262 = vunpack.c.l.b16 %v54
  %v263 = vunpack.c.l.b16 %v55
  %v264 = vunpack.c.l.b16 %v56
  %v265 = vunpack.c.l.b16 %v57
  %v266 = vunpack.c.l.b16 %v58
  %v267 = vunpack.c.l.b16 %v59
  %v268 = vunpack.c.l.b16 %v60
  %v269 = vunpack.c.l.b16 %v61
  %v270 = vunpack.c.l.b16 %v62
  %v271 = vunpack.c.l.b16 %v63
  %v272 = vunpack.c.l.b16 %v64
  %v273 = vunpack.c.l.b16 %v65
  %v274 = vunpack.c.l.b16 %v66
  %v275 = vunpack.c.l.b16 %v67
  %v276 = vunpack.c.l.b16 %v68
  %v277 = vunpack.c.l.b16 %v69
  %v278 = vunpack.c.l.b16 %v70
  %v279 = vunpack.c.l.b16 %v71
  %v280 = vunpack.c.l.b16 %v72
  %v281 = vunpack.c.l.b16 %v73
  %v282 = vunpack.c.l.b16 %v74
  %v283 = vunpack.c.l.b16 %v75
  %v284 = vunpack.c.l.b16 %v76
  %v285 = vunpack.c.l.b16 %v77
  %v286 = vunpack.c.l.b16 %v78
  %v287 = vunpack.c.l.b16 %v79
  %v288 = vunpack.c.l.b16 %v80
  %v289 = vunpack.c.l.b16 %v81
  %v290 = vunpack.c.l.b16 %v82
  %v291 = vunpack.c.l.b16 %v83
  %v292 = vunpack.c.l.b16 %v84
  %v293 = vunpack.c.l.b16 %v85
  %v294 = vunpack.c.l.b16 %v86
  %v295 = vunpack.c.l.b16 %v87
  %v296 = vunpack.c.l.b16 %v88
  %v297 = vunpack.c.l.b16 %v89
  %v298 = vunpack.c.l.b16 %v90
  %v299 = vunpack.c.l.b16 %v91
  %v300 = vpack.c.b16 %v237, %v236
  %v301 = vpack.c.b16 %v239, %v238
  %v302 = vpack.c.b16 %v241, %v240
  %v303 = vpack.c.b16 %v243, %v242
  %v304 = vpack.c.b16 %v245, %v244
  %v305 = vpack.c.b16 %v247, %v246
  %v306 = vpack.c.b16 %v249, %v248
  %v307 = vpack.c.b16 %v251, %v250
  %v308 = vpack.c.b16 %v253, %v252
  %v309 = vpack.c.b16 %v255, %v254
  %v310 = vpack.c.b16 %v257, %v256
  %v311 = vpack.c.b16 %v259, %v258
  %v312 = vpack.c.b16 %v261, %v260
  %v313 = vpack.c.b16 %v263, %v262
  %v314 = vpack.c.b16 %v265, %v264
  %v315 = vpack.c.b16 %v267, %v266
  %v316 = vpack.c.b16 %v269, %v268
  %v317 = vpack.c.b16 %v271, %v270
  %v318 = vpack.c.b16 %v273, %v272
  %v319 = vpack.c.b16 %v275, %v274
  %v320 = vpack.c.b16 %v277, %v276
  %v321 = vpack.c.b16 %v279, %v278
  %v322 = vpack.c.b16 %v281, %v280
  %v323 = vpack.c.b16 %v283, %v282
  %v324 = vpack.c.b16 %v285, %v284
  %v325 = vpack.c.b16 %v287, %v286
  %v326 = vpack.c.b16 %v289, %v288
  %v327 = vpack.c.b16 %v291, %v290
  %v328 = vpack.c.b16 %v293, %v292
  %v329 = vpack.c.b16 %v295, %v294
  %v330 = vpack.c.b16 %v297, %v296
  %v331 = vpack.c.b16 %v299, %v298
  %364 = vmatprep.subr.bf16.mxu0 0
  %365 = vmatpush1.bf16.msra.mxu0 %v307
  %366 = vmatprep.subr.bf16.mxu0 0
  %367 = vmatpush1.bf16.msra.mxu0 %v306
  %368 = vmatprep.subr.bf16.mxu0 0
  %369 = vmatpush1.bf16.msra.mxu0 %v305
  %370 = vmatprep.subr.bf16.mxu0 0
  %371 = vmatpush1.bf16.msra.mxu0 %v304
  %372 = vmatprep.subr.bf16.mxu0 0
  %373 = vmatpush1.bf16.msra.mxu0 %v303
  %374 = vmatprep.subr.bf16.mxu0 0
  %375 = vmatpush1.bf16.msra.mxu0 %v302
  %376 = vmatprep.subr.bf16.mxu0 0
  %377 = vmatpush1.bf16.msra.mxu0 %v301
  %378 = vmatprep.subr.bf16.mxu0 0
  %379 = vmatpush1.bf16.msra.mxu0 %v300
  %380 = vmatprep.subr.bf16.mxu0 0
  %381 = vmatpush2.bf16.msra.mxu0 %v315
  %382 = vmatprep.subr.bf16.mxu0 0
  %383 = vmatpush2.bf16.msra.mxu0 %v314
  %384 = vmatprep.subr.bf16.mxu0 0
  %385 = vmatpush2.bf16.msra.mxu0 %v313
  %386 = vmatprep.subr.bf16.mxu0 0
  %387 = vmatpush2.bf16.msra.mxu0 %v312
  %388 = vmatprep.subr.bf16.mxu0 0
  %389 = vmatpush2.bf16.msra.mxu0 %v311
  %390 = vmatprep.subr.bf16.mxu0 0
  %391 = vmatpush2.bf16.msra.mxu0 %v310
  %392 = vmatprep.subr.bf16.mxu0 0
  %393 = vmatpush2.bf16.msra.mxu0 %v309
  %394 = vmatprep.subr.bf16.mxu0 0
  %395 = vmatpush2.bf16.msra.mxu0 %v308
  %396 = vmatprep.mubr.bf16.mxu0 %v141
  %397 = vmatmul.mubr.bf16.gmra.mxu0 %v140
  %v398 = vpop.f32.mrf.mxu0
  %v399 = vadd.f32 0.0, %v398
  %v400 = vpop.f32.mrf.mxu0
  %v401 = vpop.f32.mrf.mxu0
  %v402 = vadd.f32 0.0, %v401
  %v403 = vpop.f32.mrf.mxu0
  %404 = vmatprep.mubr.bf16.mxu0 %v145
  %405 = vmatmul.mubr.bf16.gmra.mxu0 %v144
  %v406 = vpop.f32.mrf.mxu0
  %v407 = vadd.f32 0.0, %v406
  %v408 = vpop.f32.mrf.mxu0
  %v409 = vpop.f32.mrf.mxu0
  %v410 = vadd.f32 0.0, %v409
  %v411 = vpop.f32.mrf.mxu0
  %412 = vmatprep.mubr.bf16.mxu0 %v149
  %413 = vmatmul.mubr.bf16.gmra.mxu0 %v148
  %v414 = vpop.f32.mrf.mxu0
  %v415 = vadd.f32 0.0, %v414
  %v416 = vpop.f32.mrf.mxu0
  %v417 = vpop.f32.mrf.mxu0
  %v418 = vadd.f32 0.0, %v417
  %v419 = vpop.f32.mrf.mxu0
  %420 = vmatprep.mubr.bf16.mxu0 %v153
  %421 = vmatmul.mubr.bf16.gmra.mxu0 %v152
  %v422 = vpop.f32.mrf.mxu0
  %v423 = vadd.f32 0.0, %v422
  %v424 = vpop.f32.mrf.mxu0
  %v425 = vpop.f32.mrf.mxu0
  %v426 = vadd.f32 0.0, %v425
  %v427 = vpop.f32.mrf.mxu0
  %428 = vdwg.mxu0
  %429 = vmatprep.subr.bf16.mxu0 0
  %430 = vmatpush1.bf16.msra.mxu0 %v323
  %431 = vmatprep.subr.bf16.mxu0 0
  %432 = vmatpush1.bf16.msra.mxu0 %v322
  %433 = vmatprep.subr.bf16.mxu0 0
  %434 = vmatpush1.bf16.msra.mxu0 %v321
  %435 = vmatprep.subr.bf16.mxu0 0
  %436 = vmatpush1.bf16.msra.mxu0 %v320
  %437 = vmatprep.subr.bf16.mxu0 0
  %438 = vmatpush1.bf16.msra.mxu0 %v319
  %439 = vmatprep.subr.bf16.mxu0 0
  %440 = vmatpush1.bf16.msra.mxu0 %v318
  %441 = vmatprep.subr.bf16.mxu0 0
  %442 = vmatpush1.bf16.msra.mxu0 %v317
  %443 = vmatprep.subr.bf16.mxu0 0
  %444 = vmatpush1.bf16.msra.mxu0 %v316
  %445 = vmatprep.subr.bf16.mxu0 0
  %446 = vmatpush2.bf16.msra.mxu0 %v331
  %447 = vmatprep.subr.bf16.mxu0 0
  %448 = vmatpush2.bf16.msra.mxu0 %v330
  %449 = vmatprep.subr.bf16.mxu0 0
  %450 = vmatpush2.bf16.msra.mxu0 %v329
  %451 = vmatprep.subr.bf16.mxu0 0
  %452 = vmatpush2.bf16.msra.mxu0 %v328
  %453 = vmatprep.subr.bf16.mxu0 0
  %454 = vmatpush2.bf16.msra.mxu0 %v327
  %455 = vmatprep.subr.bf16.mxu0 0
  %456 = vmatpush2.bf16.msra.mxu0 %v326
  %457 = vmatprep.subr.bf16.mxu0 0
  %458 = vmatpush2.bf16.msra.mxu0 %v325
  %459 = vmatprep.subr.bf16.mxu0 0
  %460 = vmatpush2.bf16.msra.mxu0 %v324
  %461 = vmatprep.mubr.bf16.mxu0 %v143
  %462 = vmatmul.mubr.bf16.gmra.mxu0 %v142
  %v463 = vpop.f32.mrf.mxu0
  %v464 = vadd.f32 %v399, %v463
  %v465 = vpop.f32.mrf.mxu0
  %v466 = vpop.f32.mrf.mxu0
  %v467 = vadd.f32 %v402, %v466
  %v468 = vpop.f32.mrf.mxu0
  %469 = vmatprep.mubr.bf16.mxu0 %v147
  %470 = vmatmul.mubr.bf16.gmra.mxu0 %v146
  %v471 = vpop.f32.mrf.mxu0
  %v472 = vadd.f32 %v407, %v471
  %v473 = vpop.f32.mrf.mxu0
  %v474 = vpop.f32.mrf.mxu0
  %v475 = vadd.f32 %v410, %v474
  %v476 = vpop.f32.mrf.mxu0
  %477 = vmatprep.mubr.bf16.mxu0 %v151
  %478 = vmatmul.mubr.bf16.gmra.mxu0 %v150
  %v479 = vpop.f32.mrf.mxu0
  %v480 = vadd.f32 %v415, %v479
  %v481 = vpop.f32.mrf.mxu0
  %v482 = vpop.f32.mrf.mxu0
  %v483 = vadd.f32 %v418, %v482
  %v484 = vpop.f32.mrf.mxu0
  %485 = vmatprep.mubr.bf16.mxu0 %v155
  %486 = vmatmul.mubr.bf16.gmra.mxu0 %v154
  %v487 = vpop.f32.mrf.mxu0
  %v488 = vadd.f32 %v423, %v487
  %v489 = vpop.f32.mrf.mxu0
  %v490 = vpop.f32.mrf.mxu0
  %v491 = vadd.f32 %v426, %v490
  %v492 = vpop.f32.mrf.mxu0
  %493 = vdwg.mxu0
  %vm494 = vcmask 261120
  %v495 = vsel %vm494, %v464, 0.0
  %496 = vadd.xlane.f32.xlu0 %v495
  %v497 = vpop.xlane.xlu0 %496
  %v498 = vsel %vm494, %v467, 0.0
  %499 = vadd.xlane.f32.xlu0 %v498
  %v500 = vpop.xlane.xlu0 %499
  %v501 = vsel %vm494, %v472, 0.0
  %502 = vadd.xlane.f32.xlu0 %v501
  %v503 = vpop.xlane.xlu0 %502
  %v504 = vsel %vm494, %v475, 0.0
  %505 = vadd.xlane.f32.xlu0 %v504
  %v506 = vpop.xlane.xlu0 %505
  %v507 = vsel %vm494, %v480, 0.0
  %508 = vadd.xlane.f32.xlu0 %v507
  %v509 = vpop.xlane.xlu0 %508
  %v510 = vsel %vm494, %v483, 0.0
  %511 = vadd.xlane.f32.xlu0 %v510
  %v512 = vpop.xlane.xlu0 %511
  %v513 = vsel %vm494, %v488, 0.0
  %514 = vadd.xlane.f32.xlu0 %v513
  %v515 = vpop.xlane.xlu0 %514
  %v516 = vsel %vm494, %v491, 0.0
  %517 = vadd.xlane.f32.xlu0 %v516
  %v518 = vpop.xlane.xlu0 %517
  %v519 = vrcp.pop 32.0
  %v520 = vmul.f32 %v497, %v519
  %v521 = vmul.f32 %v500, %v519
  %v522 = vmul.f32 %v503, %v519
  %v523 = vmul.f32 %v506, %v519
  %v524 = vmul.f32 %v509, %v519
  %v525 = vmul.f32 %v512, %v519
  %v526 = vmul.f32 %v515, %v519
  %v527 = vmul.f32 %v518, %v519
  %v528 = vsub.f32 %v464, %v520
  %v529 = vsub.f32 %v467, %v521
  %v530 = vsub.f32 %v472, %v522
  %v531 = vsub.f32 %v475, %v523
  %v532 = vsub.f32 %v480, %v524
  %v533 = vsub.f32 %v483, %v525
  %v534 = vsub.f32 %v488, %v526
  %v535 = vsub.f32 %v491, %v527
  %v536 = vmul.f32 %v528, %v528
  %v537 = vmul.f32 %v529, %v529
  %v538 = vmul.f32 %v530, %v530
  %v539 = vmul.f32 %v531, %v531
  %v540 = vmul.f32 %v532, %v532
  %v541 = vmul.f32 %v533, %v533
  %v542 = vmul.f32 %v534, %v534
  %v543 = vmul.f32 %v535, %v535
  %v544 = vsel %vm494, %v536, 0.0
  %545 = vadd.xlane.f32.xlu0 %v544
  %v546 = vpop.xlane.xlu0 %545
  %v547 = vsel %vm494, %v537, 0.0
  %548 = vadd.xlane.f32.xlu0 %v547
  %v549 = vpop.xlane.xlu0 %548
  %v550 = vsel %vm494, %v538, 0.0
  %551 = vadd.xlane.f32.xlu0 %v550
  %v552 = vpop.xlane.xlu0 %551
  %v553 = vsel %vm494, %v539, 0.0
  %554 = vadd.xlane.f32.xlu0 %v553
  %v555 = vpop.xlane.xlu0 %554
  %v556 = vsel %vm494, %v540, 0.0
  %557 = vadd.xlane.f32.xlu0 %v556
  %v558 = vpop.xlane.xlu0 %557
  %v559 = vsel %vm494, %v541, 0.0
  %560 = vadd.xlane.f32.xlu0 %v559
  %v561 = vpop.xlane.xlu0 %560
  %v562 = vsel %vm494, %v542, 0.0
  %563 = vadd.xlane.f32.xlu0 %v562
  %v564 = vpop.xlane.xlu0 %563
  %v565 = vsel %vm494, %v543, 0.0
  %566 = vadd.xlane.f32.xlu0 %v565
  %v567 = vpop.xlane.xlu0 %566
  %v568 = vmul.f32 %v546, %v519
  %v569 = vmul.f32 %v549, %v519
  %v570 = vmul.f32 %v552, %v519
  %v571 = vmul.f32 %v555, %v519
  %v572 = vmul.f32 %v558, %v519
  %v573 = vmul.f32 %v561, %v519
  %v574 = vmul.f32 %v564, %v519
  %v575 = vmul.f32 %v567, %v519
  %v576 = vadd.f32 %v568, 1e-05
  %v577 = vadd.f32 %v569, 1e-05
  %v578 = vadd.f32 %v570, 1e-05
  %v579 = vadd.f32 %v571, 1e-05
  %v580 = vadd.f32 %v572, 1e-05
  %v581 = vadd.f32 %v573, 1e-05
  %v582 = vadd.f32 %v574, 1e-05
  %v583 = vadd.f32 %v575, 1e-05
  %v584 = vrsqrt.pop %v576
  %v585 = vrsqrt.pop %v577
  %v586 = vrsqrt.pop %v578
  %v587 = vrsqrt.pop %v579
  %v588 = vrsqrt.pop %v580
  %v589 = vrsqrt.pop %v581
  %v590 = vrsqrt.pop %v582
  %v591 = vrsqrt.pop %v583
  %v592 = vmul.f32 %v528, %v584
  %v593 = vmul.f32 %v529, %v585
  %v594 = vmul.f32 %v530, %v586
  %v595 = vmul.f32 %v531, %v587
  %v596 = vmul.f32 %v532, %v588
  %v597 = vmul.f32 %v533, %v589
  %v598 = vmul.f32 %v534, %v590
  %v599 = vmul.f32 %v535, %v591
  %vm600 = vcmp.ge.f32.partialorder %v592, 0.0
  %vm601 = vcmp.ge.f32.partialorder %v593, 0.0
  %vm602 = vcmp.ge.f32.partialorder %v594, 0.0
  %vm603 = vcmp.ge.f32.partialorder %v595, 0.0
  %vm604 = vcmp.ge.f32.partialorder %v596, 0.0
  %vm605 = vcmp.ge.f32.partialorder %v597, 0.0
  %vm606 = vcmp.ge.f32.partialorder %v598, 0.0
  %vm607 = vcmp.ge.f32.partialorder %v599, 0.0
  %v608 = vmul.f32 %v592, 0.2
  %v609 = vmul.f32 %v593, 0.2
  %v610 = vmul.f32 %v594, 0.2
  %v611 = vmul.f32 %v595, 0.2
  %v612 = vmul.f32 %v596, 0.2
  %v613 = vmul.f32 %v597, 0.2
  %v614 = vmul.f32 %v598, 0.2
  %v615 = vmul.f32 %v599, 0.2
  %v616 = vsel %vm600, %v592, %v608
  %v617 = vsel %vm601, %v593, %v609
  %v618 = vsel %vm602, %v594, %v610
  %v619 = vsel %vm603, %v595, %v611
  %v620 = vsel %vm604, %v596, %v612
  %v621 = vsel %vm605, %v597, %v613
  %v622 = vsel %vm606, %v598, %v614
  %v623 = vsel %vm607, %v599, %v615
  %624 = vst.msk [vmem:[%s2] sm:$0xff] %vm494, %v616
  %625 = vst.msk [vmem:[%s2 + $0x8] sm:$0xff] %vm494, %v617
  %626 = vst.msk [vmem:[%s2 + $0x10] sm:$0xff] %vm494, %v618
  %627 = vst.msk [vmem:[%s2 + $0x18] sm:$0xff] %vm494, %v619
  %628 = vst.msk [vmem:[%s2 + $0x20] sm:$0xff] %vm494, %v620
  %629 = vst.msk [vmem:[%s2 + $0x28] sm:$0xff] %vm494, %v621
  %630 = vst.msk [vmem:[%s2 + $0x30] sm:$0xff] %vm494, %v622
  %631 = vst.msk [vmem:[%s2 + $0x38] sm:$0xff] %vm494, %v623
  // Predicated region
  $region10: #{generator_forward.4} parent=0 // pred_check
    _
  $region11: #{generator_forward.4} parent=0 // pred_check_branch
    %633 = sbr.rel (0) target = $region13
  $region12: #{generator_forward.4} parent=0 // pred_region
    _
  $region13: #{generator_forward.4} parent=0 // pred_fallthru
    _
  // Predicated region
  $region14: #{generator_forward.4} parent=0 // pred_check
    _
  $region15: #{generator_forward.4} parent=0 // pred_check_branch
    %635 = sbr.rel (0) target = $region17
  $region16: #{generator_forward.4} parent=0 // pred_region
    _
  $region17: #{generator_forward.4} parent=0 // pred_fallthru
    _

// kernel: generator_forward.5
$region0: #{generator_forward.5}
  #allocation0 [shape = 'u32[]', space=smem, size = 0x4, offset = 0x4, fixed_abs, tag = 'smem constant byte address 0x4 - core index']
  #allocation1 [shape = 'u32[144,128]{1,0:T(1,128)}', space=vmem, size = 0x12000, scoped, tag = 'internal scratch']
  %s0 = inlined_call_operand.vmem [shape: bf16[32,1024], index: 0, kind: input, shape index: {}]
  %s1 = inlined_call_operand.vmem [shape: bf16[1024,128], index: 1, kind: input, shape index: {}]
  %s2 = inlined_call_operand.vmem [shape: f32[32,128], index: 2, kind: output, shape index: {}]
  %s3 = sld [smem:[#allocation0]]
  $region18: #{generator_forward.5} parent=0
    _
  %s5 = ssub.s32 1, %s3
  %s6 = scalar_select 0, %s5, %s3
  // Predicated region
  $region2: #{generator_forward.5} parent=0 // pred_check
    _
  $region3: #{generator_forward.5} parent=0 // pred_check_branch
    %8 = sbr.rel (0) target = $region5
  $region4: #{generator_forward.5} parent=0 // pred_region
    _
  $region5: #{generator_forward.5} parent=0 // pred_fallthru
    _
  // Predicated region
  $region6: #{generator_forward.5} parent=0 // pred_check
    _
  $region7: #{generator_forward.5} parent=0 // pred_check_branch
    %10 = sbr.rel (0) target = $region9
  $region8: #{generator_forward.5} parent=0 // pred_region
    _
  $region9: #{generator_forward.5} parent=0 // pred_fallthru
    _
  %v12 = vld [vmem:[%s0] sm:$0xff]
  %v13 = vld [vmem:[%s0 + $0x8] sm:$0xff]
  %v14 = vld [vmem:[%s0 + $0x10] sm:$0xff]
  %v15 = vld [vmem:[%s0 + $0x18] sm:$0xff]
  %v16 = vld [vmem:[%s0 + $0x20] sm:$0xff]
  %v17 = vld [vmem:[%s0 + $0x28] sm:$0xff]
  %v18 = vld [vmem:[%s0 + $0x30] sm:$0xff]
  %v19 = vld [vmem:[%s0 + $0x38] sm:$0xff]
  %v20 = vld [vmem:[%s0 + $0x40] sm:$0xff]
  %v21 = vld [vmem:[%s0 + $0x48] sm:$0xff]
  %v22 = vld [vmem:[%s0 + $0x50] sm:$0xff]
  %v23 = vld [vmem:[%s0 + $0x58] sm:$0xff]
  %v24 = vld [vmem:[%s0 + $0x60] sm:$0xff]
  %v25 = vld [vmem:[%s0 + $0x68] sm:$0xff]
  %v26 = vld [vmem:[%s0 + $0x70] sm:$0xff]
  %v27 = vld [vmem:[%s0 + $0x78] sm:$0xff]
  %v28 = vld [vmem:[%s1] sm:$0xf]
  %v29 = vld [vmem:[%s1 + $0x4] sm:$0xf]
  %v30 = vld [vmem:[%s1 + $0x8] sm:$0xf]
  %v31 = vld [vmem:[%s1 + $0xc] sm:$0xf]
  %v32 = vld [vmem:[%s1 + $0x10] sm:$0xf]
  %v33 = vld [vmem:[%s1 + $0x14] sm:$0xf]
  %v34 = vld [vmem:[%s1 + $0x18] sm:$0xf]
  %v35 = vld [vmem:[%s1 + $0x1c] sm:$0xf]
  %v36 = vld [vmem:[%s1 + $0x20] sm:$0xf]
  %v37 = vld [vmem:[%s1 + $0x24] sm:$0xf]
  %v38 = vld [vmem:[%s1 + $0x28] sm:$0xf]
  %v39 = vld [vmem:[%s1 + $0x2c] sm:$0xf]
  %v40 = vld [vmem:[%s1 + $0x30] sm:$0xf]
  %v41 = vld [vmem:[%s1 + $0x34] sm:$0xf]
  %v42 = vld [vmem:[%s1 + $0x38] sm:$0xf]
  %v43 = vld [vmem:[%s1 + $0x3c] sm:$0xf]
  %v44 = vld [vmem:[%s1 + $0x40] sm:$0xf]
  %v45 = vld [vmem:[%s1 + $0x44] sm:$0xf]
  %v46 = vld [vmem:[%s1 + $0x48] sm:$0xf]
  %v47 = vld [vmem:[%s1 + $0x4c] sm:$0xf]
  %v48 = vld [vmem:[%s1 + $0x50] sm:$0xf]
  %v49 = vld [vmem:[%s1 + $0x54] sm:$0xf]
  %v50 = vld [vmem:[%s1 + $0x58] sm:$0xf]
  %v51 = vld [vmem:[%s1 + $0x5c] sm:$0xf]
  %v52 = vld [vmem:[%s1 + $0x60] sm:$0xf]
  %v53 = vld [vmem:[%s1 + $0x64] sm:$0xf]
  %v54 = vld [vmem:[%s1 + $0x68] sm:$0xf]
  %v55 = vld [vmem:[%s1 + $0x6c] sm:$0xf]
  %v56 = vld [vmem:[%s1 + $0x70] sm:$0xf]
  %v57 = vld [vmem:[%s1 + $0x74] sm:$0xf]
  %v58 = vld [vmem:[%s1 + $0x78] sm:$0xf]
  %v59 = vld [vmem:[%s1 + $0x7c] sm:$0xf]
  %v60 = vld [vmem:[%s1 + $0x80] sm:$0xf]
  %v61 = vld [vmem:[%s1 + $0x84] sm:$0xf]
  %v62 = vld [vmem:[%s1 + $0x88] sm:$0xf]
  %v63 = vld [vmem:[%s1 + $0x8c] sm:$0xf]
  %v64 = vld [vmem:[%s1 + $0x90] sm:$0xf]
  %v65 = vld [vmem:[%s1 + $0x94] sm:$0xf]
  %v66 = vld [vmem:[%s1 + $0x98] sm:$0xf]
  %v67 = vld [vmem:[%s1 + $0x9c] sm:$0xf]
  %v68 = vld [vmem:[%s1 + $0xa0] sm:$0xf]
  %v69 = vld [vmem:[%s1 + $0xa4] sm:$0xf]
  %v70 = vld [vmem:[%s1 + $0xa8] sm:$0xf]
  %v71 = vld [vmem:[%s1 + $0xac] sm:$0xf]
  %v72 = vld [vmem:[%s1 + $0xb0] sm:$0xf]
  %v73 = vld [vmem:[%s1 + $0xb4] sm:$0xf]
  %v74 = vld [vmem:[%s1 + $0xb8] sm:$0xf]
  %v75 = vld [vmem:[%s1 + $0xbc] sm:$0xf]
  %v76 = vld [vmem:[%s1 + $0xc0] sm:$0xf]
  %v77 = vld [vmem:[%s1 + $0xc4] sm:$0xf]
  %v78 = vld [vmem:[%s1 + $0xc8] sm:$0xf]
  %v79 = vld [vmem:[%s1 + $0xcc] sm:$0xf]
  %v80 = vld [vmem:[%s1 + $0xd0] sm:$0xf]
  %v81 = vld [vmem:[%s1 + $0xd4] sm:$0xf]
  %v82 = vld [vmem:[%s1 + $0xd8] sm:$0xf]
  %v83 = vld [vmem:[%s1 + $0xdc] sm:$0xf]
  %v84 = vld [vmem:[%s1 + $0xe0] sm:$0xf]
  %v85 = vld [vmem:[%s1 + $0xe4] sm:$0xf]
  %v86 = vld [vmem:[%s1 + $0xe8] sm:$0xf]
  %v87 = vld [vmem:[%s1 + $0xec] sm:$0xf]
  %v88 = vld [vmem:[%s1 + $0xf0] sm:$0xf]
  %v89 = vld [vmem:[%s1 + $0xf4] sm:$0xf]
  %v90 = vld [vmem:[%s1 + $0xf8] sm:$0xf]
  %v91 = vld [vmem:[%s1 + $0xfc] sm:$0xf]
  %v92 = vld [vmem:[%s1 + $0x100] sm:$0xf]
  %v93 = vld [vmem:[%s1 + $0x104] sm:$0xf]
  %v94 = vld [vmem:[%s1 + $0x108] sm:$0xf]
  %v95 = vld [vmem:[%s1 + $0x10c] sm:$0xf]
  %v96 = vld [vmem:[%s1 + $0x110] sm:$0xf]
  %v97 = vld [vmem:[%s1 + $0x114] sm:$0xf]
  %v98 = vld [vmem:[%s1 + $0x118] sm:$0xf]
  %v99 = vld [vmem:[%s1 + $0x11c] sm:$0xf]
  %v100 = vld [vmem:[%s1 + $0x120] sm:$0xf]
  %v101 = vld [vmem:[%s1 + $0x124] sm:$0xf]
  %v102 = vld [vmem:[%s1 + $0x128] sm:$0xf]
  %v103 = vld [vmem:[%s1 + $0x12c] sm:$0xf]
  %v104 = vld [vmem:[%s1 + $0x130] sm:$0xf]
  %v105 = vld [vmem:[%s1 + $0x134] sm:$0xf]
  %v106 = vld [vmem:[%s1 + $0x138] sm:$0xf]
  %v107 = vld [vmem:[%s1 + $0x13c] sm:$0xf]
  %v108 = vld [vmem:[%s1 + $0x140] sm:$0xf]
  %v109 = vld [vmem:[%s1 + $0x144] sm:$0xf]
  %v110 = vld [vmem:[%s1 + $0x148] sm:$0xf]
  %v111 = vld [vmem:[%s1 + $0x14c] sm:$0xf]
  %v112 = vld [vmem:[%s1 + $0x150] sm:$0xf]
  %v113 = vld [vmem:[%s1 + $0x154] sm:$0xf]
  %v114 = vld [vmem:[%s1 + $0x158] sm:$0xf]
  %v115 = vld [vmem:[%s1 + $0x15c] sm:$0xf]
  %v116 = vld [vmem:[%s1 + $0x160] sm:$0xf]
  %v117 = vld [vmem:[%s1 + $0x164] sm:$0xf]
  %v118 = vld [vmem:[%s1 + $0x168] sm:$0xf]
  %v119 = vld [vmem:[%s1 + $0x16c] sm:$0xf]
  %v120 = vld [vmem:[%s1 + $0x170] sm:$0xf]
  %v121 = vld [vmem:[%s1 + $0x174] sm:$0xf]
  %v122 = vld [vmem:[%s1 + $0x178] sm:$0xf]
  %v123 = vld [vmem:[%s1 + $0x17c] sm:$0xf]
  %v124 = vld [vmem:[%s1 + $0x180] sm:$0xf]
  %v125 = vld [vmem:[%s1 + $0x184] sm:$0xf]
  %v126 = vld [vmem:[%s1 + $0x188] sm:$0xf]
  %v127 = vld [vmem:[%s1 + $0x18c] sm:$0xf]
  %v128 = vld [vmem:[%s1 + $0x190] sm:$0xf]
  %v129 = vld [vmem:[%s1 + $0x194] sm:$0xf]
  %v130 = vld [vmem:[%s1 + $0x198] sm:$0xf]
  %v131 = vld [vmem:[%s1 + $0x19c] sm:$0xf]
  %v132 = vld [vmem:[%s1 + $0x1a0] sm:$0xf]
  %v133 = vld [vmem:[%s1 + $0x1a4] sm:$0xf]
  %v134 = vld [vmem:[%s1 + $0x1a8] sm:$0xf]
  %v135 = vld [vmem:[%s1 + $0x1ac] sm:$0xf]
  %v136 = vld [vmem:[%s1 + $0x1b0] sm:$0xf]
  %v137 = vld [vmem:[%s1 + $0x1b4] sm:$0xf]
  %v138 = vld [vmem:[%s1 + $0x1b8] sm:$0xf]
  %v139 = vld [vmem:[%s1 + $0x1bc] sm:$0xf]
  %v140 = vld [vmem:[%s1 + $0x1c0] sm:$0xf]
  %v141 = vld [vmem:[%s1 + $0x1c4] sm:$0xf]
  %v142 = vld [vmem:[%s1 + $0x1c8] sm:$0xf]
  %v143 = vld [vmem:[%s1 + $0x1cc] sm:$0xf]
  %v144 = vld [vmem:[%s1 + $0x1d0] sm:$0xf]
  %v145 = vld [vmem:[%s1 + $0x1d4] sm:$0xf]
  %v146 = vld [vmem:[%s1 + $0x1d8] sm:$0xf]
  %v147 = vld [vmem:[%s1 + $0x1dc] sm:$0xf]
  %v148 = vld [vmem:[%s1 + $0x1e0] sm:$0xf]
  %v149 = vld [vmem:[%s1 + $0x1e4] sm:$0xf]
  %v150 = vld [vmem:[%s1 + $0x1e8] sm:$0xf]
  %v151 = vld [vmem:[%s1 + $0x1ec] sm:$0xf]
  %v152 = vld [vmem:[%s1 + $0x1f0] sm:$0xf]
  %v153 = vld [vmem:[%s1 + $0x1f4] sm:$0xf]
  %v154 = vld [vmem:[%s1 + $0x1f8] sm:$0xf]
  %v155 = vld [vmem:[%s1 + $0x1fc] sm:$0xf]
  %v172 = vunpack.c.l.b16 %v12
  %v173 = vunpack.c.h.b16 %v12
  %v174 = vunpack.c.l.b16 %v13
  %v175 = vunpack.c.h.b16 %v13
  %v176 = vunpack.c.l.b16 %v14
  %v177 = vunpack.c.h.b16 %v14
  %v178 = vunpack.c.l.b16 %v15
  %v179 = vunpack.c.h.b16 %v15
  %v180 = vunpack.c.l.b16 %v16
  %v181 = vunpack.c.h.b16 %v16
  %v182 = vunpack.c.l.b16 %v17
  %v183 = vunpack.c.h.b16 %v17
  %v184 = vunpack.c.l.b16 %v18
  %v185 = vunpack.c.h.b16 %v18
  %v186 = vunpack.c.l.b16 %v19
  %v187 = vunpack.c.h.b16 %v19
  %v188 = vunpack.c.l.b16 %v20
  %v189 = vunpack.c.h.b16 %v20
  %v190 = vunpack.c.l.b16 %v21
  %v191 = vunpack.c.h.b16 %v21
  %v192 = vunpack.c.l.b16 %v22
  %v193 = vunpack.c.h.b16 %v22
  %v194 = vunpack.c.l.b16 %v23
  %v195 = vunpack.c.h.b16 %v23
  %v196 = vunpack.c.l.b16 %v24
  %v197 = vunpack.c.h.b16 %v24
  %v198 = vunpack.c.l.b16 %v25
  %v199 = vunpack.c.h.b16 %v25
  %v200 = vunpack.c.l.b16 %v26
  %v201 = vunpack.c.h.b16 %v26
  %v202 = vunpack.c.l.b16 %v27
  %v203 = vunpack.c.h.b16 %v27
  %v204 = vpack.c.b16 %v180, %v172
  %v205 = vpack.c.b16 %v181, %v173
  %v206 = vpack.c.b16 %v182, %v174
  %v207 = vpack.c.b16 %v183, %v175
  %v208 = vpack.c.b16 %v184, %v176
  %v209 = vpack.c.b16 %v185, %v177
  %v210 = vpack.c.b16 %v186, %v178
  %v211 = vpack.c.b16 %v187, %v179
  %v212 = vpack.c.b16 %v196, %v188
  %v213 = vpack.c.b16 %v197, %v189
  %v214 = vpack.c.b16 %v198, %v190
  %v215 = vpack.c.b16 %v199, %v191
  %v216 = vpack.c.b16 %v200, %v192
  %v217 = vpack.c.b16 %v201, %v193
  %v218 = vpack.c.b16 %v202, %v194
  %v219 = vpack.c.b16 %v203, %v195
  %v364 = vunpack.c.l.b16 %v28
  %v365 = vunpack.c.l.b16 %v29
  %v366 = vunpack.c.l.b16 %v30
  %v367 = vunpack.c.l.b16 %v31
  %v368 = vunpack.c.l.b16 %v32
  %v369 = vunpack.c.l.b16 %v33
  %v370 = vunpack.c.l.b16 %v34
  %v371 = vunpack.c.l.b16 %v35
  %v372 = vunpack.c.l.b16 %v36
  %v373 = vunpack.c.l.b16 %v37
  %v374 = vunpack.c.l.b16 %v38
  %v375 = vunpack.c.l.b16 %v39
  %v376 = vunpack.c.l.b16 %v40
  %v377 = vunpack.c.l.b16 %v41
  %v378 = vunpack.c.l.b16 %v42
  %v379 = vunpack.c.l.b16 %v43
  %v380 = vunpack.c.l.b16 %v44
  %v381 = vunpack.c.l.b16 %v45
  %v382 = vunpack.c.l.b16 %v46
  %v383 = vunpack.c.l.b16 %v47
  %v384 = vunpack.c.l.b16 %v48
  %v385 = vunpack.c.l.b16 %v49
  %v386 = vunpack.c.l.b16 %v50
  %v387 = vunpack.c.l.b16 %v51
  %v388 = vunpack.c.l.b16 %v52
  %v389 = vunpack.c.l.b16 %v53
  %v390 = vunpack.c.l.b16 %v54
  %v391 = vunpack.c.l.b16 %v55
  %v392 = vunpack.c.l.b16 %v56
  %v393 = vunpack.c.l.b16 %v57
  %v394 = vunpack.c.l.b16 %v58
  %v395 = vunpack.c.l.b16 %v59
  %v396 = vunpack.c.l.b16 %v60
  %v397 = vunpack.c.l.b16 %v61
  %v398 = vunpack.c.l.b16 %v62
  %v399 = vunpack.c.l.b16 %v63
  %v400 = vunpack.c.l.b16 %v64
  %v401 = vunpack.c.l.b16 %v65
  %v402 = vunpack.c.l.b16 %v66
  %v403 = vunpack.c.l.b16 %v67
  %v404 = vunpack.c.l.b16 %v68
  %v405 = vunpack.c.l.b16 %v69
  %v406 = vunpack.c.l.b16 %v70
  %v407 = vunpack.c.l.b16 %v71
  %v408 = vunpack.c.l.b16 %v72
  %v409 = vunpack.c.l.b16 %v73
  %v410 = vunpack.c.l.b16 %v74
  %v411 = vunpack.c.l.b16 %v75
  %v412 = vunpack.c.l.b16 %v76
  %v413 = vunpack.c.l.b16 %v77
  %v414 = vunpack.c.l.b16 %v78
  %v415 = vunpack.c.l.b16 %v79
  %v416 = vunpack.c.l.b16 %v80
  %v417 = vunpack.c.l.b16 %v81
  %v418 = vunpack.c.l.b16 %v82
  %v419 = vunpack.c.l.b16 %v83
  %v420 = vunpack.c.l.b16 %v84
  %v421 = vunpack.c.l.b16 %v85
  %v422 = vunpack.c.l.b16 %v86
  %v423 = vunpack.c.l.b16 %v87
  %v424 = vunpack.c.l.b16 %v88
  %v425 = vunpack.c.l.b16 %v89
  %v426 = vunpack.c.l.b16 %v90
  %v427 = vunpack.c.l.b16 %v91
  %v428 = vunpack.c.l.b16 %v92
  %v429 = vunpack.c.l.b16 %v93
  %v430 = vunpack.c.l.b16 %v94
  %v431 = vunpack.c.l.b16 %v95
  %v432 = vunpack.c.l.b16 %v96
  %v433 = vunpack.c.l.b16 %v97
  %v434 = vunpack.c.l.b16 %v98
  %v435 = vunpack.c.l.b16 %v99
  %v436 = vunpack.c.l.b16 %v100
  %v437 = vunpack.c.l.b16 %v101
  %v438 = vunpack.c.l.b16 %v102
  %v439 = vunpack.c.l.b16 %v103
  %v440 = vunpack.c.l.b16 %v104
  %v441 = vunpack.c.l.b16 %v105
  %v442 = vunpack.c.l.b16 %v106
  %v443 = vunpack.c.l.b16 %v107
  %v444 = vunpack.c.l.b16 %v108
  %v445 = vunpack.c.l.b16 %v109
  %v446 = vunpack.c.l.b16 %v110
  %v447 = vunpack.c.l.b16 %v111
  %v448 = vunpack.c.l.b16 %v112
  %v449 = vunpack.c.l.b16 %v113
  %v450 = vunpack.c.l.b16 %v114
  %v451 = vunpack.c.l.b16 %v115
  %v452 = vunpack.c.l.b16 %v116
  %v453 = vunpack.c.l.b16 %v117
  %v454 = vunpack.c.l.b16 %v118
  %v455 = vunpack.c.l.b16 %v119
  %v456 = vunpack.c.l.b16 %v120
  %v457 = vunpack.c.l.b16 %v121
  %v458 = vunpack.c.l.b16 %v122
  %v459 = vunpack.c.l.b16 %v123
  %v460 = vunpack.c.l.b16 %v124
  %v461 = vunpack.c.l.b16 %v125
  %v462 = vunpack.c.l.b16 %v126
  %v463 = vunpack.c.l.b16 %v127
  %v464 = vunpack.c.l.b16 %v128
  %v465 = vunpack.c.l.b16 %v129
  %v466 = vunpack.c.l.b16 %v130
  %v467 = vunpack.c.l.b16 %v131
  %v468 = vunpack.c.l.b16 %v132
  %v469 = vunpack.c.l.b16 %v133
  %v470 = vunpack.c.l.b16 %v134
  %v471 = vunpack.c.l.b16 %v135
  %v472 = vunpack.c.l.b16 %v136
  %v473 = vunpack.c.l.b16 %v137
  %v474 = vunpack.c.l.b16 %v138
  %v475 = vunpack.c.l.b16 %v139
  %v476 = vunpack.c.l.b16 %v140
  %v477 = vunpack.c.l.b16 %v141
  %v478 = vunpack.c.l.b16 %v142
  %v479 = vunpack.c.l.b16 %v143
  %v480 = vunpack.c.l.b16 %v144
  %v481 = vunpack.c.l.b16 %v145
  %v482 = vunpack.c.l.b16 %v146
  %v483 = vunpack.c.l.b16 %v147
  %v484 = vunpack.c.l.b16 %v148
  %v485 = vunpack.c.l.b16 %v149
  %v486 = vunpack.c.l.b16 %v150
  %v487 = vunpack.c.l.b16 %v151
  %v488 = vunpack.c.l.b16 %v152
  %v489 = vunpack.c.l.b16 %v153
  %v490 = vunpack.c.l.b16 %v154
  %v491 = vunpack.c.l.b16 %v155
  %v492 = vpack.c.b16 %v365, %v364
  %v493 = vpack.c.b16 %v367, %v366
  %v494 = vpack.c.b16 %v369, %v368
  %v495 = vpack.c.b16 %v371, %v370
  %v496 = vpack.c.b16 %v373, %v372
  %v497 = vpack.c.b16 %v375, %v374
  %v498 = vpack.c.b16 %v377, %v376
  %v499 = vpack.c.b16 %v379, %v378
  %v500 = vpack.c.b16 %v381, %v380
  %v501 = vpack.c.b16 %v383, %v382
  %v502 = vpack.c.b16 %v385, %v384
  %v503 = vpack.c.b16 %v387, %v386
  %v504 = vpack.c.b16 %v389, %v388
  %v505 = vpack.c.b16 %v391, %v390
  %v506 = vpack.c.b16 %v393, %v392
  %v507 = vpack.c.b16 %v395, %v394
  %v508 = vpack.c.b16 %v397, %v396
  %v509 = vpack.c.b16 %v399, %v398
  %v510 = vpack.c.b16 %v401, %v400
  %v511 = vpack.c.b16 %v403, %v402
  %v512 = vpack.c.b16 %v405, %v404
  %v513 = vpack.c.b16 %v407, %v406
  %v514 = vpack.c.b16 %v409, %v408
  %v515 = vpack.c.b16 %v411, %v410
  %v516 = vpack.c.b16 %v413, %v412
  %v517 = vpack.c.b16 %v415, %v414
  %v518 = vpack.c.b16 %v417, %v416
  %v519 = vpack.c.b16 %v419, %v418
  %v520 = vpack.c.b16 %v421, %v420
  %v521 = vpack.c.b16 %v423, %v422
  %v522 = vpack.c.b16 %v425, %v424
  %v523 = vpack.c.b16 %v427, %v426
  %v524 = vpack.c.b16 %v429, %v428
  %v525 = vpack.c.b16 %v431, %v430
  %v526 = vpack.c.b16 %v433, %v432
  %v527 = vpack.c.b16 %v435, %v434
  %v528 = vpack.c.b16 %v437, %v436
  %v529 = vpack.c.b16 %v439, %v438
  %v530 = vpack.c.b16 %v441, %v440
  %v531 = vpack.c.b16 %v443, %v442
  %v532 = vpack.c.b16 %v445, %v444
  %v533 = vpack.c.b16 %v447, %v446
  %v534 = vpack.c.b16 %v449, %v448
  %v535 = vpack.c.b16 %v451, %v450
  %v536 = vpack.c.b16 %v453, %v452
  %v537 = vpack.c.b16 %v455, %v454
  %v538 = vpack.c.b16 %v457, %v456
  %v539 = vpack.c.b16 %v459, %v458
  %v540 = vpack.c.b16 %v461, %v460
  %v541 = vpack.c.b16 %v463, %v462
  %v542 = vpack.c.b16 %v465, %v464
  %v543 = vpack.c.b16 %v467, %v466
  %v544 = vpack.c.b16 %v469, %v468
  %v545 = vpack.c.b16 %v471, %v470
  %v546 = vpack.c.b16 %v473, %v472
  %v547 = vpack.c.b16 %v475, %v474
  %v548 = vpack.c.b16 %v477, %v476
  %v549 = vpack.c.b16 %v479, %v478
  %v550 = vpack.c.b16 %v481, %v480
  %v551 = vpack.c.b16 %v483, %v482
  %v552 = vpack.c.b16 %v485, %v484
  %v553 = vpack.c.b16 %v487, %v486
  %v554 = vpack.c.b16 %v489, %v488
  %v555 = vpack.c.b16 %v491, %v490
  %620 = vmatprep.subr.bf16.mxu0 0
  %621 = vmatpush1.bf16.msra.mxu0 %v499
  %622 = vmatprep.subr.bf16.mxu0 0
  %623 = vmatpush1.bf16.msra.mxu0 %v498
  %624 = vmatprep.subr.bf16.mxu0 0
  %625 = vmatpush1.bf16.msra.mxu0 %v497
  %626 = vmatprep.subr.bf16.mxu0 0
  %627 = vmatpush1.bf16.msra.mxu0 %v496
  %628 = vmatprep.subr.bf16.mxu0 0
  %629 = vmatpush1.bf16.msra.mxu0 %v495
  %630 = vmatprep.subr.bf16.mxu0 0
  %631 = vmatpush1.bf16.msra.mxu0 %v494
  %632 = vmatprep.subr.bf16.mxu0 0
  %633 = vmatpush1.bf16.msra.mxu0 %v493
  %634 = vmatprep.subr.bf16.mxu0 0
  %635 = vmatpush1.bf16.msra.mxu0 %v492
  %636 = vmatprep.subr.bf16.mxu0 0
  %637 = vmatpush2.bf16.msra.mxu0 %v507
  %638 = vmatprep.subr.bf16.mxu0 0
  %639 = vmatpush2.bf16.msra.mxu0 %v506
  %640 = vmatprep.subr.bf16.mxu0 0
  %641 = vmatpush2.bf16.msra.mxu0 %v505
  %642 = vmatprep.subr.bf16.mxu0 0
  %643 = vmatpush2.bf16.msra.mxu0 %v504
  %644 = vmatprep.subr.bf16.mxu0 0
  %645 = vmatpush2.bf16.msra.mxu0 %v503
  %646 = vmatprep.subr.bf16.mxu0 0
  %647 = vmatpush2.bf16.msra.mxu0 %v502
  %648 = vmatprep.subr.bf16.mxu0 0
  %649 = vmatpush2.bf16.msra.mxu0 %v501
  %650 = vmatprep.subr.bf16.mxu0 0
  %651 = vmatpush2.bf16.msra.mxu0 %v500
  %652 = vmatprep.mubr.bf16.mxu0 %v205
  %653 = vmatmul.mubr.bf16.gmra.mxu0 %v204
  %v654 = vpop.f32.mrf.mxu0
  %v655 = vadd.f32 0.0, %v654
  %v656 = vpop.f32.mrf.mxu0
  %v657 = vpop.f32.mrf.mxu0
  %v658 = vadd.f32 0.0, %v657
  %v659 = vpop.f32.mrf.mxu0
  %660 = vmatprep.mubr.bf16.mxu0 %v213
  %661 = vmatmul.mubr.bf16.gmra.mxu0 %v212
  %v662 = vpop.f32.mrf.mxu0
  %v663 = vadd.f32 0.0, %v662
  %v664 = vpop.f32.mrf.mxu0
  %v665 = vpop.f32.mrf.mxu0
  %v666 = vadd.f32 0.0, %v665
  %v667 = vpop.f32.mrf.mxu0
  %668 = vdwg.mxu0
  %669 = vmatprep.subr.bf16.mxu0 0
  %670 = vmatpush1.bf16.msra.mxu0 %v515
  %671 = vmatprep.subr.bf16.mxu0 0
  %672 = vmatpush1.bf16.msra.mxu0 %v514
  %673 = vmatprep.subr.bf16.mxu0 0
  %674 = vmatpush1.bf16.msra.mxu0 %v513
  %675 = vmatprep.subr.bf16.mxu0 0
  %676 = vmatpush1.bf16.msra.mxu0 %v512
  %677 = vmatprep.subr.bf16.mxu0 0
  %678 = vmatpush1.bf16.msra.mxu0 %v511
  %679 = vmatprep.subr.bf16.mxu0 0
  %680 = vmatpush1.bf16.msra.mxu0 %v510
  %681 = vmatprep.subr.bf16.mxu0 0
  %682 = vmatpush1.bf16.msra.mxu0 %v509
  %683 = vmatprep.subr.bf16.mxu0 0
  %684 = vmatpush1.bf16.msra.mxu0 %v508
  %685 = vmatprep.subr.bf16.mxu0 0
  %686 = vmatpush2.bf16.msra.mxu0 %v523
  %687 = vmatprep.subr.bf16.mxu0 0
  %688 = vmatpush2.bf16.msra.mxu0 %v522
  %689 = vmatprep.subr.bf16.mxu0 0
  %690 = vmatpush2.bf16.msra.mxu0 %v521
  %691 = vmatprep.subr.bf16.mxu0 0
  %692 = vmatpush2.bf16.msra.mxu0 %v520
  %693 = vmatprep.subr.bf16.mxu0 0
  %694 = vmatpush2.bf16.msra.mxu0 %v519
  %695 = vmatprep.subr.bf16.mxu0 0
  %696 = vmatpush2.bf16.msra.mxu0 %v518
  %697 = vmatprep.subr.bf16.mxu0 0
  %698 = vmatpush2.bf16.msra.mxu0 %v517
  %699 = vmatprep.subr.bf16.mxu0 0
  %700 = vmatpush2.bf16.msra.mxu0 %v516
  %701 = vmatprep.mubr.bf16.mxu0 %v207
  %702 = vmatmul.mubr.bf16.gmra.mxu0 %v206
  %v703 = vpop.f32.mrf.mxu0
  %v704 = vadd.f32 %v655, %v703
  %v705 = vpop.f32.mrf.mxu0
  %v706 = vpop.f32.mrf.mxu0
  %v707 = vadd.f32 %v658, %v706
  %v708 = vpop.f32.mrf.mxu0
  %709 = vmatprep.mubr.bf16.mxu0 %v215
  %710 = vmatmul.mubr.bf16.gmra.mxu0 %v214
  %v711 = vpop.f32.mrf.mxu0
  %v712 = vadd.f32 %v663, %v711
  %v713 = vpop.f32.mrf.mxu0
  %v714 = vpop.f32.mrf.mxu0
  %v715 = vadd.f32 %v666, %v714
  %v716 = vpop.f32.mrf.mxu0
  %717 = vdwg.mxu0
  %718 = vmatprep.subr.bf16.mxu0 0
  %719 = vmatpush1.bf16.msra.mxu0 %v531
  %720 = vmatprep.subr.bf16.mxu0 0
  %721 = vmatpush1.bf16.msra.mxu0 %v530
  %722 = vmatprep.subr.bf16.mxu0 0
  %723 = vmatpush1.bf16.msra.mxu0 %v529
  %724 = vmatprep.subr.bf16.mxu0 0
  %725 = vmatpush1.bf16.msra.mxu0 %v528
  %726 = vmatprep.subr.bf16.mxu0 0
  %727 = vmatpush1.bf16.msra.mxu0 %v527
  %728 = vmatprep.subr.bf16.mxu0 0
  %729 = vmatpush1.bf16.msra.mxu0 %v526
  %730 = vmatprep.subr.bf16.mxu0 0
  %731 = vmatpush1.bf16.msra.mxu0 %v525
  %732 = vmatprep.subr.bf16.mxu0 0
  %733 = vmatpush1.bf16.msra.mxu0 %v524
  %734 = vmatprep.subr.bf16.mxu0 0
  %735 = vmatpush2.bf16.msra.mxu0 %v539
  %736 = vmatprep.subr.bf16.mxu0 0
  %737 = vmatpush2.bf16.msra.mxu0 %v538
  %738 = vmatprep.subr.bf16.mxu0 0
  %739 = vmatpush2.bf16.msra.mxu0 %v537
  %740 = vmatprep.subr.bf16.mxu0 0
  %741 = vmatpush2.bf16.msra.mxu0 %v536
  %742 = vmatprep.subr.bf16.mxu0 0
  %743 = vmatpush2.bf16.msra.mxu0 %v535
  %744 = vmatprep.subr.bf16.mxu0 0
  %745 = vmatpush2.bf16.msra.mxu0 %v534
  %746 = vmatprep.subr.bf16.mxu0 0
  %747 = vmatpush2.bf16.msra.mxu0 %v533
  %748 = vmatprep.subr.bf16.mxu0 0
  %749 = vmatpush2.bf16.msra.mxu0 %v532
  %750 = vmatprep.mubr.bf16.mxu0 %v209
  %751 = vmatmul.mubr.bf16.gmra.mxu0 %v208
  %v752 = vpop.f32.mrf.mxu0
  %v753 = vadd.f32 %v704, %v752
  %v754 = vpop.f32.mrf.mxu0
  %v755 = vpop.f32.mrf.mxu0
  %v756 = vadd.f32 %v707, %v755
  %v757 = vpop.f32.mrf.mxu0
  %758 = vmatprep.mubr.bf16.mxu0 %v217
  %759 = vmatmul.mubr.bf16.gmra.mxu0 %v216
  %v760 = vpop.f32.mrf.mxu0
  %v761 = vadd.f32 %v712, %v760
  %v762 = vpop.f32.mrf.mxu0
  %v763 = vpop.f32.mrf.mxu0
  %v764 = vadd.f32 %v715, %v763
  %v765 = vpop.f32.mrf.mxu0
  %766 = vdwg.mxu0
  %767 = vmatprep.subr.bf16.mxu0 0
  %768 = vmatpush1.bf16.msra.mxu0 %v547
  %769 = vmatprep.subr.bf16.mxu0 0
  %770 = vmatpush1.bf16.msra.mxu0 %v546
  %771 = vmatprep.subr.bf16.mxu0 0
  %772 = vmatpush1.bf16.msra.mxu0 %v545
  %773 = vmatprep.subr.bf16.mxu0 0
  %774 = vmatpush1.bf16.msra.mxu0 %v544
  %775 = vmatprep.subr.bf16.mxu0 0
  %776 = vmatpush1.bf16.msra.mxu0 %v543
  %777 = vmatprep.subr.bf16.mxu0 0
  %778 = vmatpush1.bf16.msra.mxu0 %v542
  %779 = vmatprep.subr.bf16.mxu0 0
  %780 = vmatpush1.bf16.msra.mxu0 %v541
  %781 = vmatprep.subr.bf16.mxu0 0
  %782 = vmatpush1.bf16.msra.mxu0 %v540
  %783 = vmatprep.subr.bf16.mxu0 0
  %784 = vmatpush2.bf16.msra.mxu0 %v555
  %785 = vmatprep.subr.bf16.mxu0 0
  %786 = vmatpush2.bf16.msra.mxu0 %v554
  %787 = vmatprep.subr.bf16.mxu0 0
  %788 = vmatpush2.bf16.msra.mxu0 %v553
  %789 = vmatprep.subr.bf16.mxu0 0
  %790 = vmatpush2.bf16.msra.mxu0 %v552
  %791 = vmatprep.subr.bf16.mxu0 0
  %792 = vmatpush2.bf16.msra.mxu0 %v551
  %793 = vmatprep.subr.bf16.mxu0 0
  %794 = vmatpush2.bf16.msra.mxu0 %v550
  %795 = vmatprep.subr.bf16.mxu0 0
  %796 = vmatpush2.bf16.msra.mxu0 %v549
  %797 = vmatprep.subr.bf16.mxu0 0
  %798 = vmatpush2.bf16.msra.mxu0 %v548
  %799 = vmatprep.mubr.bf16.mxu0 %v211
  %800 = vmatmul.mubr.bf16.gmra.mxu0 %v210
  %v801 = vpop.f32.mrf.mxu0
  %v802 = vadd.f32 %v753, %v801
  %v803 = vpop.f32.mrf.mxu0
  %v804 = vpop.f32.mrf.mxu0
  %v805 = vadd.f32 %v756, %v804
  %v806 = vpop.f32.mrf.mxu0
  %807 = vmatprep.mubr.bf16.mxu0 %v219
  %808 = vmatmul.mubr.bf16.gmra.mxu0 %v218
  %v809 = vpop.f32.mrf.mxu0
  %v810 = vadd.f32 %v761, %v809
  %v811 = vpop.f32.mrf.mxu0
  %v812 = vpop.f32.mrf.mxu0
  %v813 = vadd.f32 %v764, %v812
  %v814 = vpop.f32.mrf.mxu0
  %815 = vdwg.mxu0
  %816 = vadd.xlane.f32.xlu0 %v802
  %v817 = vpop.xlane.xlu0 %816
  %818 = vadd.xlane.f32.xlu0 %v805
  %v819 = vpop.xlane.xlu0 %818
  %820 = vadd.xlane.f32.xlu0 %v810
  %v821 = vpop.xlane.xlu0 %820
  %822 = vadd.xlane.f32.xlu0 %v813
  %v823 = vpop.xlane.xlu0 %822
  %v824 = vrcp.pop 128.0
  %v825 = vmul.f32 %v817, %v824
  %v826 = vmul.f32 %v819, %v824
  %v827 = vmul.f32 %v821, %v824
  %v828 = vmul.f32 %v823, %v824
  %v829 = vsub.f32 %v802, %v825
  %v830 = vsub.f32 %v805, %v826
  %v831 = vsub.f32 %v810, %v827
  %v832 = vsub.f32 %v813, %v828
  %v833 = vmul.f32 %v829, %v829
  %v834 = vmul.f32 %v830, %v830
  %v835 = vmul.f32 %v831, %v831
  %v836 = vmul.f32 %v832, %v832
  %837 = vadd.xlane.f32.xlu0 %v833
  %v838 = vpop.xlane.xlu0 %837
  %839 = vadd.xlane.f32.xlu0 %v834
  %v840 = vpop.xlane.xlu0 %839
  %841 = vadd.xlane.f32.xlu0 %v835
  %v842 = vpop.xlane.xlu0 %841
  %843 = vadd.xlane.f32.xlu0 %v836
  %v844 = vpop.xlane.xlu0 %843
  %v845 = vmul.f32 %v838, %v824
  %v846 = vmul.f32 %v840, %v824
  %v847 = vmul.f32 %v842, %v824
  %v848 = vmul.f32 %v844, %v824
  %v849 = vadd.f32 %v845, 1e-05
  %v850 = vadd.f32 %v846, 1e-05
  %v851 = vadd.f32 %v847, 1e-05
  %v852 = vadd.f32 %v848, 1e-05
  %v853 = vrsqrt.pop %v849
  %v854 = vrsqrt.pop %v850
  %v855 = vrsqrt.pop %v851
  %v856 = vrsqrt.pop %v852
  %v857 = vmul.f32 %v829, %v853
  %v858 = vmul.f32 %v830, %v854
  %v859 = vmul.f32 %v831, %v855
  %v860 = vmul.f32 %v832, %v856
  %vm861 = vcmp.ge.f32.partialorder %v857, 0.0
  %vm862 = vcmp.ge.f32.partialorder %v858, 0.0
  %vm863 = vcmp.ge.f32.partialorder %v859, 0.0
  %vm864 = vcmp.ge.f32.partialorder %v860, 0.0
  %v865 = vmul.f32 %v857, 0.2
  %v866 = vmul.f32 %v858, 0.2
  %v867 = vmul.f32 %v859, 0.2
  %v868 = vmul.f32 %v860, 0.2
  %v869 = vsel %vm861, %v857, %v865
  %v870 = vsel %vm862, %v858, %v866
  %v871 = vsel %vm863, %v859, %v867
  %v872 = vsel %vm864, %v860, %v868
  %873 = vst [vmem:[%s2] sm:$0xff] %v869
  %874 = vst [vmem:[%s2 + $0x8] sm:$0xff] %v870
  %875 = vst [vmem:[%s2 + $0x10] sm:$0xff] %v871
  %876 = vst [vmem:[%s2 + $0x18] sm:$0xff] %v872
  // Predicated region
  $region10: #{generator_forward.5} parent=0 // pred_check
    _
  $region11: #{generator_forward.5} parent=0 // pred_check_branch
    %878 = sbr.rel (0) target = $region13
  $region12: #{generator_forward.5} parent=0 // pred_region
    _
  $region13: #{generator_forward.5} parent=0 // pred_fallthru
    _
  // Predicated region
  $region14: #{generator_forward.5} parent=0 // pred_check
    _
  $region15: #{generator_forward.5} parent=0 // pred_check_branch
    %880 = sbr.rel (0) target = $region17
  $region16: #{generator_forward.5} parent=0 // pred_region
    _
  $region17: #{generator_forward.5} parent=0 // pred_fallthru
    _

// kernel: generator_forward.6
$region0: #{generator_forward.6}
  #allocation0 [shape = 'u32[]', space=smem, size = 0x4, offset = 0x4, fixed_abs, tag = 'smem constant byte address 0x4 - core index']
  #allocation1 [shape = 'u32[144,128]{1,0:T(1,128)}', space=vmem, size = 0x12000, scoped, tag = 'internal scratch']
  %s0 = inlined_call_operand.vmem [shape: bf16[16,512], index: 0, kind: input, shape index: {}]
  %s1 = inlined_call_operand.vmem [shape: bf16[512,512], index: 1, kind: input, shape index: {}]
  %s2 = inlined_call_operand.vmem [shape: f32[16,512], index: 2, kind: output, shape index: {}]
  %s3 = sld [smem:[#allocation0]]
  $region18: #{generator_forward.6} parent=0
    _
  %s5 = ssub.s32 1, %s3
  %s6 = scalar_select 0, %s5, %s3
  // Predicated region
  $region2: #{generator_forward.6} parent=0 // pred_check
    _
  $region3: #{generator_forward.6} parent=0 // pred_check_branch
    %8 = sbr.rel (0) target = $region5
  $region4: #{generator_forward.6} parent=0 // pred_region
    _
  $region5: #{generator_forward.6} parent=0 // pred_fallthru
    _
  // Predicated region
  $region6: #{generator_forward.6} parent=0 // pred_check
    _
  $region7: #{generator_forward.6} parent=0 // pred_check_branch
    %10 = sbr.rel (0) target = $region9
  $region8: #{generator_forward.6} parent=0 // pred_region
    _
  $region9: #{generator_forward.6} parent=0 // pred_fallthru
    _
  %v11 = vld [vmem:[%s0] sm:$0xff]
  %v12 = vld [vmem:[%s0 + $0x8] sm:$0xff]
  %v13 = vld [vmem:[%s0 + $0x10] sm:$0xff]
  %v14 = vld [vmem:[%s0 + $0x18] sm:$0xff]
  %v15 = vld [vmem:[%s1] sm:$0xff]
  %v16 = vld [vmem:[%s1 + $0x8] sm:$0xff]
  %v17 = vld [vmem:[%s1 + $0x10] sm:$0xff]
  %v18 = vld [vmem:[%s1 + $0x18] sm:$0xff]
  %v19 = vld [vmem:[%s1 + $0x20] sm:$0xff]
  %v20 = vld [vmem:[%s1 + $0x28] sm:$0xff]
  %v21 = vld [vmem:[%s1 + $0x30] sm:$0xff]
  %v22 = vld [vmem:[%s1 + $0x38] sm:$0xff]
  %v23 = vld [vmem:[%s1 + $0x40] sm:$0xff]
  %v24 = vld [vmem:[%s1 + $0x48] sm:$0xff]
  %v25 = vld [vmem:[%s1 + $0x50] sm:$0xff]
  %v26 = vld [vmem:[%s1 + $0x58] sm:$0xff]
  %v27 = vld [vmem:[%s1 + $0x60] sm:$0xff]
  %v28 = vld [vmem:[%s1 + $0x68] sm:$0xff]
  %v29 = vld [vmem:[%s1 + $0x70] sm:$0xff]
  %v30 = vld [vmem:[%s1 + $0x78] sm:$0xff]
  %v31 = vld [vmem:[%s1 + $0x80] sm:$0xff]
  %v32 = vld [vmem:[%s1 + $0x88] sm:$0xff]
  %v33 = vld [vmem:[%s1 + $0x90] sm:$0xff]
  %v34 = vld [vmem:[%s1 + $0x98] sm:$0xff]
  %v35 = vld [vmem:[%s1 + $0xa0] sm:$0xff]
  %v36 = vld [vmem:[%s1 + $0xa8] sm:$0xff]
  %v37 = vld [vmem:[%s1 + $0xb0] sm:$0xff]
  %v38 = vld [vmem:[%s1 + $0xb8] sm:$0xff]
  %v39 = vld [vmem:[%s1 + $0xc0] sm:$0xff]
  %v40 = vld [vmem:[%s1 + $0xc8] sm:$0xff]
  %v41 = vld [vmem:[%s1 + $0xd0] sm:$0xff]
  %v42 = vld [vmem:[%s1 + $0xd8] sm:$0xff]
  %v43 = vld [vmem:[%s1 + $0xe0] sm:$0xff]
  %v44 = vld [vmem:[%s1 + $0xe8] sm:$0xff]
  %v45 = vld [vmem:[%s1 + $0xf0] sm:$0xff]
  %v46 = vld [vmem:[%s1 + $0xf8] sm:$0xff]
  %v47 = vld [vmem:[%s1 + $0x100] sm:$0xff]
  %v48 = vld [vmem:[%s1 + $0x108] sm:$0xff]
  %v49 = vld [vmem:[%s1 + $0x110] sm:$0xff]
  %v50 = vld [vmem:[%s1 + $0x118] sm:$0xff]
  %v51 = vld [vmem:[%s1 + $0x120] sm:$0xff]
  %v52 = vld [vmem:[%s1 + $0x128] sm:$0xff]
  %v53 = vld [vmem:[%s1 + $0x130] sm:$0xff]
  %v54 = vld [vmem:[%s1 + $0x138] sm:$0xff]
  %v55 = vld [vmem:[%s1 + $0x140] sm:$0xff]
  %v56 = vld [vmem:[%s1 + $0x148] sm:$0xff]
  %v57 = vld [vmem:[%s1 + $0x150] sm:$0xff]
  %v58 = vld [vmem:[%s1 + $0x158] sm:$0xff]
  %v59 = vld [vmem:[%s1 + $0x160] sm:$0xff]
  %v60 = vld [vmem:[%s1 + $0x168] sm:$0xff]
  %v61 = vld [vmem:[%s1 + $0x170] sm:$0xff]
  %v62 = vld [vmem:[%s1 + $0x178] sm:$0xff]
  %v63 = vld [vmem:[%s1 + $0x180] sm:$0xff]
  %v64 = vld [vmem:[%s1 + $0x188] sm:$0xff]
  %v65 = vld [vmem:[%s1 + $0x190] sm:$0xff]
  %v66 = vld [vmem:[%s1 + $0x198] sm:$0xff]
  %v67 = vld [vmem:[%s1 + $0x1a0] sm:$0xff]
  %v68 = vld [vmem:[%s1 + $0x1a8] sm:$0xff]
  %v69 = vld [vmem:[%s1 + $0x1b0] sm:$0xff]
  %v70 = vld [vmem:[%s1 + $0x1b8] sm:$0xff]
  %v71 = vld [vmem:[%s1 + $0x1c0] sm:$0xff]
  %v72 = vld [vmem:[%s1 + $0x1c8] sm:$0xff]
  %v73 = vld [vmem:[%s1 + $0x1d0] sm:$0xff]
  %v74 = vld [vmem:[%s1 + $0x1d8] sm:$0xff]
  %v75 = vld [vmem:[%s1 + $0x1e0] sm:$0xff]
  %v76 = vld [vmem:[%s1 + $0x1e8] sm:$0xff]
  %v77 = vld [vmem:[%s1 + $0x1f0] sm:$0xff]
  %v78 = vld [vmem:[%s1 + $0x1f8] sm:$0xff]
  %v79 = vld [vmem:[%s1 + $0x200] sm:$0xff]
  %v80 = vld [vmem:[%s1 + $0x208] sm:$0xff]
  %v81 = vld [vmem:[%s1 + $0x210] sm:$0xff]
  %v82 = vld [vmem:[%s1 + $0x218] sm:$0xff]
  %v83 = vld [vmem:[%s1 + $0x220] sm:$0xff]
  %v84 = vld [vmem:[%s1 + $0x228] sm:$0xff]
  %v85 = vld [vmem:[%s1 + $0x230] sm:$0xff]
  %v86 = vld [vmem:[%s1 + $0x238] sm:$0xff]
  %v87 = vld [vmem:[%s1 + $0x240] sm:$0xff]
  %v88 = vld [vmem:[%s1 + $0x248] sm:$0xff]
  %v89 = vld [vmem:[%s1 + $0x250] sm:$0xff]
  %v90 = vld [vmem:[%s1 + $0x258] sm:$0xff]
  %v91 = vld [vmem:[%s1 + $0x260] sm:$0xff]
  %v92 = vld [vmem:[%s1 + $0x268] sm:$0xff]
  %v93 = vld [vmem:[%s1 + $0x270] sm:$0xff]
  %v94 = vld [vmem:[%s1 + $0x278] sm:$0xff]
  %v95 = vld [vmem:[%s1 + $0x280] sm:$0xff]
  %v96 = vld [vmem:[%s1 + $0x288] sm:$0xff]
  %v97 = vld [vmem:[%s1 + $0x290] sm:$0xff]
  %v98 = vld [vmem:[%s1 + $0x298] sm:$0xff]
  %v99 = vld [vmem:[%s1 + $0x2a0] sm:$0xff]
  %v100 = vld [vmem:[%s1 + $0x2a8] sm:$0xff]
  %v101 = vld [vmem:[%s1 + $0x2b0] sm:$0xff]
  %v102 = vld [vmem:[%s1 + $0x2b8] sm:$0xff]
  %v103 = vld [vmem:[%s1 + $0x2c0] sm:$0xff]
  %v104 = vld [vmem:[%s1 + $0x2c8] sm:$0xff]
  %v105 = vld [vmem:[%s1 + $0x2d0] sm:$0xff]
  %v106 = vld [vmem:[%s1 + $0x2d8] sm:$0xff]
  %v107 = vld [vmem:[%s1 + $0x2e0] sm:$0xff]
  %v108 = vld [vmem:[%s1 + $0x2e8] sm:$0xff]
  %v109 = vld [vmem:[%s1 + $0x2f0] sm:$0xff]
  %v110 = vld [vmem:[%s1 + $0x2f8] sm:$0xff]
  %v111 = vld [vmem:[%s1 + $0x300] sm:$0xff]
  %v112 = vld [vmem:[%s1 + $0x308] sm:$0xff]
  %v113 = vld [vmem:[%s1 + $0x310] sm:$0xff]
  %v114 = vld [vmem:[%s1 + $0x318] sm:$0xff]
  %v115 = vld [vmem:[%s1 + $0x320] sm:$0xff]
  %v116 = vld [vmem:[%s1 + $0x328] sm:$0xff]
  %v117 = vld [vmem:[%s1 + $0x330] sm:$0xff]
  %v118 = vld [vmem:[%s1 + $0x338] sm:$0xff]
  %v119 = vld [vmem:[%s1 + $0x340] sm:$0xff]
  %v120 = vld [vmem:[%s1 + $0x348] sm:$0xff]
  %v121 = vld [vmem:[%s1 + $0x350] sm:$0xff]
  %v122 = vld [vmem:[%s1 + $0x358] sm:$0xff]
  %v123 = vld [vmem:[%s1 + $0x360] sm:$0xff]
  %v124 = vld [vmem:[%s1 + $0x368] sm:$0xff]
  %v125 = vld [vmem:[%s1 + $0x370] sm:$0xff]
  %v126 = vld [vmem:[%s1 + $0x378] sm:$0xff]
  %v127 = vld [vmem:[%s1 + $0x380] sm:$0xff]
  %v128 = vld [vmem:[%s1 + $0x388] sm:$0xff]
  %v129 = vld [vmem:[%s1 + $0x390] sm:$0xff]
  %v130 = vld [vmem:[%s1 + $0x398] sm:$0xff]
  %v131 = vld [vmem:[%s1 + $0x3a0] sm:$0xff]
  %v132 = vld [vmem:[%s1 + $0x3a8] sm:$0xff]
  %v133 = vld [vmem:[%s1 + $0x3b0] sm:$0xff]
  %v134 = vld [vmem:[%s1 + $0x3b8] sm:$0xff]
  %v135 = vld [vmem:[%s1 + $0x3c0] sm:$0xff]
  %v136 = vld [vmem:[%s1 + $0x3c8] sm:$0xff]
  %v137 = vld [vmem:[%s1 + $0x3d0] sm:$0xff]
  %v138 = vld [vmem:[%s1 + $0x3d8] sm:$0xff]
  %v139 = vld [vmem:[%s1 + $0x3e0] sm:$0xff]
  %v140 = vld [vmem:[%s1 + $0x3e8] sm:$0xff]
  %v141 = vld [vmem:[%s1 + $0x3f0] sm:$0xff]
  %v142 = vld [vmem:[%s1 + $0x3f8] sm:$0xff]
  %v147 = vunpack.c.l.b16 %v11
  %v148 = vunpack.c.h.b16 %v11
  %v149 = vunpack.c.l.b16 %v12
  %v150 = vunpack.c.h.b16 %v12
  %v151 = vunpack.c.l.b16 %v13
  %v152 = vunpack.c.h.b16 %v13
  %v153 = vunpack.c.l.b16 %v14
  %v154 = vunpack.c.h.b16 %v14
  %v155 = vpack.c.b16 %v151, %v147
  %v156 = vpack.c.b16 %v152, %v148
  %v157 = vpack.c.b16 %v153, %v149
  %v158 = vpack.c.b16 %v154, %v150
  %v291 = vunpack.c.l.b16 %v15
  %v292 = vunpack.c.h.b16 %v15
  %v293 = vunpack.c.l.b16 %v16
  %v294 = vunpack.c.h.b16 %v16
  %v295 = vunpack.c.l.b16 %v17
  %v296 = vunpack.c.h.b16 %v17
  %v297 = vunpack.c.l.b16 %v18
  %v298 = vunpack.c.h.b16 %v18
  %v299 = vunpack.c.l.b16 %v19
  %v300 = vunpack.c.h.b16 %v19
  %v301 = vunpack.c.l.b16 %v20
  %v302 = vunpack.c.h.b16 %v20
  %v303 = vunpack.c.l.b16 %v21
  %v304 = vunpack.c.h.b16 %v21
  %v305 = vunpack.c.l.b16 %v22
  %v306 = vunpack.c.h.b16 %v22
  %v307 = vunpack.c.l.b16 %v23
  %v308 = vunpack.c.h.b16 %v23
  %v309 = vunpack.c.l.b16 %v24
  %v310 = vunpack.c.h.b16 %v24
  %v311 = vunpack.c.l.b16 %v25
  %v312 = vunpack.c.h.b16 %v25
  %v313 = vunpack.c.l.b16 %v26
  %v314 = vunpack.c.h.b16 %v26
  %v315 = vunpack.c.l.b16 %v27
  %v316 = vunpack.c.h.b16 %v27
  %v317 = vunpack.c.l.b16 %v28
  %v318 = vunpack.c.h.b16 %v28
  %v319 = vunpack.c.l.b16 %v29
  %v320 = vunpack.c.h.b16 %v29
  %v321 = vunpack.c.l.b16 %v30
  %v322 = vunpack.c.h.b16 %v30
  %v323 = vunpack.c.l.b16 %v31
  %v324 = vunpack.c.h.b16 %v31
  %v325 = vunpack.c.l.b16 %v32
  %v326 = vunpack.c.h.b16 %v32
  %v327 = vunpack.c.l.b16 %v33
  %v328 = vunpack.c.h.b16 %v33
  %v329 = vunpack.c.l.b16 %v34
  %v330 = vunpack.c.h.b16 %v34
  %v331 = vunpack.c.l.b16 %v35
  %v332 = vunpack.c.h.b16 %v35
  %v333 = vunpack.c.l.b16 %v36
  %v334 = vunpack.c.h.b16 %v36
  %v335 = vunpack.c.l.b16 %v37
  %v336 = vunpack.c.h.b16 %v37
  %v337 = vunpack.c.l.b16 %v38
  %v338 = vunpack.c.h.b16 %v38
  %v339 = vunpack.c.l.b16 %v39
  %v340 = vunpack.c.h.b16 %v39
  %v341 = vunpack.c.l.b16 %v40
  %v342 = vunpack.c.h.b16 %v40
  %v343 = vunpack.c.l.b16 %v41
  %v344 = vunpack.c.h.b16 %v41
  %v345 = vunpack.c.l.b16 %v42
  %v346 = vunpack.c.h.b16 %v42
  %v347 = vunpack.c.l.b16 %v43
  %v348 = vunpack.c.h.b16 %v43
  %v349 = vunpack.c.l.b16 %v44
  %v350 = vunpack.c.h.b16 %v44
  %v351 = vunpack.c.l.b16 %v45
  %v352 = vunpack.c.h.b16 %v45
  %v353 = vunpack.c.l.b16 %v46
  %v354 = vunpack.c.h.b16 %v46
  %v355 = vunpack.c.l.b16 %v47
  %v356 = vunpack.c.h.b16 %v47
  %v357 = vunpack.c.l.b16 %v48
  %v358 = vunpack.c.h.b16 %v48
  %v359 = vunpack.c.l.b16 %v49
  %v360 = vunpack.c.h.b16 %v49
  %v361 = vunpack.c.l.b16 %v50
  %v362 = vunpack.c.h.b16 %v50
  %v363 = vunpack.c.l.b16 %v51
  %v364 = vunpack.c.h.b16 %v51
  %v365 = vunpack.c.l.b16 %v52
  %v366 = vunpack.c.h.b16 %v52
  %v367 = vunpack.c.l.b16 %v53
  %v368 = vunpack.c.h.b16 %v53
  %v369 = vunpack.c.l.b16 %v54
  %v370 = vunpack.c.h.b16 %v54
  %v371 = vunpack.c.l.b16 %v55
  %v372 = vunpack.c.h.b16 %v55
  %v373 = vunpack.c.l.b16 %v56
  %v374 = vunpack.c.h.b16 %v56
  %v375 = vunpack.c.l.b16 %v57
  %v376 = vunpack.c.h.b16 %v57
  %v377 = vunpack.c.l.b16 %v58
  %v378 = vunpack.c.h.b16 %v58
  %v379 = vunpack.c.l.b16 %v59
  %v380 = vunpack.c.h.b16 %v59
  %v381 = vunpack.c.l.b16 %v60
  %v382 = vunpack.c.h.b16 %v60
  %v383 = vunpack.c.l.b16 %v61
  %v384 = vunpack.c.h.b16 %v61
  %v385 = vunpack.c.l.b16 %v62
  %v386 = vunpack.c.h.b16 %v62
  %v387 = vunpack.c.l.b16 %v63
  %v388 = vunpack.c.h.b16 %v63
  %v389 = vunpack.c.l.b16 %v64
  %v390 = vunpack.c.h.b16 %v64
  %v391 = vunpack.c.l.b16 %v65
  %v392 = vunpack.c.h.b16 %v65
  %v393 = vunpack.c.l.b16 %v66
  %v394 = vunpack.c.h.b16 %v66
  %v395 = vunpack.c.l.b16 %v67
  %v396 = vunpack.c.h.b16 %v67
  %v397 = vunpack.c.l.b16 %v68
  %v398 = vunpack.c.h.b16 %v68
  %v399 = vunpack.c.l.b16 %v69
  %v400 = vunpack.c.h.b16 %v69
  %v401 = vunpack.c.l.b16 %v70
  %v402 = vunpack.c.h.b16 %v70
  %v403 = vunpack.c.l.b16 %v71
  %v404 = vunpack.c.h.b16 %v71
  %v405 = vunpack.c.l.b16 %v72
  %v406 = vunpack.c.h.b16 %v72
  %v407 = vunpack.c.l.b16 %v73
  %v408 = vunpack.c.h.b16 %v73
  %v409 = vunpack.c.l.b16 %v74
  %v410 = vunpack.c.h.b16 %v74
  %v411 = vunpack.c.l.b16 %v75
  %v412 = vunpack.c.h.b16 %v75
  %v413 = vunpack.c.l.b16 %v76
  %v414 = vunpack.c.h.b16 %v76
  %v415 = vunpack.c.l.b16 %v77
  %v416 = vunpack.c.h.b16 %v77
  %v417 = vunpack.c.l.b16 %v78
  %v418 = vunpack.c.h.b16 %v78
  %v419 = vunpack.c.l.b16 %v79
  %v420 = vunpack.c.h.b16 %v79
  %v421 = vunpack.c.l.b16 %v80
  %v422 = vunpack.c.h.b16 %v80
  %v423 = vunpack.c.l.b16 %v81
  %v424 = vunpack.c.h.b16 %v81
  %v425 = vunpack.c.l.b16 %v82
  %v426 = vunpack.c.h.b16 %v82
  %v427 = vunpack.c.l.b16 %v83
  %v428 = vunpack.c.h.b16 %v83
  %v429 = vunpack.c.l.b16 %v84
  %v430 = vunpack.c.h.b16 %v84
  %v431 = vunpack.c.l.b16 %v85
  %v432 = vunpack.c.h.b16 %v85
  %v433 = vunpack.c.l.b16 %v86
  %v434 = vunpack.c.h.b16 %v86
  %v435 = vunpack.c.l.b16 %v87
  %v436 = vunpack.c.h.b16 %v87
  %v437 = vunpack.c.l.b16 %v88
  %v438 = vunpack.c.h.b16 %v88
  %v439 = vunpack.c.l.b16 %v89
  %v440 = vunpack.c.h.b16 %v89
  %v441 = vunpack.c.l.b16 %v90
  %v442 = vunpack.c.h.b16 %v90
  %v443 = vunpack.c.l.b16 %v91
  %v444 = vunpack.c.h.b16 %v91
  %v445 = vunpack.c.l.b16 %v92
  %v446 = vunpack.c.h.b16 %v92
  %v447 = vunpack.c.l.b16 %v93
  %v448 = vunpack.c.h.b16 %v93
  %v449 = vunpack.c.l.b16 %v94
  %v450 = vunpack.c.h.b16 %v94
  %v451 = vunpack.c.l.b16 %v95
  %v452 = vunpack.c.h.b16 %v95
  %v453 = vunpack.c.l.b16 %v96
  %v454 = vunpack.c.h.b16 %v96
  %v455 = vunpack.c.l.b16 %v97
  %v456 = vunpack.c.h.b16 %v97
  %v457 = vunpack.c.l.b16 %v98
  %v458 = vunpack.c.h.b16 %v98
  %v459 = vunpack.c.l.b16 %v99
  %v460 = vunpack.c.h.b16 %v99
  %v461 = vunpack.c.l.b16 %v100
  %v462 = vunpack.c.h.b16 %v100
  %v463 = vunpack.c.l.b16 %v101
  %v464 = vunpack.c.h.b16 %v101
  %v465 = vunpack.c.l.b16 %v102
  %v466 = vunpack.c.h.b16 %v102
  %v467 = vunpack.c.l.b16 %v103
  %v468 = vunpack.c.h.b16 %v103
  %v469 = vunpack.c.l.b16 %v104
  %v470 = vunpack.c.h.b16 %v104
  %v471 = vunpack.c.l.b16 %v105
  %v472 = vunpack.c.h.b16 %v105
  %v473 = vunpack.c.l.b16 %v106
  %v474 = vunpack.c.h.b16 %v106
  %v475 = vunpack.c.l.b16 %v107
  %v476 = vunpack.c.h.b16 %v107
  %v477 = vunpack.c.l.b16 %v108
  %v478 = vunpack.c.h.b16 %v108
  %v479 = vunpack.c.l.b16 %v109
  %v480 = vunpack.c.h.b16 %v109
  %v481 = vunpack.c.l.b16 %v110
  %v482 = vunpack.c.h.b16 %v110
  %v483 = vunpack.c.l.b16 %v111
  %v484 = vunpack.c.h.b16 %v111
  %v485 = vunpack.c.l.b16 %v112
  %v486 = vunpack.c.h.b16 %v112
  %v487 = vunpack.c.l.b16 %v113
  %v488 = vunpack.c.h.b16 %v113
  %v489 = vunpack.c.l.b16 %v114
  %v490 = vunpack.c.h.b16 %v114
  %v491 = vunpack.c.l.b16 %v115
  %v492 = vunpack.c.h.b16 %v115
  %v493 = vunpack.c.l.b16 %v116
  %v494 = vunpack.c.h.b16 %v116
  %v495 = vunpack.c.l.b16 %v117
  %v496 = vunpack.c.h.b16 %v117
  %v497 = vunpack.c.l.b16 %v118
  %v498 = vunpack.c.h.b16 %v118
  %v499 = vunpack.c.l.b16 %v119
  %v500 = vunpack.c.h.b16 %v119
  %v501 = vunpack.c.l.b16 %v120
  %v502 = vunpack.c.h.b16 %v120
  %v503 = vunpack.c.l.b16 %v121
  %v504 = vunpack.c.h.b16 %v121
  %v505 = vunpack.c.l.b16 %v122
  %v506 = vunpack.c.h.b16 %v122
  %v507 = vunpack.c.l.b16 %v123
  %v508 = vunpack.c.h.b16 %v123
  %v509 = vunpack.c.l.b16 %v124
  %v510 = vunpack.c.h.b16 %v124
  %v511 = vunpack.c.l.b16 %v125
  %v512 = vunpack.c.h.b16 %v125
  %v513 = vunpack.c.l.b16 %v126
  %v514 = vunpack.c.h.b16 %v126
  %v515 = vunpack.c.l.b16 %v127
  %v516 = vunpack.c.h.b16 %v127
  %v517 = vunpack.c.l.b16 %v128
  %v518 = vunpack.c.h.b16 %v128
  %v519 = vunpack.c.l.b16 %v129
  %v520 = vunpack.c.h.b16 %v129
  %v521 = vunpack.c.l.b16 %v130
  %v522 = vunpack.c.h.b16 %v130
  %v523 = vunpack.c.l.b16 %v131
  %v524 = vunpack.c.h.b16 %v131
  %v525 = vunpack.c.l.b16 %v132
  %v526 = vunpack.c.h.b16 %v132
  %v527 = vunpack.c.l.b16 %v133
  %v528 = vunpack.c.h.b16 %v133
  %v529 = vunpack.c.l.b16 %v134
  %v530 = vunpack.c.h.b16 %v134
  %v531 = vunpack.c.l.b16 %v135
  %v532 = vunpack.c.h.b16 %v135
  %v533 = vunpack.c.l.b16 %v136
  %v534 = vunpack.c.h.b16 %v136
  %v535 = vunpack.c.l.b16 %v137
  %v536 = vunpack.c.h.b16 %v137
  %v537 = vunpack.c.l.b16 %v138
  %v538 = vunpack.c.h.b16 %v138
  %v539 = vunpack.c.l.b16 %v139
  %v540 = vunpack.c.h.b16 %v139
  %v541 = vunpack.c.l.b16 %v140
  %v542 = vunpack.c.h.b16 %v140
  %v543 = vunpack.c.l.b16 %v141
  %v544 = vunpack.c.h.b16 %v141
  %v545 = vunpack.c.l.b16 %v142
  %v546 = vunpack.c.h.b16 %v142
  %v547 = vpack.c.b16 %v295, %v291
  %v548 = vpack.c.b16 %v296, %v292
  %v549 = vpack.c.b16 %v297, %v293
  %v550 = vpack.c.b16 %v298, %v294
  %v551 = vpack.c.b16 %v303, %v299
  %v552 = vpack.c.b16 %v304, %v300
  %v553 = vpack.c.b16 %v305, %v301
  %v554 = vpack.c.b16 %v306, %v302
  %v555 = vpack.c.b16 %v311, %v307
  %v556 = vpack.c.b16 %v312, %v308
  %v557 = vpack.c.b16 %v313, %v309
  %v558 = vpack.c.b16 %v314, %v310
  %v559 = vpack.c.b16 %v319, %v315
  %v560 = vpack.c.b16 %v320, %v316
  %v561 = vpack.c.b16 %v321, %v317
  %v562 = vpack.c.b16 %v322, %v318
  %v563 = vpack.c.b16 %v327, %v323
  %v564 = vpack.c.b16 %v328, %v324
  %v565 = vpack.c.b16 %v329, %v325
  %v566 = vpack.c.b16 %v330, %v326
  %v567 = vpack.c.b16 %v335, %v331
  %v568 = vpack.c.b16 %v336, %v332
  %v569 = vpack.c.b16 %v337, %v333
  %v570 = vpack.c.b16 %v338, %v334
  %v571 = vpack.c.b16 %v343, %v339
  %v572 = vpack.c.b16 %v344, %v340
  %v573 = vpack.c.b16 %v345, %v341
  %v574 = vpack.c.b16 %v346, %v342
  %v575 = vpack.c.b16 %v351, %v347
  %v576 = vpack.c.b16 %v352, %v348
  %v577 = vpack.c.b16 %v353, %v349
  %v578 = vpack.c.b16 %v354, %v350
  %v579 = vpack.c.b16 %v359, %v355
  %v580 = vpack.c.b16 %v360, %v356
  %v581 = vpack.c.b16 %v361, %v357
  %v582 = vpack.c.b16 %v362, %v358
  %v583 = vpack.c.b16 %v367, %v363
  %v584 = vpack.c.b16 %v368, %v364
  %v585 = vpack.c.b16 %v369, %v365
  %v586 = vpack.c.b16 %v370, %v366
  %v587 = vpack.c.b16 %v375, %v371
  %v588 = vpack.c.b16 %v376, %v372
  %v589 = vpack.c.b16 %v377, %v373
  %v590 = vpack.c.b16 %v378, %v374
  %v591 = vpack.c.b16 %v383, %v379
  %v592 = vpack.c.b16 %v384, %v380
  %v593 = vpack.c.b16 %v385, %v381
  %v594 = vpack.c.b16 %v386, %v382
  %v595 = vpack.c.b16 %v391, %v387
  %v596 = vpack.c.b16 %v392, %v388
  %v597 = vpack.c.b16 %v393, %v389
  %v598 = vpack.c.b16 %v394, %v390
  %v599 = vpack.c.b16 %v399, %v395
  %v600 = vpack.c.b16 %v400, %v396
  %v601 = vpack.c.b16 %v401, %v397
  %v602 = vpack.c.b16 %v402, %v398
  %v603 = vpack.c.b16 %v407, %v403
  %v604 = vpack.c.b16 %v408, %v404
  %v605 = vpack.c.b16 %v409, %v405
  %v606 = vpack.c.b16 %v410, %v406
  %v607 = vpack.c.b16 %v415, %v411
  %v608 = vpack.c.b16 %v416, %v412
  %v609 = vpack.c.b16 %v417, %v413
  %v610 = vpack.c.b16 %v418, %v414
  %v611 = vpack.c.b16 %v423, %v419
  %v612 = vpack.c.b16 %v424, %v420
  %v613 = vpack.c.b16 %v425, %v421
  %v614 = vpack.c.b16 %v426, %v422
  %v615 = vpack.c.b16 %v431, %v427
  %v616 = vpack.c.b16 %v432, %v428
  %v617 = vpack.c.b16 %v433, %v429
  %v618 = vpack.c.b16 %v434, %v430
  %v619 = vpack.c.b16 %v439, %v435
  %v620 = vpack.c.b16 %v440, %v436
  %v621 = vpack.c.b16 %v441, %v437
  %v622 = vpack.c.b16 %v442, %v438
  %v623 = vpack.c.b16 %v447, %v443
  %v624 = vpack.c.b16 %v448, %v444
  %v625 = vpack.c.b16 %v449, %v445
  %v626 = vpack.c.b16 %v450, %v446
  %v627 = vpack.c.b16 %v455, %v451
  %v628 = vpack.c.b16 %v456, %v452
  %v629 = vpack.c.b16 %v457, %v453
  %v630 = vpack.c.b16 %v458, %v454
  %v631 = vpack.c.b16 %v463, %v459
  %v632 = vpack.c.b16 %v464, %v460
  %v633 = vpack.c.b16 %v465, %v461
  %v634 = vpack.c.b16 %v466, %v462
  %v635 = vpack.c.b16 %v471, %v467
  %v636 = vpack.c.b16 %v472, %v468
  %v637 = vpack.c.b16 %v473, %v469
  %v638 = vpack.c.b16 %v474, %v470
  %v639 = vpack.c.b16 %v479, %v475
  %v640 = vpack.c.b16 %v480, %v476
  %v641 = vpack.c.b16 %v481, %v477
  %v642 = vpack.c.b16 %v482, %v478
  %v643 = vpack.c.b16 %v487, %v483
  %v644 = vpack.c.b16 %v488, %v484
  %v645 = vpack.c.b16 %v489, %v485
  %v646 = vpack.c.b16 %v490, %v486
  %v647 = vpack.c.b16 %v495, %v491
  %v648 = vpack.c.b16 %v496, %v492
  %v649 = vpack.c.b16 %v497, %v493
  %v650 = vpack.c.b16 %v498, %v494
  %v651 = vpack.c.b16 %v503, %v499
  %v652 = vpack.c.b16 %v504, %v500
  %v653 = vpack.c.b16 %v505, %v501
  %v654 = vpack.c.b16 %v506, %v502
  %v655 = vpack.c.b16 %v511, %v507
  %v656 = vpack.c.b16 %v512, %v508
  %v657 = vpack.c.b16 %v513, %v509
  %v658 = vpack.c.b16 %v514, %v510
  %v659 = vpack.c.b16 %v519, %v515
  %v660 = vpack.c.b16 %v520, %v516
  %v661 = vpack.c.b16 %v521, %v517
  %v662 = vpack.c.b16 %v522, %v518
  %v663 = vpack.c.b16 %v527, %v523
  %v664 = vpack.c.b16 %v528, %v524
  %v665 = vpack.c.b16 %v529, %v525
  %v666 = vpack.c.b16 %v530, %v526
  %v667 = vpack.c.b16 %v535, %v531
  %v668 = vpack.c.b16 %v536, %v532
  %v669 = vpack.c.b16 %v537, %v533
  %v670 = vpack.c.b16 %v538, %v534
  %v671 = vpack.c.b16 %v543, %v539
  %v672 = vpack.c.b16 %v544, %v540
  %v673 = vpack.c.b16 %v545, %v541
  %v674 = vpack.c.b16 %v546, %v542
  %803 = vmatprep.subr.bf16.mxu0 %v576
  %804 = vmatpush1.bf16.msra.mxu0 %v575
  %805 = vmatprep.subr.bf16.mxu0 %v572
  %806 = vmatpush1.bf16.msra.mxu0 %v571
  %807 = vmatprep.subr.bf16.mxu0 %v568
  %808 = vmatpush1.bf16.msra.mxu0 %v567
  %809 = vmatprep.subr.bf16.mxu0 %v564
  %810 = vmatpush1.bf16.msra.mxu0 %v563
  %811 = vmatprep.subr.bf16.mxu0 %v560
  %812 = vmatpush1.bf16.msra.mxu0 %v559
  %813 = vmatprep.subr.bf16.mxu0 %v556
  %814 = vmatpush1.bf16.msra.mxu0 %v555
  %815 = vmatprep.subr.bf16.mxu0 %v552
  %816 = vmatpush1.bf16.msra.mxu0 %v551
  %817 = vmatprep.subr.bf16.mxu0 %v548
  %818 = vmatpush1.bf16.msra.mxu0 %v547
  %819 = vmatprep.subr.bf16.mxu0 %v608
  %820 = vmatpush2.bf16.msra.mxu0 %v607
  %821 = vmatprep.subr.bf16.mxu0 %v604
  %822 = vmatpush2.bf16.msra.mxu0 %v603
  %823 = vmatprep.subr.bf16.mxu0 %v600
  %824 = vmatpush2.bf16.msra.mxu0 %v599
  %825 = vmatprep.subr.bf16.mxu0 %v596
  %826 = vmatpush2.bf16.msra.mxu0 %v595
  %827 = vmatprep.subr.bf16.mxu0 %v592
  %828 = vmatpush2.bf16.msra.mxu0 %v591
  %829 = vmatprep.subr.bf16.mxu0 %v588
  %830 = vmatpush2.bf16.msra.mxu0 %v587
  %831 = vmatprep.subr.bf16.mxu0 %v584
  %832 = vmatpush2.bf16.msra.mxu0 %v583
  %833 = vmatprep.subr.bf16.mxu0 %v580
  %834 = vmatpush2.bf16.msra.mxu0 %v579
  %835 = vmatprep.mubr.bf16.mxu0 %v156
  %836 = vmatmul.mubr.bf16.gmra.mxu0 %v155
  %v837 = vpop.f32.mrf.mxu0
  %v838 = vadd.f32 0.0, %v837
  %v839 = vpop.f32.mrf.mxu0
  %v840 = vadd.f32 0.0, %v839
  %v841 = vpop.f32.mrf.mxu0
  %v842 = vadd.f32 0.0, %v841
  %v843 = vpop.f32.mrf.mxu0
  %v844 = vadd.f32 0.0, %v843
  %845 = vdwg.mxu0
  %846 = vmatprep.subr.bf16.mxu0 %v640
  %847 = vmatpush1.bf16.msra.mxu0 %v639
  %848 = vmatprep.subr.bf16.mxu0 %v636
  %849 = vmatpush1.bf16.msra.mxu0 %v635
  %850 = vmatprep.subr.bf16.mxu0 %v632
  %851 = vmatpush1.bf16.msra.mxu0 %v631
  %852 = vmatprep.subr.bf16.mxu0 %v628
  %853 = vmatpush1.bf16.msra.mxu0 %v627
  %854 = vmatprep.subr.bf16.mxu0 %v624
  %855 = vmatpush1.bf16.msra.mxu0 %v623
  %856 = vmatprep.subr.bf16.mxu0 %v620
  %857 = vmatpush1.bf16.msra.mxu0 %v619
  %858 = vmatprep.subr.bf16.mxu0 %v616
  %859 = vmatpush1.bf16.msra.mxu0 %v615
  %860 = vmatprep.subr.bf16.mxu0 %v612
  %861 = vmatpush1.bf16.msra.mxu0 %v611
  %862 = vmatprep.subr.bf16.mxu0 %v672
  %863 = vmatpush2.bf16.msra.mxu0 %v671
  %864 = vmatprep.subr.bf16.mxu0 %v668
  %865 = vmatpush2.bf16.msra.mxu0 %v667
  %866 = vmatprep.subr.bf16.mxu0 %v664
  %867 = vmatpush2.bf16.msra.mxu0 %v663
  %868 = vmatprep.subr.bf16.mxu0 %v660
  %869 = vmatpush2.bf16.msra.mxu0 %v659
  %870 = vmatprep.subr.bf16.mxu0 %v656
  %871 = vmatpush2.bf16.msra.mxu0 %v655
  %872 = vmatprep.subr.bf16.mxu0 %v652
  %873 = vmatpush2.bf16.msra.mxu0 %v651
  %874 = vmatprep.subr.bf16.mxu0 %v648
  %875 = vmatpush2.bf16.msra.mxu0 %v647
  %876 = vmatprep.subr.bf16.mxu0 %v644
  %877 = vmatpush2.bf16.msra.mxu0 %v643
  %878 = vmatprep.mubr.bf16.mxu0 %v158
  %879 = vmatmul.mubr.bf16.gmra.mxu0 %v157
  %v880 = vpop.f32.mrf.mxu0
  %v881 = vadd.f32 %v838, %v880
  %v882 = vpop.f32.mrf.mxu0
  %v883 = vadd.f32 %v840, %v882
  %v884 = vpop.f32.mrf.mxu0
  %v885 = vadd.f32 %v842, %v884
  %v886 = vpop.f32.mrf.mxu0
  %v887 = vadd.f32 %v844, %v886
  %888 = vdwg.mxu0
  %889 = vmatprep.subr.bf16.mxu0 %v578
  %890 = vmatpush1.bf16.msra.mxu0 %v577
  %891 = vmatprep.subr.bf16.mxu0 %v574
  %892 = vmatpush1.bf16.msra.mxu0 %v573
  %893 = vmatprep.subr.bf16.mxu0 %v570
  %894 = vmatpush1.bf16.msra.mxu0 %v569
  %895 = vmatprep.subr.bf16.mxu0 %v566
  %896 = vmatpush1.bf16.msra.mxu0 %v565
  %897 = vmatprep.subr.bf16.mxu0 %v562
  %898 = vmatpush1.bf16.msra.mxu0 %v561
  %899 = vmatprep.subr.bf16.mxu0 %v558
  %900 = vmatpush1.bf16.msra.mxu0 %v557
  %901 = vmatprep.subr.bf16.mxu0 %v554
  %902 = vmatpush1.bf16.msra.mxu0 %v553
  %903 = vmatprep.subr.bf16.mxu0 %v550
  %904 = vmatpush1.bf16.msra.mxu0 %v549
  %905 = vmatprep.subr.bf16.mxu0 %v610
  %906 = vmatpush2.bf16.msra.mxu0 %v609
  %907 = vmatprep.subr.bf16.mxu0 %v606
  %908 = vmatpush2.bf16.msra.mxu0 %v605
  %909 = vmatprep.subr.bf16.mxu0 %v602
  %910 = vmatpush2.bf16.msra.mxu0 %v601
  %911 = vmatprep.subr.bf16.mxu0 %v598
  %912 = vmatpush2.bf16.msra.mxu0 %v597
  %913 = vmatprep.subr.bf16.mxu0 %v594
  %914 = vmatpush2.bf16.msra.mxu0 %v593
  %915 = vmatprep.subr.bf16.mxu0 %v590
  %916 = vmatpush2.bf16.msra.mxu0 %v589
  %917 = vmatprep.subr.bf16.mxu0 %v586
  %918 = vmatpush2.bf16.msra.mxu0 %v585
  %919 = vmatprep.subr.bf16.mxu0 %v582
  %920 = vmatpush2.bf16.msra.mxu0 %v581
  %921 = vmatprep.mubr.bf16.mxu0 %v156
  %922 = vmatmul.mubr.bf16.gmra.mxu0 %v155
  %v923 = vpop.f32.mrf.mxu0
  %v924 = vadd.f32 0.0, %v923
  %v925 = vpop.f32.mrf.mxu0
  %v926 = vadd.f32 0.0, %v925
  %v927 = vpop.f32.mrf.mxu0
  %v928 = vadd.f32 0.0, %v927
  %v929 = vpop.f32.mrf.mxu0
  %v930 = vadd.f32 0.0, %v929
  %931 = vdwg.mxu0
  %932 = vmatprep.subr.bf16.mxu0 %v642
  %933 = vmatpush1.bf16.msra.mxu0 %v641
  %934 = vmatprep.subr.bf16.mxu0 %v638
  %935 = vmatpush1.bf16.msra.mxu0 %v637
  %936 = vmatprep.subr.bf16.mxu0 %v634
  %937 = vmatpush1.bf16.msra.mxu0 %v633
  %938 = vmatprep.subr.bf16.mxu0 %v630
  %939 = vmatpush1.bf16.msra.mxu0 %v629
  %940 = vmatprep.subr.bf16.mxu0 %v626
  %941 = vmatpush1.bf16.msra.mxu0 %v625
  %942 = vmatprep.subr.bf16.mxu0 %v622
  %943 = vmatpush1.bf16.msra.mxu0 %v621
  %944 = vmatprep.subr.bf16.mxu0 %v618
  %945 = vmatpush1.bf16.msra.mxu0 %v617
  %946 = vmatprep.subr.bf16.mxu0 %v614
  %947 = vmatpush1.bf16.msra.mxu0 %v613
  %948 = vmatprep.subr.bf16.mxu0 %v674
  %949 = vmatpush2.bf16.msra.mxu0 %v673
  %950 = vmatprep.subr.bf16.mxu0 %v670
  %951 = vmatpush2.bf16.msra.mxu0 %v669
  %952 = vmatprep.subr.bf16.mxu0 %v666
  %953 = vmatpush2.bf16.msra.mxu0 %v665
  %954 = vmatprep.subr.bf16.mxu0 %v662
  %955 = vmatpush2.bf16.msra.mxu0 %v661
  %956 = vmatprep.subr.bf16.mxu0 %v658
  %957 = vmatpush2.bf16.msra.mxu0 %v657
  %958 = vmatprep.subr.bf16.mxu0 %v654
  %959 = vmatpush2.bf16.msra.mxu0 %v653
  %960 = vmatprep.subr.bf16.mxu0 %v650
  %961 = vmatpush2.bf16.msra.mxu0 %v649
  %962 = vmatprep.subr.bf16.mxu0 %v646
  %963 = vmatpush2.bf16.msra.mxu0 %v645
  %964 = vmatprep.mubr.bf16.mxu0 %v158
  %965 = vmatmul.mubr.bf16.gmra.mxu0 %v157
  %v966 = vpop.f32.mrf.mxu0
  %v967 = vadd.f32 %v924, %v966
  %v968 = vpop.f32.mrf.mxu0
  %v969 = vadd.f32 %v926, %v968
  %v970 = vpop.f32.mrf.mxu0
  %v971 = vadd.f32 %v928, %v970
  %v972 = vpop.f32.mrf.mxu0
  %v973 = vadd.f32 %v930, %v972
  %974 = vdwg.mxu0
  %v975 = vadd.f32 %v881, %v883
  %v976 = vadd.f32 %v975, %v967
  %v977 = vadd.f32 %v976, %v969
  %978 = vadd.xlane.f32.xlu0 %v977
  %v979 = vpop.xlane.xlu0 %978
  %v980 = vadd.f32 %v885, %v887
  %v981 = vadd.f32 %v980, %v971
  %v982 = vadd.f32 %v981, %v973
  %983 = vadd.xlane.f32.xlu0 %v982
  %v984 = vpop.xlane.xlu0 %983
  %v985 = vrcp.pop 512.0
  %v986 = vmul.f32 %v979, %v985
  %v987 = vmul.f32 %v984, %v985
  %v988 = vsub.f32 %v881, %v986
  %v989 = vsub.f32 %v883, %v986
  %v990 = vsub.f32 %v967, %v986
  %v991 = vsub.f32 %v969, %v986
  %v992 = vsub.f32 %v885, %v987
  %v993 = vsub.f32 %v887, %v987
  %v994 = vsub.f32 %v971, %v987
  %v995 = vsub.f32 %v973, %v987
  %v996 = vmul.f32 %v988, %v988
  %v997 = vmul.f32 %v989, %v989
  %v998 = vmul.f32 %v990, %v990
  %v999 = vmul.f32 %v991, %v991
  %v1000 = vmul.f32 %v992, %v992
  %v1001 = vmul.f32 %v993, %v993
  %v1002 = vmul.f32 %v994, %v994
  %v1003 = vmul.f32 %v995, %v995
  %v1004 = vadd.f32 %v996, %v997
  %v1005 = vadd.f32 %v1004, %v998
  %v1006 = vadd.f32 %v1005, %v999
  %1007 = vadd.xlane.f32.xlu0 %v1006
  %v1008 = vpop.xlane.xlu0 %1007
  %v1009 = vadd.f32 %v1000, %v1001
  %v1010 = vadd.f32 %v1009, %v1002
  %v1011 = vadd.f32 %v1010, %v1003
  %1012 = vadd.xlane.f32.xlu0 %v1011
  %v1013 = vpop.xlane.xlu0 %1012
  %v1014 = vmul.f32 %v1008, %v985
  %v1015 = vmul.f32 %v1013, %v985
  %v1016 = vadd.f32 %v1014, 1e-05
  %v1017 = vadd.f32 %v1015, 1e-05
  %v1018 = vrsqrt.pop %v1016
  %v1019 = vrsqrt.pop %v1017
  %v1020 = vmul.f32 %v988, %v1018
  %v1021 = vmul.f32 %v989, %v1018
  %v1022 = vmul.f32 %v990, %v1018
  %v1023 = vmul.f32 %v991, %v1018
  %v1024 = vmul.f32 %v992, %v1019
  %v1025 = vmul.f32 %v993, %v1019
  %v1026 = vmul.f32 %v994, %v1019
  %v1027 = vmul.f32 %v995, %v1019
  %vm1028 = vcmp.ge.f32.partialorder %v1020, 0.0
  %vm1029 = vcmp.ge.f32.partialorder %v1021, 0.0
  %vm1030 = vcmp.ge.f32.partialorder %v1022, 0.0
  %vm1031 = vcmp.ge.f32.partialorder %v1023, 0.0
  %vm1032 = vcmp.ge.f32.partialorder %v1024, 0.0
  %vm1033 = vcmp.ge.f32.partialorder %v1025, 0.0
  %vm1034 = vcmp.ge.f32.partialorder %v1026, 0.0
  %vm1035 = vcmp.ge.f32.partialorder %v1027, 0.0
  %v1036 = vmul.f32 %v1020, 0.2
  %v1037 = vmul.f32 %v1021, 0.2
  %v1038 = vmul.f32 %v1022, 0.2
  %v1039 = vmul.f32 %v1023, 0.2
  %v1040 = vmul.f32 %v1024, 0.2
  %v1041 = vmul.f32 %v1025, 0.2
  %v1042 = vmul.f32 %v1026, 0.2
  %v1043 = vmul.f32 %v1027, 0.2
  %v1044 = vsel %vm1028, %v1020, %v1036
  %v1045 = vsel %vm1029, %v1021, %v1037
  %v1046 = vsel %vm1030, %v1022, %v1038
  %v1047 = vsel %vm1031, %v1023, %v1039
  %v1048 = vsel %vm1032, %v1024, %v1040
  %v1049 = vsel %vm1033, %v1025, %v1041
  %v1050 = vsel %vm1034, %v1026, %v1042
  %v1051 = vsel %vm1035, %v1027, %v1043
  %1052 = vst [vmem:[%s2] sm:$0xff] %v1044
  %1053 = vst [vmem:[%s2 + $0x8] sm:$0xff] %v1045
  %1054 = vst [vmem:[%s2 + $0x10] sm:$0xff] %v1046
  %1055 = vst [vmem:[%s2 + $0x18] sm:$0xff] %v1047
  %1056 = vst [vmem:[%s2 + $0x20] sm:$0xff] %v1048
  %1057 = vst [vmem:[%s2 + $0x28] sm:$0xff] %v1049
  %1058 = vst [vmem:[%s2 + $0x30] sm:$0xff] %v1050
  %1059 = vst [vmem:[%s2 + $0x38] sm:$0xff] %v1051
  // Predicated region
  $region10: #{generator_forward.6} parent=0 // pred_check
    _
  $region11: #{generator_forward.6} parent=0 // pred_check_branch
    %1061 = sbr.rel (0) target = $region13
  $region12: #{generator_forward.6} parent=0 // pred_region
    _
  $region13: #{generator_forward.6} parent=0 // pred_fallthru
    _
  // Predicated region
  $region14: #{generator_forward.6} parent=0 // pred_check
    _
  $region15: #{generator_forward.6} parent=0 // pred_check_branch
    %1063 = sbr.rel (0) target = $region17
  $region16: #{generator_forward.6} parent=0 // pred_region
    _
  $region17: #{generator_forward.6} parent=0 // pred_fallthru
    _

// kernel: generator_forward.7
$region0: #{generator_forward.7}
  #allocation0 [shape = 'u32[]', space=smem, size = 0x4, offset = 0x4, fixed_abs, tag = 'smem constant byte address 0x4 - core index']
  #allocation1 [shape = 'u32[144,128]{1,0:T(1,128)}', space=vmem, size = 0x12000, scoped, tag = 'internal scratch']
  %s0 = inlined_call_operand.vmem [shape: bf16[8,256], index: 0, kind: input, shape index: {}]
  %s1 = inlined_call_operand.vmem [shape: bf16[256,2048], index: 1, kind: input, shape index: {}]
  %s2 = inlined_call_operand.vmem [shape: f32[8,2048], index: 2, kind: output, shape index: {}]
  %s3 = sld [smem:[#allocation0]]
  $region18: #{generator_forward.7} parent=0
    _
  %s5 = ssub.s32 1, %s3
  %s6 = scalar_select 0, %s5, %s3
  // Predicated region
  $region2: #{generator_forward.7} parent=0 // pred_check
    _
  $region3: #{generator_forward.7} parent=0 // pred_check_branch
    %8 = sbr.rel (0) target = $region5
  $region4: #{generator_forward.7} parent=0 // pred_region
    _
  $region5: #{generator_forward.7} parent=0 // pred_fallthru
    _
  // Predicated region
  $region6: #{generator_forward.7} parent=0 // pred_check
    _
  $region7: #{generator_forward.7} parent=0 // pred_check_branch
    %10 = sbr.rel (0) target = $region9
  $region8: #{generator_forward.7} parent=0 // pred_region
    _
  $region9: #{generator_forward.7} parent=0 // pred_fallthru
    _
  %v11 = vld [vmem:[%s0] sm:$0xff]
  %v12 = vld [vmem:[%s1] sm:$0xff]
  %v13 = vld [vmem:[%s1 + $0x8] sm:$0xff]
  %v14 = vld [vmem:[%s1 + $0x10] sm:$0xff]
  %v15 = vld [vmem:[%s1 + $0x18] sm:$0xff]
  %v16 = vld [vmem:[%s1 + $0x20] sm:$0xff]
  %v17 = vld [vmem:[%s1 + $0x28] sm:$0xff]
  %v18 = vld [vmem:[%s1 + $0x30] sm:$0xff]
  %v19 = vld [vmem:[%s1 + $0x38] sm:$0xff]
  %v20 = vld [vmem:[%s1 + $0x40] sm:$0xff]
  %v21 = vld [vmem:[%s1 + $0x48] sm:$0xff]
  %v22 = vld [vmem:[%s1 + $0x50] sm:$0xff]
  %v23 = vld [vmem:[%s1 + $0x58] sm:$0xff]
  %v24 = vld [vmem:[%s1 + $0x60] sm:$0xff]
  %v25 = vld [vmem:[%s1 + $0x68] sm:$0xff]
  %v26 = vld [vmem:[%s1 + $0x70] sm:$0xff]
  %v27 = vld [vmem:[%s1 + $0x78] sm:$0xff]
  %v28 = vld [vmem:[%s1 + $0x80] sm:$0xff]
  %v29 = vld [vmem:[%s1 + $0x88] sm:$0xff]
  %v30 = vld [vmem:[%s1 + $0x90] sm:$0xff]
  %v31 = vld [vmem:[%s1 + $0x98] sm:$0xff]
  %v32 = vld [vmem:[%s1 + $0xa0] sm:$0xff]
  %v33 = vld [vmem:[%s1 + $0xa8] sm:$0xff]
  %v34 = vld [vmem:[%s1 + $0xb0] sm:$0xff]
  %v35 = vld [vmem:[%s1 + $0xb8] sm:$0xff]
  %v36 = vld [vmem:[%s1 + $0xc0] sm:$0xff]
  %v37 = vld [vmem:[%s1 + $0xc8] sm:$0xff]
  %v38 = vld [vmem:[%s1 + $0xd0] sm:$0xff]
  %v39 = vld [vmem:[%s1 + $0xd8] sm:$0xff]
  %v40 = vld [vmem:[%s1 + $0xe0] sm:$0xff]
  %v41 = vld [vmem:[%s1 + $0xe8] sm:$0xff]
  %v42 = vld [vmem:[%s1 + $0xf0] sm:$0xff]
  %v43 = vld [vmem:[%s1 + $0xf8] sm:$0xff]
  %v44 = vld [vmem:[%s1 + $0x100] sm:$0xff]
  %v45 = vld [vmem:[%s1 + $0x108] sm:$0xff]
  %v46 = vld [vmem:[%s1 + $0x110] sm:$0xff]
  %v47 = vld [vmem:[%s1 + $0x118] sm:$0xff]
  %v48 = vld [vmem:[%s1 + $0x120] sm:$0xff]
  %v49 = vld [vmem:[%s1 + $0x128] sm:$0xff]
  %v50 = vld [vmem:[%s1 + $0x130] sm:$0xff]
  %v51 = vld [vmem:[%s1 + $0x138] sm:$0xff]
  %v52 = vld [vmem:[%s1 + $0x140] sm:$0xff]
  %v53 = vld [vmem:[%s1 + $0x148] sm:$0xff]
  %v54 = vld [vmem:[%s1 + $0x150] sm:$0xff]
  %v55 = vld [vmem:[%s1 + $0x158] sm:$0xff]
  %v56 = vld [vmem:[%s1 + $0x160] sm:$0xff]
  %v57 = vld [vmem:[%s1 + $0x168] sm:$0xff]
  %v58 = vld [vmem:[%s1 + $0x170] sm:$0xff]
  %v59 = vld [vmem:[%s1 + $0x178] sm:$0xff]
  %v60 = vld [vmem:[%s1 + $0x180] sm:$0xff]
  %v61 = vld [vmem:[%s1 + $0x188] sm:$0xff]
  %v62 = vld [vmem:[%s1 + $0x190] sm:$0xff]
  %v63 = vld [vmem:[%s1 + $0x198] sm:$0xff]
  %v64 = vld [vmem:[%s1 + $0x1a0] sm:$0xff]
  %v65 = vld [vmem:[%s1 + $0x1a8] sm:$0xff]
  %v66 = vld [vmem:[%s1 + $0x1b0] sm:$0xff]
  %v67 = vld [vmem:[%s1 + $0x1b8] sm:$0xff]
  %v68 = vld [vmem:[%s1 + $0x1c0] sm:$0xff]
  %v69 = vld [vmem:[%s1 + $0x1c8] sm:$0xff]
  %v70 = vld [vmem:[%s1 + $0x1d0] sm:$0xff]
  %v71 = vld [vmem:[%s1 + $0x1d8] sm:$0xff]
  %v72 = vld [vmem:[%s1 + $0x1e0] sm:$0xff]
  %v73 = vld [vmem:[%s1 + $0x1e8] sm:$0xff]
  %v74 = vld [vmem:[%s1 + $0x1f0] sm:$0xff]
  %v75 = vld [vmem:[%s1 + $0x1f8] sm:$0xff]
  %v76 = vld [vmem:[%s1 + $0x200] sm:$0xff]
  %v77 = vld [vmem:[%s1 + $0x208] sm:$0xff]
  %v78 = vld [vmem:[%s1 + $0x210] sm:$0xff]
  %v79 = vld [vmem:[%s1 + $0x218] sm:$0xff]
  %v80 = vld [vmem:[%s1 + $0x220] sm:$0xff]
  %v81 = vld [vmem:[%s1 + $0x228] sm:$0xff]
  %v82 = vld [vmem:[%s1 + $0x230] sm:$0xff]
  %v83 = vld [vmem:[%s1 + $0x238] sm:$0xff]
  %v84 = vld [vmem:[%s1 + $0x240] sm:$0xff]
  %v85 = vld [vmem:[%s1 + $0x248] sm:$0xff]
  %v86 = vld [vmem:[%s1 + $0x250] sm:$0xff]
  %v87 = vld [vmem:[%s1 + $0x258] sm:$0xff]
  %v88 = vld [vmem:[%s1 + $0x260] sm:$0xff]
  %v89 = vld [vmem:[%s1 + $0x268] sm:$0xff]
  %v90 = vld [vmem:[%s1 + $0x270] sm:$0xff]
  %v91 = vld [vmem:[%s1 + $0x278] sm:$0xff]
  %v92 = vld [vmem:[%s1 + $0x280] sm:$0xff]
  %v93 = vld [vmem:[%s1 + $0x288] sm:$0xff]
  %v94 = vld [vmem:[%s1 + $0x290] sm:$0xff]
  %v95 = vld [vmem:[%s1 + $0x298] sm:$0xff]
  %v96 = vld [vmem:[%s1 + $0x2a0] sm:$0xff]
  %v97 = vld [vmem:[%s1 + $0x2a8] sm:$0xff]
  %v98 = vld [vmem:[%s1 + $0x2b0] sm:$0xff]
  %v99 = vld [vmem:[%s1 + $0x2b8] sm:$0xff]
  %v100 = vld [vmem:[%s1 + $0x2c0] sm:$0xff]
  %v101 = vld [vmem:[%s1 + $0x2c8] sm:$0xff]
  %v102 = vld [vmem:[%s1 + $0x2d0] sm:$0xff]
  %v103 = vld [vmem:[%s1 + $0x2d8] sm:$0xff]
  %v104 = vld [vmem:[%s1 + $0x2e0] sm:$0xff]
  %v105 = vld [vmem:[%s1 + $0x2e8] sm:$0xff]
  %v106 = vld [vmem:[%s1 + $0x2f0] sm:$0xff]
  %v107 = vld [vmem:[%s1 + $0x2f8] sm:$0xff]
  %v108 = vld [vmem:[%s1 + $0x300] sm:$0xff]
  %v109 = vld [vmem:[%s1 + $0x308] sm:$0xff]
  %v110 = vld [vmem:[%s1 + $0x310] sm:$0xff]
  %v111 = vld [vmem:[%s1 + $0x318] sm:$0xff]
  %v112 = vld [vmem:[%s1 + $0x320] sm:$0xff]
  %v113 = vld [vmem:[%s1 + $0x328] sm:$0xff]
  %v114 = vld [vmem:[%s1 + $0x330] sm:$0xff]
  %v115 = vld [vmem:[%s1 + $0x338] sm:$0xff]
  %v116 = vld [vmem:[%s1 + $0x340] sm:$0xff]
  %v117 = vld [vmem:[%s1 + $0x348] sm:$0xff]
  %v118 = vld [vmem:[%s1 + $0x350] sm:$0xff]
  %v119 = vld [vmem:[%s1 + $0x358] sm:$0xff]
  %v120 = vld [vmem:[%s1 + $0x360] sm:$0xff]
  %v121 = vld [vmem:[%s1 + $0x368] sm:$0xff]
  %v122 = vld [vmem:[%s1 + $0x370] sm:$0xff]
  %v123 = vld [vmem:[%s1 + $0x378] sm:$0xff]
  %v124 = vld [vmem:[%s1 + $0x380] sm:$0xff]
  %v125 = vld [vmem:[%s1 + $0x388] sm:$0xff]
  %v126 = vld [vmem:[%s1 + $0x390] sm:$0xff]
  %v127 = vld [vmem:[%s1 + $0x398] sm:$0xff]
  %v128 = vld [vmem:[%s1 + $0x3a0] sm:$0xff]
  %v129 = vld [vmem:[%s1 + $0x3a8] sm:$0xff]
  %v130 = vld [vmem:[%s1 + $0x3b0] sm:$0xff]
  %v131 = vld [vmem:[%s1 + $0x3b8] sm:$0xff]
  %v132 = vld [vmem:[%s1 + $0x3c0] sm:$0xff]
  %v133 = vld [vmem:[%s1 + $0x3c8] sm:$0xff]
  %v134 = vld [vmem:[%s1 + $0x3d0] sm:$0xff]
  %v135 = vld [vmem:[%s1 + $0x3d8] sm:$0xff]
  %v136 = vld [vmem:[%s1 + $0x3e0] sm:$0xff]
  %v137 = vld [vmem:[%s1 + $0x3e8] sm:$0xff]
  %v138 = vld [vmem:[%s1 + $0x3f0] sm:$0xff]
  %v139 = vld [vmem:[%s1 + $0x3f8] sm:$0xff]
  %v140 = vld [vmem:[%s1 + $0x400] sm:$0xff]
  %v141 = vld [vmem:[%s1 + $0x408] sm:$0xff]
  %v142 = vld [vmem:[%s1 + $0x410] sm:$0xff]
  %v143 = vld [vmem:[%s1 + $0x418] sm:$0xff]
  %v144 = vld [vmem:[%s1 + $0x420] sm:$0xff]
  %v145 = vld [vmem:[%s1 + $0x428] sm:$0xff]
  %v146 = vld [vmem:[%s1 + $0x430] sm:$0xff]
  %v147 = vld [vmem:[%s1 + $0x438] sm:$0xff]
  %v148 = vld [vmem:[%s1 + $0x440] sm:$0xff]
  %v149 = vld [vmem:[%s1 + $0x448] sm:$0xff]
  %v150 = vld [vmem:[%s1 + $0x450] sm:$0xff]
  %v151 = vld [vmem:[%s1 + $0x458] sm:$0xff]
  %v152 = vld [vmem:[%s1 + $0x460] sm:$0xff]
  %v153 = vld [vmem:[%s1 + $0x468] sm:$0xff]
  %v154 = vld [vmem:[%s1 + $0x470] sm:$0xff]
  %v155 = vld [vmem:[%s1 + $0x478] sm:$0xff]
  %v156 = vld [vmem:[%s1 + $0x480] sm:$0xff]
  %v157 = vld [vmem:[%s1 + $0x488] sm:$0xff]
  %v158 = vld [vmem:[%s1 + $0x490] sm:$0xff]
  %v159 = vld [vmem:[%s1 + $0x498] sm:$0xff]
  %v160 = vld [vmem:[%s1 + $0x4a0] sm:$0xff]
  %v161 = vld [vmem:[%s1 + $0x4a8] sm:$0xff]
  %v162 = vld [vmem:[%s1 + $0x4b0] sm:$0xff]
  %v163 = vld [vmem:[%s1 + $0x4b8] sm:$0xff]
  %v164 = vld [vmem:[%s1 + $0x4c0] sm:$0xff]
  %v165 = vld [vmem:[%s1 + $0x4c8] sm:$0xff]
  %v166 = vld [vmem:[%s1 + $0x4d0] sm:$0xff]
  %v167 = vld [vmem:[%s1 + $0x4d8] sm:$0xff]
  %v168 = vld [vmem:[%s1 + $0x4e0] sm:$0xff]
  %v169 = vld [vmem:[%s1 + $0x4e8] sm:$0xff]
  %v170 = vld [vmem:[%s1 + $0x4f0] sm:$0xff]
  %v171 = vld [vmem:[%s1 + $0x4f8] sm:$0xff]
  %v172 = vld [vmem:[%s1 + $0x500] sm:$0xff]
  %v173 = vld [vmem:[%s1 + $0x508] sm:$0xff]
  %v174 = vld [vmem:[%s1 + $0x510] sm:$0xff]
  %v175 = vld [vmem:[%s1 + $0x518] sm:$0xff]
  %v176 = vld [vmem:[%s1 + $0x520] sm:$0xff]
  %v177 = vld [vmem:[%s1 + $0x528] sm:$0xff]
  %v178 = vld [vmem:[%s1 + $0x530] sm:$0xff]
  %v179 = vld [vmem:[%s1 + $0x538] sm:$0xff]
  %v180 = vld [vmem:[%s1 + $0x540] sm:$0xff]
  %v181 = vld [vmem:[%s1 + $0x548] sm:$0xff]
  %v182 = vld [vmem:[%s1 + $0x550] sm:$0xff]
  %v183 = vld [vmem:[%s1 + $0x558] sm:$0xff]
  %v184 = vld [vmem:[%s1 + $0x560] sm:$0xff]
  %v185 = vld [vmem:[%s1 + $0x568] sm:$0xff]
  %v186 = vld [vmem:[%s1 + $0x570] sm:$0xff]
  %v187 = vld [vmem:[%s1 + $0x578] sm:$0xff]
  %v188 = vld [vmem:[%s1 + $0x580] sm:$0xff]
  %v189 = vld [vmem:[%s1 + $0x588] sm:$0xff]
  %v190 = vld [vmem:[%s1 + $0x590] sm:$0xff]
  %v191 = vld [vmem:[%s1 + $0x598] sm:$0xff]
  %v192 = vld [vmem:[%s1 + $0x5a0] sm:$0xff]
  %v193 = vld [vmem:[%s1 + $0x5a8] sm:$0xff]
  %v194 = vld [vmem:[%s1 + $0x5b0] sm:$0xff]
  %v195 = vld [vmem:[%s1 + $0x5b8] sm:$0xff]
  %v196 = vld [vmem:[%s1 + $0x5c0] sm:$0xff]
  %v197 = vld [vmem:[%s1 + $0x5c8] sm:$0xff]
  %v198 = vld [vmem:[%s1 + $0x5d0] sm:$0xff]
  %v199 = vld [vmem:[%s1 + $0x5d8] sm:$0xff]
  %v200 = vld [vmem:[%s1 + $0x5e0] sm:$0xff]
  %v201 = vld [vmem:[%s1 + $0x5e8] sm:$0xff]
  %v202 = vld [vmem:[%s1 + $0x5f0] sm:$0xff]
  %v203 = vld [vmem:[%s1 + $0x5f8] sm:$0xff]
  %v204 = vld [vmem:[%s1 + $0x600] sm:$0xff]
  %v205 = vld [vmem:[%s1 + $0x608] sm:$0xff]
  %v206 = vld [vmem:[%s1 + $0x610] sm:$0xff]
  %v207 = vld [vmem:[%s1 + $0x618] sm:$0xff]
  %v208 = vld [vmem:[%s1 + $0x620] sm:$0xff]
  %v209 = vld [vmem:[%s1 + $0x628] sm:$0xff]
  %v210 = vld [vmem:[%s1 + $0x630] sm:$0xff]
  %v211 = vld [vmem:[%s1 + $0x638] sm:$0xff]
  %v212 = vld [vmem:[%s1 + $0x640] sm:$0xff]
  %v213 = vld [vmem:[%s1 + $0x648] sm:$0xff]
  %v214 = vld [vmem:[%s1 + $0x650] sm:$0xff]
  %v215 = vld [vmem:[%s1 + $0x658] sm:$0xff]
  %v216 = vld [vmem:[%s1 + $0x660] sm:$0xff]
  %v217 = vld [vmem:[%s1 + $0x668] sm:$0xff]
  %v218 = vld [vmem:[%s1 + $0x670] sm:$0xff]
  %v219 = vld [vmem:[%s1 + $0x678] sm:$0xff]
  %v220 = vld [vmem:[%s1 + $0x680] sm:$0xff]
  %v221 = vld [vmem:[%s1 + $0x688] sm:$0xff]
  %v222 = vld [vmem:[%s1 + $0x690] sm:$0xff]
  %v223 = vld [vmem:[%s1 + $0x698] sm:$0xff]
  %v224 = vld [vmem:[%s1 + $0x6a0] sm:$0xff]
  %v225 = vld [vmem:[%s1 + $0x6a8] sm:$0xff]
  %v226 = vld [vmem:[%s1 + $0x6b0] sm:$0xff]
  %v227 = vld [vmem:[%s1 + $0x6b8] sm:$0xff]
  %v228 = vld [vmem:[%s1 + $0x6c0] sm:$0xff]
  %v229 = vld [vmem:[%s1 + $0x6c8] sm:$0xff]
  %v230 = vld [vmem:[%s1 + $0x6d0] sm:$0xff]
  %v231 = vld [vmem:[%s1 + $0x6d8] sm:$0xff]
  %v232 = vld [vmem:[%s1 + $0x6e0] sm:$0xff]
  %v233 = vld [vmem:[%s1 + $0x6e8] sm:$0xff]
  %v234 = vld [vmem:[%s1 + $0x6f0] sm:$0xff]
  %v235 = vld [vmem:[%s1 + $0x6f8] sm:$0xff]
  %v236 = vld [vmem:[%s1 + $0x700] sm:$0xff]
  %v237 = vld [vmem:[%s1 + $0x708] sm:$0xff]
  %v238 = vld [vmem:[%s1 + $0x710] sm:$0xff]
  %v239 = vld [vmem:[%s1 + $0x718] sm:$0xff]
  %v240 = vld [vmem:[%s1 + $0x720] sm:$0xff]
  %v241 = vld [vmem:[%s1 + $0x728] sm:$0xff]
  %v242 = vld [vmem:[%s1 + $0x730] sm:$0xff]
  %v243 = vld [vmem:[%s1 + $0x738] sm:$0xff]
  %v244 = vld [vmem:[%s1 + $0x740] sm:$0xff]
  %v245 = vld [vmem:[%s1 + $0x748] sm:$0xff]
  %v246 = vld [vmem:[%s1 + $0x750] sm:$0xff]
  %v247 = vld [vmem:[%s1 + $0x758] sm:$0xff]
  %v248 = vld [vmem:[%s1 + $0x760] sm:$0xff]
  %v249 = vld [vmem:[%s1 + $0x768] sm:$0xff]
  %v250 = vld [vmem:[%s1 + $0x770] sm:$0xff]
  %v251 = vld [vmem:[%s1 + $0x778] sm:$0xff]
  %v252 = vld [vmem:[%s1 + $0x780] sm:$0xff]
  %v253 = vld [vmem:[%s1 + $0x788] sm:$0xff]
  %v254 = vld [vmem:[%s1 + $0x790] sm:$0xff]
  %v255 = vld [vmem:[%s1 + $0x798] sm:$0xff]
  %v256 = vld [vmem:[%s1 + $0x7a0] sm:$0xff]
  %v257 = vld [vmem:[%s1 + $0x7a8] sm:$0xff]
  %v258 = vld [vmem:[%s1 + $0x7b0] sm:$0xff]
  %v259 = vld [vmem:[%s1 + $0x7b8] sm:$0xff]
  %v260 = vld [vmem:[%s1 + $0x7c0] sm:$0xff]
  %v261 = vld [vmem:[%s1 + $0x7c8] sm:$0xff]
  %v262 = vld [vmem:[%s1 + $0x7d0] sm:$0xff]
  %v263 = vld [vmem:[%s1 + $0x7d8] sm:$0xff]
  %v264 = vld [vmem:[%s1 + $0x7e0] sm:$0xff]
  %v265 = vld [vmem:[%s1 + $0x7e8] sm:$0xff]
  %v266 = vld [vmem:[%s1 + $0x7f0] sm:$0xff]
  %v267 = vld [vmem:[%s1 + $0x7f8] sm:$0xff]
  %v269 = vunpack.c.l.b16 %v11
  %v270 = vunpack.c.h.b16 %v11
  %v271 = vpack.c.b16 %v269, %v269
  %v272 = vpack.c.b16 %v270, %v270
  %v531 = vunpack.c.l.b16 %v12
  %v532 = vunpack.c.h.b16 %v12
  %v533 = vunpack.c.l.b16 %v13
  %v534 = vunpack.c.h.b16 %v13
  %v535 = vunpack.c.l.b16 %v14
  %v536 = vunpack.c.h.b16 %v14
  %v537 = vunpack.c.l.b16 %v15
  %v538 = vunpack.c.h.b16 %v15
  %v539 = vunpack.c.l.b16 %v16
  %v540 = vunpack.c.h.b16 %v16
  %v541 = vunpack.c.l.b16 %v17
  %v542 = vunpack.c.h.b16 %v17
  %v543 = vunpack.c.l.b16 %v18
  %v544 = vunpack.c.h.b16 %v18
  %v545 = vunpack.c.l.b16 %v19
  %v546 = vunpack.c.h.b16 %v19
  %v547 = vunpack.c.l.b16 %v20
  %v548 = vunpack.c.h.b16 %v20
  %v549 = vunpack.c.l.b16 %v21
  %v550 = vunpack.c.h.b16 %v21
  %v551 = vunpack.c.l.b16 %v22
  %v552 = vunpack.c.h.b16 %v22
  %v553 = vunpack.c.l.b16 %v23
  %v554 = vunpack.c.h.b16 %v23
  %v555 = vunpack.c.l.b16 %v24
  %v556 = vunpack.c.h.b16 %v24
  %v557 = vunpack.c.l.b16 %v25
  %v558 = vunpack.c.h.b16 %v25
  %v559 = vunpack.c.l.b16 %v26
  %v560 = vunpack.c.h.b16 %v26
  %v561 = vunpack.c.l.b16 %v27
  %v562 = vunpack.c.h.b16 %v27
  %v563 = vunpack.c.l.b16 %v28
  %v564 = vunpack.c.h.b16 %v28
  %v565 = vunpack.c.l.b16 %v29
  %v566 = vunpack.c.h.b16 %v29
  %v567 = vunpack.c.l.b16 %v30
  %v568 = vunpack.c.h.b16 %v30
  %v569 = vunpack.c.l.b16 %v31
  %v570 = vunpack.c.h.b16 %v31
  %v571 = vunpack.c.l.b16 %v32
  %v572 = vunpack.c.h.b16 %v32
  %v573 = vunpack.c.l.b16 %v33
  %v574 = vunpack.c.h.b16 %v33
  %v575 = vunpack.c.l.b16 %v34
  %v576 = vunpack.c.h.b16 %v34
  %v577 = vunpack.c.l.b16 %v35
  %v578 = vunpack.c.h.b16 %v35
  %v579 = vunpack.c.l.b16 %v36
  %v580 = vunpack.c.h.b16 %v36
  %v581 = vunpack.c.l.b16 %v37
  %v582 = vunpack.c.h.b16 %v37
  %v583 = vunpack.c.l.b16 %v38
  %v584 = vunpack.c.h.b16 %v38
  %v585 = vunpack.c.l.b16 %v39
  %v586 = vunpack.c.h.b16 %v39
  %v587 = vunpack.c.l.b16 %v40
  %v588 = vunpack.c.h.b16 %v40
  %v589 = vunpack.c.l.b16 %v41
  %v590 = vunpack.c.h.b16 %v41
  %v591 = vunpack.c.l.b16 %v42
  %v592 = vunpack.c.h.b16 %v42
  %v593 = vunpack.c.l.b16 %v43
  %v594 = vunpack.c.h.b16 %v43
  %v595 = vunpack.c.l.b16 %v44
  %v596 = vunpack.c.h.b16 %v44
  %v597 = vunpack.c.l.b16 %v45
  %v598 = vunpack.c.h.b16 %v45
  %v599 = vunpack.c.l.b16 %v46
  %v600 = vunpack.c.h.b16 %v46
  %v601 = vunpack.c.l.b16 %v47
  %v602 = vunpack.c.h.b16 %v47
  %v603 = vunpack.c.l.b16 %v48
  %v604 = vunpack.c.h.b16 %v48
  %v605 = vunpack.c.l.b16 %v49
  %v606 = vunpack.c.h.b16 %v49
  %v607 = vunpack.c.l.b16 %v50
  %v608 = vunpack.c.h.b16 %v50
  %v609 = vunpack.c.l.b16 %v51
  %v610 = vunpack.c.h.b16 %v51
  %v611 = vunpack.c.l.b16 %v52
  %v612 = vunpack.c.h.b16 %v52
  %v613 = vunpack.c.l.b16 %v53
  %v614 = vunpack.c.h.b16 %v53
  %v615 = vunpack.c.l.b16 %v54
  %v616 = vunpack.c.h.b16 %v54
  %v617 = vunpack.c.l.b16 %v55
  %v618 = vunpack.c.h.b16 %v55
  %v619 = vunpack.c.l.b16 %v56
  %v620 = vunpack.c.h.b16 %v56
  %v621 = vunpack.c.l.b16 %v57
  %v622 = vunpack.c.h.b16 %v57
  %v623 = vunpack.c.l.b16 %v58
  %v624 = vunpack.c.h.b16 %v58
  %v625 = vunpack.c.l.b16 %v59
  %v626 = vunpack.c.h.b16 %v59
  %v627 = vunpack.c.l.b16 %v60
  %v628 = vunpack.c.h.b16 %v60
  %v629 = vunpack.c.l.b16 %v61
  %v630 = vunpack.c.h.b16 %v61
  %v631 = vunpack.c.l.b16 %v62
  %v632 = vunpack.c.h.b16 %v62
  %v633 = vunpack.c.l.b16 %v63
  %v634 = vunpack.c.h.b16 %v63
  %v635 = vunpack.c.l.b16 %v64
  %v636 = vunpack.c.h.b16 %v64
  %v637 = vunpack.c.l.b16 %v65
  %v638 = vunpack.c.h.b16 %v65
  %v639 = vunpack.c.l.b16 %v66
  %v640 = vunpack.c.h.b16 %v66
  %v641 = vunpack.c.l.b16 %v67
  %v642 = vunpack.c.h.b16 %v67
  %v643 = vunpack.c.l.b16 %v68
  %v644 = vunpack.c.h.b16 %v68
  %v645 = vunpack.c.l.b16 %v69
  %v646 = vunpack.c.h.b16 %v69
  %v647 = vunpack.c.l.b16 %v70
  %v648 = vunpack.c.h.b16 %v70
  %v649 = vunpack.c.l.b16 %v71
  %v650 = vunpack.c.h.b16 %v71
  %v651 = vunpack.c.l.b16 %v72
  %v652 = vunpack.c.h.b16 %v72
  %v653 = vunpack.c.l.b16 %v73
  %v654 = vunpack.c.h.b16 %v73
  %v655 = vunpack.c.l.b16 %v74
  %v656 = vunpack.c.h.b16 %v74
  %v657 = vunpack.c.l.b16 %v75
  %v658 = vunpack.c.h.b16 %v75
  %v659 = vunpack.c.l.b16 %v76
  %v660 = vunpack.c.h.b16 %v76
  %v661 = vunpack.c.l.b16 %v77
  %v662 = vunpack.c.h.b16 %v77
  %v663 = vunpack.c.l.b16 %v78
  %v664 = vunpack.c.h.b16 %v78
  %v665 = vunpack.c.l.b16 %v79
  %v666 = vunpack.c.h.b16 %v79
  %v667 = vunpack.c.l.b16 %v80
  %v668 = vunpack.c.h.b16 %v80
  %v669 = vunpack.c.l.b16 %v81
  %v670 = vunpack.c.h.b16 %v81
  %v671 = vunpack.c.l.b16 %v82
  %v672 = vunpack.c.h.b16 %v82
  %v673 = vunpack.c.l.b16 %v83
  %v674 = vunpack.c.h.b16 %v83
  %v675 = vunpack.c.l.b16 %v84
  %v676 = vunpack.c.h.b16 %v84
  %v677 = vunpack.c.l.b16 %v85
  %v678 = vunpack.c.h.b16 %v85
  %v679 = vunpack.c.l.b16 %v86
  %v680 = vunpack.c.h.b16 %v86
  %v681 = vunpack.c.l.b16 %v87
  %v682 = vunpack.c.h.b16 %v87
  %v683 = vunpack.c.l.b16 %v88
  %v684 = vunpack.c.h.b16 %v88
  %v685 = vunpack.c.l.b16 %v89
  %v686 = vunpack.c.h.b16 %v89
  %v687 = vunpack.c.l.b16 %v90
  %v688 = vunpack.c.h.b16 %v90
  %v689 = vunpack.c.l.b16 %v91
  %v690 = vunpack.c.h.b16 %v91
  %v691 = vunpack.c.l.b16 %v92
  %v692 = vunpack.c.h.b16 %v92
  %v693 = vunpack.c.l.b16 %v93
  %v694 = vunpack.c.h.b16 %v93
  %v695 = vunpack.c.l.b16 %v94
  %v696 = vunpack.c.h.b16 %v94
  %v697 = vunpack.c.l.b16 %v95
  %v698 = vunpack.c.h.b16 %v95
  %v699 = vunpack.c.l.b16 %v96
  %v700 = vunpack.c.h.b16 %v96
  %v701 = vunpack.c.l.b16 %v97
  %v702 = vunpack.c.h.b16 %v97
  %v703 = vunpack.c.l.b16 %v98
  %v704 = vunpack.c.h.b16 %v98
  %v705 = vunpack.c.l.b16 %v99
  %v706 = vunpack.c.h.b16 %v99
  %v707 = vunpack.c.l.b16 %v100
  %v708 = vunpack.c.h.b16 %v100
  %v709 = vunpack.c.l.b16 %v101
  %v710 = vunpack.c.h.b16 %v101
  %v711 = vunpack.c.l.b16 %v102
  %v712 = vunpack.c.h.b16 %v102
  %v713 = vunpack.c.l.b16 %v103
  %v714 = vunpack.c.h.b16 %v103
  %v715 = vunpack.c.l.b16 %v104
  %v716 = vunpack.c.h.b16 %v104
  %v717 = vunpack.c.l.b16 %v105
  %v718 = vunpack.c.h.b16 %v105
  %v719 = vunpack.c.l.b16 %v106
  %v720 = vunpack.c.h.b16 %v106
  %v721 = vunpack.c.l.b16 %v107
  %v722 = vunpack.c.h.b16 %v107
  %v723 = vunpack.c.l.b16 %v108
  %v724 = vunpack.c.h.b16 %v108
  %v725 = vunpack.c.l.b16 %v109
  %v726 = vunpack.c.h.b16 %v109
  %v727 = vunpack.c.l.b16 %v110
  %v728 = vunpack.c.h.b16 %v110
  %v729 = vunpack.c.l.b16 %v111
  %v730 = vunpack.c.h.b16 %v111
  %v731 = vunpack.c.l.b16 %v112
  %v732 = vunpack.c.h.b16 %v112
  %v733 = vunpack.c.l.b16 %v113
  %v734 = vunpack.c.h.b16 %v113
  %v735 = vunpack.c.l.b16 %v114
  %v736 = vunpack.c.h.b16 %v114
  %v737 = vunpack.c.l.b16 %v115
  %v738 = vunpack.c.h.b16 %v115
  %v739 = vunpack.c.l.b16 %v116
  %v740 = vunpack.c.h.b16 %v116
  %v741 = vunpack.c.l.b16 %v117
  %v742 = vunpack.c.h.b16 %v117
  %v743 = vunpack.c.l.b16 %v118
  %v744 = vunpack.c.h.b16 %v118
  %v745 = vunpack.c.l.b16 %v119
  %v746 = vunpack.c.h.b16 %v119
  %v747 = vunpack.c.l.b16 %v120
  %v748 = vunpack.c.h.b16 %v120
  %v749 = vunpack.c.l.b16 %v121
  %v750 = vunpack.c.h.b16 %v121
  %v751 = vunpack.c.l.b16 %v122
  %v752 = vunpack.c.h.b16 %v122
  %v753 = vunpack.c.l.b16 %v123
  %v754 = vunpack.c.h.b16 %v123
  %v755 = vunpack.c.l.b16 %v124
  %v756 = vunpack.c.h.b16 %v124
  %v757 = vunpack.c.l.b16 %v125
  %v758 = vunpack.c.h.b16 %v125
  %v759 = vunpack.c.l.b16 %v126
  %v760 = vunpack.c.h.b16 %v126
  %v761 = vunpack.c.l.b16 %v127
  %v762 = vunpack.c.h.b16 %v127
  %v763 = vunpack.c.l.b16 %v128
  %v764 = vunpack.c.h.b16 %v128
  %v765 = vunpack.c.l.b16 %v129
  %v766 = vunpack.c.h.b16 %v129
  %v767 = vunpack.c.l.b16 %v130
  %v768 = vunpack.c.h.b16 %v130
  %v769 = vunpack.c.l.b16 %v131
  %v770 = vunpack.c.h.b16 %v131
  %v771 = vunpack.c.l.b16 %v132
  %v772 = vunpack.c.h.b16 %v132
  %v773 = vunpack.c.l.b16 %v133
  %v774 = vunpack.c.h.b16 %v133
  %v775 = vunpack.c.l.b16 %v134
  %v776 = vunpack.c.h.b16 %v134
  %v777 = vunpack.c.l.b16 %v135
  %v778 = vunpack.c.h.b16 %v135
  %v779 = vunpack.c.l.b16 %v136
  %v780 = vunpack.c.h.b16 %v136
  %v781 = vunpack.c.l.b16 %v137
  %v782 = vunpack.c.h.b16 %v137
  %v783 = vunpack.c.l.b16 %v138
  %v784 = vunpack.c.h.b16 %v138
  %v785 = vunpack.c.l.b16 %v139
  %v786 = vunpack.c.h.b16 %v139
  %v787 = vunpack.c.l.b16 %v140
  %v788 = vunpack.c.h.b16 %v140
  %v789 = vunpack.c.l.b16 %v141
  %v790 = vunpack.c.h.b16 %v141
  %v791 = vunpack.c.l.b16 %v142
  %v792 = vunpack.c.h.b16 %v142
  %v793 = vunpack.c.l.b16 %v143
  %v794 = vunpack.c.h.b16 %v143
  %v795 = vunpack.c.l.b16 %v144
  %v796 = vunpack.c.h.b16 %v144
  %v797 = vunpack.c.l.b16 %v145
  %v798 = vunpack.c.h.b16 %v145
  %v799 = vunpack.c.l.b16 %v146
  %v800 = vunpack.c.h.b16 %v146
  %v801 = vunpack.c.l.b16 %v147
  %v802 = vunpack.c.h.b16 %v147
  %v803 = vunpack.c.l.b16 %v148
  %v804 = vunpack.c.h.b16 %v148
  %v805 = vunpack.c.l.b16 %v149
  %v806 = vunpack.c.h.b16 %v149
  %v807 = vunpack.c.l.b16 %v150
  %v808 = vunpack.c.h.b16 %v150
  %v809 = vunpack.c.l.b16 %v151
  %v810 = vunpack.c.h.b16 %v151
  %v811 = vunpack.c.l.b16 %v152
  %v812 = vunpack.c.h.b16 %v152
  %v813 = vunpack.c.l.b16 %v153
  %v814 = vunpack.c.h.b16 %v153
  %v815 = vunpack.c.l.b16 %v154
  %v816 = vunpack.c.h.b16 %v154
  %v817 = vunpack.c.l.b16 %v155
  %v818 = vunpack.c.h.b16 %v155
  %v819 = vunpack.c.l.b16 %v156
  %v820 = vunpack.c.h.b16 %v156
  %v821 = vunpack.c.l.b16 %v157
  %v822 = vunpack.c.h.b16 %v157
  %v823 = vunpack.c.l.b16 %v158
  %v824 = vunpack.c.h.b16 %v158
  %v825 = vunpack.c.l.b16 %v159
  %v826 = vunpack.c.h.b16 %v159
  %v827 = vunpack.c.l.b16 %v160
  %v828 = vunpack.c.h.b16 %v160
  %v829 = vunpack.c.l.b16 %v161
  %v830 = vunpack.c.h.b16 %v161
  %v831 = vunpack.c.l.b16 %v162
  %v832 = vunpack.c.h.b16 %v162
  %v833 = vunpack.c.l.b16 %v163
  %v834 = vunpack.c.h.b16 %v163
  %v835 = vunpack.c.l.b16 %v164
  %v836 = vunpack.c.h.b16 %v164
  %v837 = vunpack.c.l.b16 %v165
  %v838 = vunpack.c.h.b16 %v165
  %v839 = vunpack.c.l.b16 %v166
  %v840 = vunpack.c.h.b16 %v166
  %v841 = vunpack.c.l.b16 %v167
  %v842 = vunpack.c.h.b16 %v167
  %v843 = vunpack.c.l.b16 %v168
  %v844 = vunpack.c.h.b16 %v168
  %v845 = vunpack.c.l.b16 %v169
  %v846 = vunpack.c.h.b16 %v169
  %v847 = vunpack.c.l.b16 %v170
  %v848 = vunpack.c.h.b16 %v170
  %v849 = vunpack.c.l.b16 %v171
  %v850 = vunpack.c.h.b16 %v171
  %v851 = vunpack.c.l.b16 %v172
  %v852 = vunpack.c.h.b16 %v172
  %v853 = vunpack.c.l.b16 %v173
  %v854 = vunpack.c.h.b16 %v173
  %v855 = vunpack.c.l.b16 %v174
  %v856 = vunpack.c.h.b16 %v174
  %v857 = vunpack.c.l.b16 %v175
  %v858 = vunpack.c.h.b16 %v175
  %v859 = vunpack.c.l.b16 %v176
  %v860 = vunpack.c.h.b16 %v176
  %v861 = vunpack.c.l.b16 %v177
  %v862 = vunpack.c.h.b16 %v177
  %v863 = vunpack.c.l.b16 %v178
  %v864 = vunpack.c.h.b16 %v178
  %v865 = vunpack.c.l.b16 %v179
  %v866 = vunpack.c.h.b16 %v179
  %v867 = vunpack.c.l.b16 %v180
  %v868 = vunpack.c.h.b16 %v180
  %v869 = vunpack.c.l.b16 %v181
  %v870 = vunpack.c.h.b16 %v181
  %v871 = vunpack.c.l.b16 %v182
  %v872 = vunpack.c.h.b16 %v182
  %v873 = vunpack.c.l.b16 %v183
  %v874 = vunpack.c.h.b16 %v183
  %v875 = vunpack.c.l.b16 %v184
  %v876 = vunpack.c.h.b16 %v184
  %v877 = vunpack.c.l.b16 %v185
  %v878 = vunpack.c.h.b16 %v185
  %v879 = vunpack.c.l.b16 %v186
  %v880 = vunpack.c.h.b16 %v186
  %v881 = vunpack.c.l.b16 %v187
  %v882 = vunpack.c.h.b16 %v187
  %v883 = vunpack.c.l.b16 %v188
  %v884 = vunpack.c.h.b16 %v188
  %v885 = vunpack.c.l.b16 %v189
  %v886 = vunpack.c.h.b16 %v189
  %v887 = vunpack.c.l.b16 %v190
  %v888 = vunpack.c.h.b16 %v190
  %v889 = vunpack.c.l.b16 %v191
  %v890 = vunpack.c.h.b16 %v191
  %v891 = vunpack.c.l.b16 %v192
  %v892 = vunpack.c.h.b16 %v192
  %v893 = vunpack.c.l.b16 %v193
  %v894 = vunpack.c.h.b16 %v193
  %v895 = vunpack.c.l.b16 %v194
  %v896 = vunpack.c.h.b16 %v194
  %v897 = vunpack.c.l.b16 %v195
  %v898 = vunpack.c.h.b16 %v195
  %v899 = vunpack.c.l.b16 %v196
  %v900 = vunpack.c.h.b16 %v196
  %v901 = vunpack.c.l.b16 %v197
  %v902 = vunpack.c.h.b16 %v197
  %v903 = vunpack.c.l.b16 %v198
  %v904 = vunpack.c.h.b16 %v198
  %v905 = vunpack.c.l.b16 %v199
  %v906 = vunpack.c.h.b16 %v199
  %v907 = vunpack.c.l.b16 %v200
  %v908 = vunpack.c.h.b16 %v200
  %v909 = vunpack.c.l.b16 %v201
  %v910 = vunpack.c.h.b16 %v201
  %v911 = vunpack.c.l.b16 %v202
  %v912 = vunpack.c.h.b16 %v202
  %v913 = vunpack.c.l.b16 %v203
  %v914 = vunpack.c.h.b16 %v203
  %v915 = vunpack.c.l.b16 %v204
  %v916 = vunpack.c.h.b16 %v204
  %v917 = vunpack.c.l.b16 %v205
  %v918 = vunpack.c.h.b16 %v205
  %v919 = vunpack.c.l.b16 %v206
  %v920 = vunpack.c.h.b16 %v206
  %v921 = vunpack.c.l.b16 %v207
  %v922 = vunpack.c.h.b16 %v207
  %v923 = vunpack.c.l.b16 %v208
  %v924 = vunpack.c.h.b16 %v208
  %v925 = vunpack.c.l.b16 %v209
  %v926 = vunpack.c.h.b16 %v209
  %v927 = vunpack.c.l.b16 %v210
  %v928 = vunpack.c.h.b16 %v210
  %v929 = vunpack.c.l.b16 %v211
  %v930 = vunpack.c.h.b16 %v211
  %v931 = vunpack.c.l.b16 %v212
  %v932 = vunpack.c.h.b16 %v212
  %v933 = vunpack.c.l.b16 %v213
  %v934 = vunpack.c.h.b16 %v213
  %v935 = vunpack.c.l.b16 %v214
  %v936 = vunpack.c.h.b16 %v214
  %v937 = vunpack.c.l.b16 %v215
  %v938 = vunpack.c.h.b16 %v215
  %v939 = vunpack.c.l.b16 %v216
  %v940 = vunpack.c.h.b16 %v216
  %v941 = vunpack.c.l.b16 %v217
  %v942 = vunpack.c.h.b16 %v217
  %v943 = vunpack.c.l.b16 %v218
  %v944 = vunpack.c.h.b16 %v218
  %v945 = vunpack.c.l.b16 %v219
  %v946 = vunpack.c.h.b16 %v219
  %v947 = vunpack.c.l.b16 %v220
  %v948 = vunpack.c.h.b16 %v220
  %v949 = vunpack.c.l.b16 %v221
  %v950 = vunpack.c.h.b16 %v221
  %v951 = vunpack.c.l.b16 %v222
  %v952 = vunpack.c.h.b16 %v222
  %v953 = vunpack.c.l.b16 %v223
  %v954 = vunpack.c.h.b16 %v223
  %v955 = vunpack.c.l.b16 %v224
  %v956 = vunpack.c.h.b16 %v224
  %v957 = vunpack.c.l.b16 %v225
  %v958 = vunpack.c.h.b16 %v225
  %v959 = vunpack.c.l.b16 %v226
  %v960 = vunpack.c.h.b16 %v226
  %v961 = vunpack.c.l.b16 %v227
  %v962 = vunpack.c.h.b16 %v227
  %v963 = vunpack.c.l.b16 %v228
  %v964 = vunpack.c.h.b16 %v228
  %v965 = vunpack.c.l.b16 %v229
  %v966 = vunpack.c.h.b16 %v229
  %v967 = vunpack.c.l.b16 %v230
  %v968 = vunpack.c.h.b16 %v230
  %v969 = vunpack.c.l.b16 %v231
  %v970 = vunpack.c.h.b16 %v231
  %v971 = vunpack.c.l.b16 %v232
  %v972 = vunpack.c.h.b16 %v232
  %v973 = vunpack.c.l.b16 %v233
  %v974 = vunpack.c.h.b16 %v233
  %v975 = vunpack.c.l.b16 %v234
  %v976 = vunpack.c.h.b16 %v234
  %v977 = vunpack.c.l.b16 %v235
  %v978 = vunpack.c.h.b16 %v235
  %v979 = vunpack.c.l.b16 %v236
  %v980 = vunpack.c.h.b16 %v236
  %v981 = vunpack.c.l.b16 %v237
  %v982 = vunpack.c.h.b16 %v237
  %v983 = vunpack.c.l.b16 %v238
  %v984 = vunpack.c.h.b16 %v238
  %v985 = vunpack.c.l.b16 %v239
  %v986 = vunpack.c.h.b16 %v239
  %v987 = vunpack.c.l.b16 %v240
  %v988 = vunpack.c.h.b16 %v240
  %v989 = vunpack.c.l.b16 %v241
  %v990 = vunpack.c.h.b16 %v241
  %v991 = vunpack.c.l.b16 %v242
  %v992 = vunpack.c.h.b16 %v242
  %v993 = vunpack.c.l.b16 %v243
  %v994 = vunpack.c.h.b16 %v243
  %v995 = vunpack.c.l.b16 %v244
  %v996 = vunpack.c.h.b16 %v244
  %v997 = vunpack.c.l.b16 %v245
  %v998 = vunpack.c.h.b16 %v245
  %v999 = vunpack.c.l.b16 %v246
  %v1000 = vunpack.c.h.b16 %v246
  %v1001 = vunpack.c.l.b16 %v247
  %v1002 = vunpack.c.h.b16 %v247
  %v1003 = vunpack.c.l.b16 %v248
  %v1004 = vunpack.c.h.b16 %v248
  %v1005 = vunpack.c.l.b16 %v249
  %v1006 = vunpack.c.h.b16 %v249
  %v1007 = vunpack.c.l.b16 %v250
  %v1008 = vunpack.c.h.b16 %v250
  %v1009 = vunpack.c.l.b16 %v251
  %v1010 = vunpack.c.h.b16 %v251
  %v1011 = vunpack.c.l.b16 %v252
  %v1012 = vunpack.c.h.b16 %v252
  %v1013 = vunpack.c.l.b16 %v253
  %v1014 = vunpack.c.h.b16 %v253
  %v1015 = vunpack.c.l.b16 %v254
  %v1016 = vunpack.c.h.b16 %v254
  %v1017 = vunpack.c.l.b16 %v255
  %v1018 = vunpack.c.h.b16 %v255
  %v1019 = vunpack.c.l.b16 %v256
  %v1020 = vunpack.c.h.b16 %v256
  %v1021 = vunpack.c.l.b16 %v257
  %v1022 = vunpack.c.h.b16 %v257
  %v1023 = vunpack.c.l.b16 %v258
  %v1024 = vunpack.c.h.b16 %v258
  %v1025 = vunpack.c.l.b16 %v259
  %v1026 = vunpack.c.h.b16 %v259
  %v1027 = vunpack.c.l.b16 %v260
  %v1028 = vunpack.c.h.b16 %v260
  %v1029 = vunpack.c.l.b16 %v261
  %v1030 = vunpack.c.h.b16 %v261
  %v1031 = vunpack.c.l.b16 %v262
  %v1032 = vunpack.c.h.b16 %v262
  %v1033 = vunpack.c.l.b16 %v263
  %v1034 = vunpack.c.h.b16 %v263
  %v1035 = vunpack.c.l.b16 %v264
  %v1036 = vunpack.c.h.b16 %v264
  %v1037 = vunpack.c.l.b16 %v265
  %v1038 = vunpack.c.h.b16 %v265
  %v1039 = vunpack.c.l.b16 %v266
  %v1040 = vunpack.c.h.b16 %v266
  %v1041 = vunpack.c.l.b16 %v267
  %v1042 = vunpack.c.h.b16 %v267
  %v1043 = vpack.c.b16 %v547, %v531
  %v1044 = vpack.c.b16 %v548, %v532
  %v1045 = vpack.c.b16 %v549, %v533
  %v1046 = vpack.c.b16 %v550, %v534
  %v1047 = vpack.c.b16 %v551, %v535
  %v1048 = vpack.c.b16 %v552, %v536
  %v1049 = vpack.c.b16 %v553, %v537
  %v1050 = vpack.c.b16 %v554, %v538
  %v1051 = vpack.c.b16 %v555, %v539
  %v1052 = vpack.c.b16 %v556, %v540
  %v1053 = vpack.c.b16 %v557, %v541
  %v1054 = vpack.c.b16 %v558, %v542
  %v1055 = vpack.c.b16 %v559, %v543
  %v1056 = vpack.c.b16 %v560, %v544
  %v1057 = vpack.c.b16 %v561, %v545
  %v1058 = vpack.c.b16 %v562, %v546
  %v1059 = vpack.c.b16 %v579, %v563
  %v1060 = vpack.c.b16 %v580, %v564
  %v1061 = vpack.c.b16 %v581, %v565
  %v1062 = vpack.c.b16 %v582, %v566
  %v1063 = vpack.c.b16 %v583, %v567
  %v1064 = vpack.c.b16 %v584, %v568
  %v1065 = vpack.c.b16 %v585, %v569
  %v1066 = vpack.c.b16 %v586, %v570
  %v1067 = vpack.c.b16 %v587, %v571
  %v1068 = vpack.c.b16 %v588, %v572
  %v1069 = vpack.c.b16 %v589, %v573
  %v1070 = vpack.c.b16 %v590, %v574
  %v1071 = vpack.c.b16 %v591, %v575
  %v1072 = vpack.c.b16 %v592, %v576
  %v1073 = vpack.c.b16 %v593, %v577
  %v1074 = vpack.c.b16 %v594, %v578
  %v1075 = vpack.c.b16 %v611, %v595
  %v1076 = vpack.c.b16 %v612, %v596
  %v1077 = vpack.c.b16 %v613, %v597
  %v1078 = vpack.c.b16 %v614, %v598
  %v1079 = vpack.c.b16 %v615, %v599
  %v1080 = vpack.c.b16 %v616, %v600
  %v1081 = vpack.c.b16 %v617, %v601
  %v1082 = vpack.c.b16 %v618, %v602
  %v1083 = vpack.c.b16 %v619, %v603
  %v1084 = vpack.c.b16 %v620, %v604
  %v1085 = vpack.c.b16 %v621, %v605
  %v1086 = vpack.c.b16 %v622, %v606
  %v1087 = vpack.c.b16 %v623, %v607
  %v1088 = vpack.c.b16 %v624, %v608
  %v1089 = vpack.c.b16 %v625, %v609
  %v1090 = vpack.c.b16 %v626, %v610
  %v1091 = vpack.c.b16 %v643, %v627
  %v1092 = vpack.c.b16 %v644, %v628
  %v1093 = vpack.c.b16 %v645, %v629
  %v1094 = vpack.c.b16 %v646, %v630
  %v1095 = vpack.c.b16 %v647, %v631
  %v1096 = vpack.c.b16 %v648, %v632
  %v1097 = vpack.c.b16 %v649, %v633
  %v1098 = vpack.c.b16 %v650, %v634
  %v1099 = vpack.c.b16 %v651, %v635
  %v1100 = vpack.c.b16 %v652, %v636
  %v1101 = vpack.c.b16 %v653, %v637
  %v1102 = vpack.c.b16 %v654, %v638
  %v1103 = vpack.c.b16 %v655, %v639
  %v1104 = vpack.c.b16 %v656, %v640
  %v1105 = vpack.c.b16 %v657, %v641
  %v1106 = vpack.c.b16 %v658, %v642
  %v1107 = vpack.c.b16 %v675, %v659
  %v1108 = vpack.c.b16 %v676, %v660
  %v1109 = vpack.c.b16 %v677, %v661
  %v1110 = vpack.c.b16 %v678, %v662
  %v1111 = vpack.c.b16 %v679, %v663
  %v1112 = vpack.c.b16 %v680, %v664
  %v1113 = vpack.c.b16 %v681, %v665
  %v1114 = vpack.c.b16 %v682, %v666
  %v1115 = vpack.c.b16 %v683, %v667
  %v1116 = vpack.c.b16 %v684, %v668
  %v1117 = vpack.c.b16 %v685, %v669
  %v1118 = vpack.c.b16 %v686, %v670
  %v1119 = vpack.c.b16 %v687, %v671
  %v1120 = vpack.c.b16 %v688, %v672
  %v1121 = vpack.c.b16 %v689, %v673
  %v1122 = vpack.c.b16 %v690, %v674
  %v1123 = vpack.c.b16 %v707, %v691
  %v1124 = vpack.c.b16 %v708, %v692
  %v1125 = vpack.c.b16 %v709, %v693
  %v1126 = vpack.c.b16 %v710, %v694
  %v1127 = vpack.c.b16 %v711, %v695
  %v1128 = vpack.c.b16 %v712, %v696
  %v1129 = vpack.c.b16 %v713, %v697
  %v1130 = vpack.c.b16 %v714, %v698
  %v1131 = vpack.c.b16 %v715, %v699
  %v1132 = vpack.c.b16 %v716, %v700
  %v1133 = vpack.c.b16 %v717, %v701
  %v1134 = vpack.c.b16 %v718, %v702
  %v1135 = vpack.c.b16 %v719, %v703
  %v1136 = vpack.c.b16 %v720, %v704
  %v1137 = vpack.c.b16 %v721, %v705
  %v1138 = vpack.c.b16 %v722, %v706
  %v1139 = vpack.c.b16 %v739, %v723
  %v1140 = vpack.c.b16 %v740, %v724
  %v1141 = vpack.c.b16 %v741, %v725
  %v1142 = vpack.c.b16 %v742, %v726
  %v1143 = vpack.c.b16 %v743, %v727
  %v1144 = vpack.c.b16 %v744, %v728
  %v1145 = vpack.c.b16 %v745, %v729
  %v1146 = vpack.c.b16 %v746, %v730
  %v1147 = vpack.c.b16 %v747, %v731
  %v1148 = vpack.c.b16 %v748, %v732
  %v1149 = vpack.c.b16 %v749, %v733
  %v1150 = vpack.c.b16 %v750, %v734
  %v1151 = vpack.c.b16 %v751, %v735
  %v1152 = vpack.c.b16 %v752, %v736
  %v1153 = vpack.c.b16 %v753, %v737
  %v1154 = vpack.c.b16 %v754, %v738
  %v1155 = vpack.c.b16 %v771, %v755
  %v1156 = vpack.c.b16 %v772, %v756
  %v1157 = vpack.c.b16 %v773, %v757
  %v1158 = vpack.c.b16 %v774, %v758
  %v1159 = vpack.c.b16 %v775, %v759
  %v1160 = vpack.c.b16 %v776, %v760
  %v1161 = vpack.c.b16 %v777, %v761
  %v1162 = vpack.c.b16 %v778, %v762
  %v1163 = vpack.c.b16 %v779, %v763
  %v1164 = vpack.c.b16 %v780, %v764
  %v1165 = vpack.c.b16 %v781, %v765
  %v1166 = vpack.c.b16 %v782, %v766
  %v1167 = vpack.c.b16 %v783, %v767
  %v1168 = vpack.c.b16 %v784, %v768
  %v1169 = vpack.c.b16 %v785, %v769
  %v1170 = vpack.c.b16 %v786, %v770
  %v1171 = vpack.c.b16 %v803, %v787
  %v1172 = vpack.c.b16 %v804, %v788
  %v1173 = vpack.c.b16 %v805, %v789
  %v1174 = vpack.c.b16 %v806, %v790
  %v1175 = vpack.c.b16 %v807, %v791
  %v1176 = vpack.c.b16 %v808, %v792
  %v1177 = vpack.c.b16 %v809, %v793
  %v1178 = vpack.c.b16 %v810, %v794
  %v1179 = vpack.c.b16 %v811, %v795
  %v1180 = vpack.c.b16 %v812, %v796
  %v1181 = vpack.c.b16 %v813, %v797
  %v1182 = vpack.c.b16 %v814, %v798
  %v1183 = vpack.c.b16 %v815, %v799
  %v1184 = vpack.c.b16 %v816, %v800
  %v1185 = vpack.c.b16 %v817, %v801
  %v1186 = vpack.c.b16 %v818, %v802
  %v1187 = vpack.c.b16 %v835, %v819
  %v1188 = vpack.c.b16 %v836, %v820
  %v1189 = vpack.c.b16 %v837, %v821
  %v1190 = vpack.c.b16 %v838, %v822
  %v1191 = vpack.c.b16 %v839, %v823
  %v1192 = vpack.c.b16 %v840, %v824
  %v1193 = vpack.c.b16 %v841, %v825
  %v1194 = vpack.c.b16 %v842, %v826
  %v1195 = vpack.c.b16 %v843, %v827
  %v1196 = vpack.c.b16 %v844, %v828
  %v1197 = vpack.c.b16 %v845, %v829
  %v1198 = vpack.c.b16 %v846, %v830
  %v1199 = vpack.c.b16 %v847, %v831
  %v1200 = vpack.c.b16 %v848, %v832
  %v1201 = vpack.c.b16 %v849, %v833
  %v1202 = vpack.c.b16 %v850, %v834
  %v1203 = vpack.c.b16 %v867, %v851
  %v1204 = vpack.c.b16 %v868, %v852
  %v1205 = vpack.c.b16 %v869, %v853
  %v1206 = vpack.c.b16 %v870, %v854
  %v1207 = vpack.c.b16 %v871, %v855
  %v1208 = vpack.c.b16 %v872, %v856
  %v1209 = vpack.c.b16 %v873, %v857
  %v1210 = vpack.c.b16 %v874, %v858
  %v1211 = vpack.c.b16 %v875, %v859
  %v1212 = vpack.c.b16 %v876, %v860
  %v1213 = vpack.c.b16 %v877, %v861
  %v1214 = vpack.c.b16 %v878, %v862
  %v1215 = vpack.c.b16 %v879, %v863
  %v1216 = vpack.c.b16 %v880, %v864
  %v1217 = vpack.c.b16 %v881, %v865
  %v1218 = vpack.c.b16 %v882, %v866
  %v1219 = vpack.c.b16 %v899, %v883
  %v1220 = vpack.c.b16 %v900, %v884
  %v1221 = vpack.c.b16 %v901, %v885
  %v1222 = vpack.c.b16 %v902, %v886
  %v1223 = vpack.c.b16 %v903, %v887
  %v1224 = vpack.c.b16 %v904, %v888
  %v1225 = vpack.c.b16 %v905, %v889
  %v1226 = vpack.c.b16 %v906, %v890
  %v1227 = vpack.c.b16 %v907, %v891
  %v1228 = vpack.c.b16 %v908, %v892
  %v1229 = vpack.c.b16 %v909, %v893
  %v1230 = vpack.c.b16 %v910, %v894
  %v1231 = vpack.c.b16 %v911, %v895
  %v1232 = vpack.c.b16 %v912, %v896
  %v1233 = vpack.c.b16 %v913, %v897
  %v1234 = vpack.c.b16 %v914, %v898
  %v1235 = vpack.c.b16 %v931, %v915
  %v1236 = vpack.c.b16 %v932, %v916
  %v1237 = vpack.c.b16 %v933, %v917
  %v1238 = vpack.c.b16 %v934, %v918
  %v1239 = vpack.c.b16 %v935, %v919
  %v1240 = vpack.c.b16 %v936, %v920
  %v1241 = vpack.c.b16 %v937, %v921
  %v1242 = vpack.c.b16 %v938, %v922
  %v1243 = vpack.c.b16 %v939, %v923
  %v1244 = vpack.c.b16 %v940, %v924
  %v1245 = vpack.c.b16 %v941, %v925
  %v1246 = vpack.c.b16 %v942, %v926
  %v1247 = vpack.c.b16 %v943, %v927
  %v1248 = vpack.c.b16 %v944, %v928
  %v1249 = vpack.c.b16 %v945, %v929
  %v1250 = vpack.c.b16 %v946, %v930
  %v1251 = vpack.c.b16 %v963, %v947
  %v1252 = vpack.c.b16 %v964, %v948
  %v1253 = vpack.c.b16 %v965, %v949
  %v1254 = vpack.c.b16 %v966, %v950
  %v1255 = vpack.c.b16 %v967, %v951
  %v1256 = vpack.c.b16 %v968, %v952
  %v1257 = vpack.c.b16 %v969, %v953
  %v1258 = vpack.c.b16 %v970, %v954
  %v1259 = vpack.c.b16 %v971, %v955
  %v1260 = vpack.c.b16 %v972, %v956
  %v1261 = vpack.c.b16 %v973, %v957
  %v1262 = vpack.c.b16 %v974, %v958
  %v1263 = vpack.c.b16 %v975, %v959
  %v1264 = vpack.c.b16 %v976, %v960
  %v1265 = vpack.c.b16 %v977, %v961
  %v1266 = vpack.c.b16 %v978, %v962
  %v1267 = vpack.c.b16 %v995, %v979
  %v1268 = vpack.c.b16 %v996, %v980
  %v1269 = vpack.c.b16 %v997, %v981
  %v1270 = vpack.c.b16 %v998, %v982
  %v1271 = vpack.c.b16 %v999, %v983
  %v1272 = vpack.c.b16 %v1000, %v984
  %v1273 = vpack.c.b16 %v1001, %v985
  %v1274 = vpack.c.b16 %v1002, %v986
  %v1275 = vpack.c.b16 %v1003, %v987
  %v1276 = vpack.c.b16 %v1004, %v988
  %v1277 = vpack.c.b16 %v1005, %v989
  %v1278 = vpack.c.b16 %v1006, %v990
  %v1279 = vpack.c.b16 %v1007, %v991
  %v1280 = vpack.c.b16 %v1008, %v992
  %v1281 = vpack.c.b16 %v1009, %v993
  %v1282 = vpack.c.b16 %v1010, %v994
  %v1283 = vpack.c.b16 %v1027, %v1011
  %v1284 = vpack.c.b16 %v1028, %v1012
  %v1285 = vpack.c.b16 %v1029, %v1013
  %v1286 = vpack.c.b16 %v1030, %v1014
  %v1287 = vpack.c.b16 %v1031, %v1015
  %v1288 = vpack.c.b16 %v1032, %v1016
  %v1289 = vpack.c.b16 %v1033, %v1017
  %v1290 = vpack.c.b16 %v1034, %v1018
  %v1291 = vpack.c.b16 %v1035, %v1019
  %v1292 = vpack.c.b16 %v1036, %v1020
  %v1293 = vpack.c.b16 %v1037, %v1021
  %v1294 = vpack.c.b16 %v1038, %v1022
  %v1295 = vpack.c.b16 %v1039, %v1023
  %v1296 = vpack.c.b16 %v1040, %v1024
  %v1297 = vpack.c.b16 %v1041, %v1025
  %v1298 = vpack.c.b16 %v1042, %v1026
  %1555 = vmatprep.subr.bf16.mxu0 %v1156
  %1556 = vmatpush1.bf16.msra.mxu0 %v1155
  %1557 = vmatprep.subr.bf16.mxu0 %v1140
  %1558 = vmatpush1.bf16.msra.mxu0 %v1139
  %1559 = vmatprep.subr.bf16.mxu0 %v1124
  %1560 = vmatpush1.bf16.msra.mxu0 %v1123
  %1561 = vmatprep.subr.bf16.mxu0 %v1108
  %1562 = vmatpush1.bf16.msra.mxu0 %v1107
  %1563 = vmatprep.subr.bf16.mxu0 %v1092
  %1564 = vmatpush1.bf16.msra.mxu0 %v1091
  %1565 = vmatprep.subr.bf16.mxu0 %v1076
  %1566 = vmatpush1.bf16.msra.mxu0 %v1075
  %1567 = vmatprep.subr.bf16.mxu0 %v1060
  %1568 = vmatpush1.bf16.msra.mxu0 %v1059
  %1569 = vmatprep.subr.bf16.mxu0 %v1044
  %1570 = vmatpush1.bf16.msra.mxu0 %v1043
  %1571 = vmatprep.subr.bf16.mxu0 %v1284
  %1572 = vmatpush2.bf16.msra.mxu0 %v1283
  %1573 = vmatprep.subr.bf16.mxu0 %v1268
  %1574 = vmatpush2.bf16.msra.mxu0 %v1267
  %1575 = vmatprep.subr.bf16.mxu0 %v1252
  %1576 = vmatpush2.bf16.msra.mxu0 %v1251
  %1577 = vmatprep.subr.bf16.mxu0 %v1236
  %1578 = vmatpush2.bf16.msra.mxu0 %v1235
  %1579 = vmatprep.subr.bf16.mxu0 %v1220
  %1580 = vmatpush2.bf16.msra.mxu0 %v1219
  %1581 = vmatprep.subr.bf16.mxu0 %v1204
  %1582 = vmatpush2.bf16.msra.mxu0 %v1203
  %1583 = vmatprep.subr.bf16.mxu0 %v1188
  %1584 = vmatpush2.bf16.msra.mxu0 %v1187
  %1585 = vmatprep.subr.bf16.mxu0 %v1172
  %1586 = vmatpush2.bf16.msra.mxu0 %v1171
  %1587 = vmatprep.mubr.bf16.mxu0 %v272
  %1588 = vmatmul.mubr.bf16.gmra.mxu0 %v271
  %v1589 = vpop.f32.mrf.mxu0
  %v1590 = vadd.f32 0.0, %v1589
  %v1591 = vpop.f32.mrf.mxu0
  %v1592 = vadd.f32 0.0, %v1591
  %v1593 = vpop.f32.mrf.mxu0
  %v1594 = vpop.f32.mrf.mxu0
  %1595 = vdwg.mxu0
  %1596 = vmatprep.subr.bf16.mxu0 %v1158
  %1597 = vmatpush1.bf16.msra.mxu0 %v1157
  %1598 = vmatprep.subr.bf16.mxu0 %v1142
  %1599 = vmatpush1.bf16.msra.mxu0 %v1141
  %1600 = vmatprep.subr.bf16.mxu0 %v1126
  %1601 = vmatpush1.bf16.msra.mxu0 %v1125
  %1602 = vmatprep.subr.bf16.mxu0 %v1110
  %1603 = vmatpush1.bf16.msra.mxu0 %v1109
  %1604 = vmatprep.subr.bf16.mxu0 %v1094
  %1605 = vmatpush1.bf16.msra.mxu0 %v1093
  %1606 = vmatprep.subr.bf16.mxu0 %v1078
  %1607 = vmatpush1.bf16.msra.mxu0 %v1077
  %1608 = vmatprep.subr.bf16.mxu0 %v1062
  %1609 = vmatpush1.bf16.msra.mxu0 %v1061
  %1610 = vmatprep.subr.bf16.mxu0 %v1046
  %1611 = vmatpush1.bf16.msra.mxu0 %v1045
  %1612 = vmatprep.subr.bf16.mxu0 %v1286
  %1613 = vmatpush2.bf16.msra.mxu0 %v1285
  %1614 = vmatprep.subr.bf16.mxu0 %v1270
  %1615 = vmatpush2.bf16.msra.mxu0 %v1269
  %1616 = vmatprep.subr.bf16.mxu0 %v1254
  %1617 = vmatpush2.bf16.msra.mxu0 %v1253
  %1618 = vmatprep.subr.bf16.mxu0 %v1238
  %1619 = vmatpush2.bf16.msra.mxu0 %v1237
  %1620 = vmatprep.subr.bf16.mxu0 %v1222
  %1621 = vmatpush2.bf16.msra.mxu0 %v1221
  %1622 = vmatprep.subr.bf16.mxu0 %v1206
  %1623 = vmatpush2.bf16.msra.mxu0 %v1205
  %1624 = vmatprep.subr.bf16.mxu0 %v1190
  %1625 = vmatpush2.bf16.msra.mxu0 %v1189
  %1626 = vmatprep.subr.bf16.mxu0 %v1174
  %1627 = vmatpush2.bf16.msra.mxu0 %v1173
  %1628 = vmatprep.mubr.bf16.mxu0 %v272
  %1629 = vmatmul.mubr.bf16.gmra.mxu0 %v271
  %v1630 = vpop.f32.mrf.mxu0
  %v1631 = vadd.f32 0.0, %v1630
  %v1632 = vpop.f32.mrf.mxu0
  %v1633 = vadd.f32 0.0, %v1632
  %v1634 = vpop.f32.mrf.mxu0
  %v1635 = vpop.f32.mrf.mxu0
  %1636 = vdwg.mxu0
  %1637 = vmatprep.subr.bf16.mxu0 %v1160
  %1638 = vmatpush1.bf16.msra.mxu0 %v1159
  %1639 = vmatprep.subr.bf16.mxu0 %v1144
  %1640 = vmatpush1.bf16.msra.mxu0 %v1143
  %1641 = vmatprep.subr.bf16.mxu0 %v1128
  %1642 = vmatpush1.bf16.msra.mxu0 %v1127
  %1643 = vmatprep.subr.bf16.mxu0 %v1112
  %1644 = vmatpush1.bf16.msra.mxu0 %v1111
  %1645 = vmatprep.subr.bf16.mxu0 %v1096
  %1646 = vmatpush1.bf16.msra.mxu0 %v1095
  %1647 = vmatprep.subr.bf16.mxu0 %v1080
  %1648 = vmatpush1.bf16.msra.mxu0 %v1079
  %1649 = vmatprep.subr.bf16.mxu0 %v1064
  %1650 = vmatpush1.bf16.msra.mxu0 %v1063
  %1651 = vmatprep.subr.bf16.mxu0 %v1048
  %1652 = vmatpush1.bf16.msra.mxu0 %v1047
  %1653 = vmatprep.subr.bf16.mxu0 %v1288
  %1654 = vmatpush2.bf16.msra.mxu0 %v1287
  %1655 = vmatprep.subr.bf16.mxu0 %v1272
  %1656 = vmatpush2.bf16.msra.mxu0 %v1271
  %1657 = vmatprep.subr.bf16.mxu0 %v1256
  %1658 = vmatpush2.bf16.msra.mxu0 %v1255
  %1659 = vmatprep.subr.bf16.mxu0 %v1240
  %1660 = vmatpush2.bf16.msra.mxu0 %v1239
  %1661 = vmatprep.subr.bf16.mxu0 %v1224
  %1662 = vmatpush2.bf16.msra.mxu0 %v1223
  %1663 = vmatprep.subr.bf16.mxu0 %v1208
  %1664 = vmatpush2.bf16.msra.mxu0 %v1207
  %1665 = vmatprep.subr.bf16.mxu0 %v1192
  %1666 = vmatpush2.bf16.msra.mxu0 %v1191
  %1667 = vmatprep.subr.bf16.mxu0 %v1176
  %1668 = vmatpush2.bf16.msra.mxu0 %v1175
  %1669 = vmatprep.mubr.bf16.mxu0 %v272
  %1670 = vmatmul.mubr.bf16.gmra.mxu0 %v271
  %v1671 = vpop.f32.mrf.mxu0
  %v1672 = vadd.f32 0.0, %v1671
  %v1673 = vpop.f32.mrf.mxu0
  %v1674 = vadd.f32 0.0, %v1673
  %v1675 = vpop.f32.mrf.mxu0
  %v1676 = vpop.f32.mrf.mxu0
  %1677 = vdwg.mxu0
  %1678 = vmatprep.subr.bf16.mxu0 %v1162
  %1679 = vmatpush1.bf16.msra.mxu0 %v1161
  %1680 = vmatprep.subr.bf16.mxu0 %v1146
  %1681 = vmatpush1.bf16.msra.mxu0 %v1145
  %1682 = vmatprep.subr.bf16.mxu0 %v1130
  %1683 = vmatpush1.bf16.msra.mxu0 %v1129
  %1684 = vmatprep.subr.bf16.mxu0 %v1114
  %1685 = vmatpush1.bf16.msra.mxu0 %v1113
  %1686 = vmatprep.subr.bf16.mxu0 %v1098
  %1687 = vmatpush1.bf16.msra.mxu0 %v1097
  %1688 = vmatprep.subr.bf16.mxu0 %v1082
  %1689 = vmatpush1.bf16.msra.mxu0 %v1081
  %1690 = vmatprep.subr.bf16.mxu0 %v1066
  %1691 = vmatpush1.bf16.msra.mxu0 %v1065
  %1692 = vmatprep.subr.bf16.mxu0 %v1050
  %1693 = vmatpush1.bf16.msra.mxu0 %v1049
  %1694 = vmatprep.subr.bf16.mxu0 %v1290
  %1695 = vmatpush2.bf16.msra.mxu0 %v1289
  %1696 = vmatprep.subr.bf16.mxu0 %v1274
  %1697 = vmatpush2.bf16.msra.mxu0 %v1273
  %1698 = vmatprep.subr.bf16.mxu0 %v1258
  %1699 = vmatpush2.bf16.msra.mxu0 %v1257
  %1700 = vmatprep.subr.bf16.mxu0 %v1242
  %1701 = vmatpush2.bf16.msra.mxu0 %v1241
  %1702 = vmatprep.subr.bf16.mxu0 %v1226
  %1703 = vmatpush2.bf16.msra.mxu0 %v1225
  %1704 = vmatprep.subr.bf16.mxu0 %v1210
  %1705 = vmatpush2.bf16.msra.mxu0 %v1209
  %1706 = vmatprep.subr.bf16.mxu0 %v1194
  %1707 = vmatpush2.bf16.msra.mxu0 %v1193
  %1708 = vmatprep.subr.bf16.mxu0 %v1178
  %1709 = vmatpush2.bf16.msra.mxu0 %v1177
  %1710 = vmatprep.mubr.bf16.mxu0 %v272
  %1711 = vmatmul.mubr.bf16.gmra.mxu0 %v271
  %v1712 = vpop.f32.mrf.mxu0
  %v1713 = vadd.f32 0.0, %v1712
  %v1714 = vpop.f32.mrf.mxu0
  %v1715 = vadd.f32 0.0, %v1714
  %v1716 = vpop.f32.mrf.mxu0
  %v1717 = vpop.f32.mrf.mxu0
  %1718 = vdwg.mxu0
  %1719 = vmatprep.subr.bf16.mxu0 %v1164
  %1720 = vmatpush1.bf16.msra.mxu0 %v1163
  %1721 = vmatprep.subr.bf16.mxu0 %v1148
  %1722 = vmatpush1.bf16.msra.mxu0 %v1147
  %1723 = vmatprep.subr.bf16.mxu0 %v1132
  %1724 = vmatpush1.bf16.msra.mxu0 %v1131
  %1725 = vmatprep.subr.bf16.mxu0 %v1116
  %1726 = vmatpush1.bf16.msra.mxu0 %v1115
  %1727 = vmatprep.subr.bf16.mxu0 %v1100
  %1728 = vmatpush1.bf16.msra.mxu0 %v1099
  %1729 = vmatprep.subr.bf16.mxu0 %v1084
  %1730 = vmatpush1.bf16.msra.mxu0 %v1083
  %1731 = vmatprep.subr.bf16.mxu0 %v1068
  %1732 = vmatpush1.bf16.msra.mxu0 %v1067
  %1733 = vmatprep.subr.bf16.mxu0 %v1052
  %1734 = vmatpush1.bf16.msra.mxu0 %v1051
  %1735 = vmatprep.subr.bf16.mxu0 %v1292
  %1736 = vmatpush2.bf16.msra.mxu0 %v1291
  %1737 = vmatprep.subr.bf16.mxu0 %v1276
  %1738 = vmatpush2.bf16.msra.mxu0 %v1275
  %1739 = vmatprep.subr.bf16.mxu0 %v1260
  %1740 = vmatpush2.bf16.msra.mxu0 %v1259
  %1741 = vmatprep.subr.bf16.mxu0 %v1244
  %1742 = vmatpush2.bf16.msra.mxu0 %v1243
  %1743 = vmatprep.subr.bf16.mxu0 %v1228
  %1744 = vmatpush2.bf16.msra.mxu0 %v1227
  %1745 = vmatprep.subr.bf16.mxu0 %v1212
  %1746 = vmatpush2.bf16.msra.mxu0 %v1211
  %1747 = vmatprep.subr.bf16.mxu0 %v1196
  %1748 = vmatpush2.bf16.msra.mxu0 %v1195
  %1749 = vmatprep.subr.bf16.mxu0 %v1180
  %1750 = vmatpush2.bf16.msra.mxu0 %v1179
  %1751 = vmatprep.mubr.bf16.mxu0 %v272
  %1752 = vmatmul.mubr.bf16.gmra.mxu0 %v271
  %v1753 = vpop.f32.mrf.mxu0
  %v1754 = vadd.f32 0.0, %v1753
  %v1755 = vpop.f32.mrf.mxu0
  %v1756 = vadd.f32 0.0, %v1755
  %v1757 = vpop.f32.mrf.mxu0
  %v1758 = vpop.f32.mrf.mxu0
  %1759 = vdwg.mxu0
  %1760 = vmatprep.subr.bf16.mxu0 %v1166
  %1761 = vmatpush1.bf16.msra.mxu0 %v1165
  %1762 = vmatprep.subr.bf16.mxu0 %v1150
  %1763 = vmatpush1.bf16.msra.mxu0 %v1149
  %1764 = vmatprep.subr.bf16.mxu0 %v1134
  %1765 = vmatpush1.bf16.msra.mxu0 %v1133
  %1766 = vmatprep.subr.bf16.mxu0 %v1118
  %1767 = vmatpush1.bf16.msra.mxu0 %v1117
  %1768 = vmatprep.subr.bf16.mxu0 %v1102
  %1769 = vmatpush1.bf16.msra.mxu0 %v1101
  %1770 = vmatprep.subr.bf16.mxu0 %v1086
  %1771 = vmatpush1.bf16.msra.mxu0 %v1085
  %1772 = vmatprep.subr.bf16.mxu0 %v1070
  %1773 = vmatpush1.bf16.msra.mxu0 %v1069
  %1774 = vmatprep.subr.bf16.mxu0 %v1054
  %1775 = vmatpush1.bf16.msra.mxu0 %v1053
  %1776 = vmatprep.subr.bf16.mxu0 %v1294
  %1777 = vmatpush2.bf16.msra.mxu0 %v1293
  %1778 = vmatprep.subr.bf16.mxu0 %v1278
  %1779 = vmatpush2.bf16.msra.mxu0 %v1277
  %1780 = vmatprep.subr.bf16.mxu0 %v1262
  %1781 = vmatpush2.bf16.msra.mxu0 %v1261
  %1782 = vmatprep.subr.bf16.mxu0 %v1246
  %1783 = vmatpush2.bf16.msra.mxu0 %v1245
  %1784 = vmatprep.subr.bf16.mxu0 %v1230
  %1785 = vmatpush2.bf16.msra.mxu0 %v1229
  %1786 = vmatprep.subr.bf16.mxu0 %v1214
  %1787 = vmatpush2.bf16.msra.mxu0 %v1213
  %1788 = vmatprep.subr.bf16.mxu0 %v1198
  %1789 = vmatpush2.bf16.msra.mxu0 %v1197
  %1790 = vmatprep.subr.bf16.mxu0 %v1182
  %1791 = vmatpush2.bf16.msra.mxu0 %v1181
  %1792 = vmatprep.mubr.bf16.mxu0 %v272
  %1793 = vmatmul.mubr.bf16.gmra.mxu0 %v271
  %v1794 = vpop.f32.mrf.mxu0
  %v1795 = vadd.f32 0.0, %v1794
  %v1796 = vpop.f32.mrf.mxu0
  %v1797 = vadd.f32 0.0, %v1796
  %v1798 = vpop.f32.mrf.mxu0
  %v1799 = vpop.f32.mrf.mxu0
  %1800 = vdwg.mxu0
  %1801 = vmatprep.subr.bf16.mxu0 %v1168
  %1802 = vmatpush1.bf16.msra.mxu0 %v1167
  %1803 = vmatprep.subr.bf16.mxu0 %v1152
  %1804 = vmatpush1.bf16.msra.mxu0 %v1151
  %1805 = vmatprep.subr.bf16.mxu0 %v1136
  %1806 = vmatpush1.bf16.msra.mxu0 %v1135
  %1807 = vmatprep.subr.bf16.mxu0 %v1120
  %1808 = vmatpush1.bf16.msra.mxu0 %v1119
  %1809 = vmatprep.subr.bf16.mxu0 %v1104
  %1810 = vmatpush1.bf16.msra.mxu0 %v1103
  %1811 = vmatprep.subr.bf16.mxu0 %v1088
  %1812 = vmatpush1.bf16.msra.mxu0 %v1087
  %1813 = vmatprep.subr.bf16.mxu0 %v1072
  %1814 = vmatpush1.bf16.msra.mxu0 %v1071
  %1815 = vmatprep.subr.bf16.mxu0 %v1056
  %1816 = vmatpush1.bf16.msra.mxu0 %v1055
  %1817 = vmatprep.subr.bf16.mxu0 %v1296
  %1818 = vmatpush2.bf16.msra.mxu0 %v1295
  %1819 = vmatprep.subr.bf16.mxu0 %v1280
  %1820 = vmatpush2.bf16.msra.mxu0 %v1279
  %1821 = vmatprep.subr.bf16.mxu0 %v1264
  %1822 = vmatpush2.bf16.msra.mxu0 %v1263
  %1823 = vmatprep.subr.bf16.mxu0 %v1248
  %1824 = vmatpush2.bf16.msra.mxu0 %v1247
  %1825 = vmatprep.subr.bf16.mxu0 %v1232
  %1826 = vmatpush2.bf16.msra.mxu0 %v1231
  %1827 = vmatprep.subr.bf16.mxu0 %v1216
  %1828 = vmatpush2.bf16.msra.mxu0 %v1215
  %1829 = vmatprep.subr.bf16.mxu0 %v1200
  %1830 = vmatpush2.bf16.msra.mxu0 %v1199
  %1831 = vmatprep.subr.bf16.mxu0 %v1184
  %1832 = vmatpush2.bf16.msra.mxu0 %v1183
  %1833 = vmatprep.mubr.bf16.mxu0 %v272
  %1834 = vmatmul.mubr.bf16.gmra.mxu0 %v271
  %v1835 = vpop.f32.mrf.mxu0
  %v1836 = vadd.f32 0.0, %v1835
  %v1837 = vpop.f32.mrf.mxu0
  %v1838 = vadd.f32 0.0, %v1837
  %v1839 = vpop.f32.mrf.mxu0
  %v1840 = vpop.f32.mrf.mxu0
  %1841 = vdwg.mxu0
  %1842 = vmatprep.subr.bf16.mxu0 %v1170
  %1843 = vmatpush1.bf16.msra.mxu0 %v1169
  %1844 = vmatprep.subr.bf16.mxu0 %v1154
  %1845 = vmatpush1.bf16.msra.mxu0 %v1153
  %1846 = vmatprep.subr.bf16.mxu0 %v1138
  %1847 = vmatpush1.bf16.msra.mxu0 %v1137
  %1848 = vmatprep.subr.bf16.mxu0 %v1122
  %1849 = vmatpush1.bf16.msra.mxu0 %v1121
  %1850 = vmatprep.subr.bf16.mxu0 %v1106
  %1851 = vmatpush1.bf16.msra.mxu0 %v1105
  %1852 = vmatprep.subr.bf16.mxu0 %v1090
  %1853 = vmatpush1.bf16.msra.mxu0 %v1089
  %1854 = vmatprep.subr.bf16.mxu0 %v1074
  %1855 = vmatpush1.bf16.msra.mxu0 %v1073
  %1856 = vmatprep.subr.bf16.mxu0 %v1058
  %1857 = vmatpush1.bf16.msra.mxu0 %v1057
  %1858 = vmatprep.subr.bf16.mxu0 %v1298
  %1859 = vmatpush2.bf16.msra.mxu0 %v1297
  %1860 = vmatprep.subr.bf16.mxu0 %v1282
  %1861 = vmatpush2.bf16.msra.mxu0 %v1281
  %1862 = vmatprep.subr.bf16.mxu0 %v1266
  %1863 = vmatpush2.bf16.msra.mxu0 %v1265
  %1864 = vmatprep.subr.bf16.mxu0 %v1250
  %1865 = vmatpush2.bf16.msra.mxu0 %v1249
  %1866 = vmatprep.subr.bf16.mxu0 %v1234
  %1867 = vmatpush2.bf16.msra.mxu0 %v1233
  %1868 = vmatprep.subr.bf16.mxu0 %v1218
  %1869 = vmatpush2.bf16.msra.mxu0 %v1217
  %1870 = vmatprep.subr.bf16.mxu0 %v1202
  %1871 = vmatpush2.bf16.msra.mxu0 %v1201
  %1872 = vmatprep.subr.bf16.mxu0 %v1186
  %1873 = vmatpush2.bf16.msra.mxu0 %v1185
  %1874 = vmatprep.mubr.bf16.mxu0 %v272
  %1875 = vmatmul.mubr.bf16.gmra.mxu0 %v271
  %v1876 = vpop.f32.mrf.mxu0
  %v1877 = vadd.f32 0.0, %v1876
  %v1878 = vpop.f32.mrf.mxu0
  %v1879 = vadd.f32 0.0, %v1878
  %v1880 = vpop.f32.mrf.mxu0
  %v1881 = vpop.f32.mrf.mxu0
  %1882 = vdwg.mxu0
  %v1883 = vadd.f32 %v1590, %v1592
  %v1884 = vadd.f32 %v1883, %v1631
  %v1885 = vadd.f32 %v1884, %v1633
  %v1886 = vadd.f32 %v1885, %v1672
  %v1887 = vadd.f32 %v1886, %v1674
  %v1888 = vadd.f32 %v1887, %v1713
  %v1889 = vadd.f32 %v1888, %v1715
  %v1890 = vadd.f32 %v1889, %v1754
  %v1891 = vadd.f32 %v1890, %v1756
  %v1892 = vadd.f32 %v1891, %v1795
  %v1893 = vadd.f32 %v1892, %v1797
  %v1894 = vadd.f32 %v1893, %v1836
  %v1895 = vadd.f32 %v1894, %v1838
  %v1896 = vadd.f32 %v1895, %v1877
  %v1897 = vadd.f32 %v1896, %v1879
  %1898 = vadd.xlane.f32.xlu0 %v1897
  %v1899 = vpop.xlane.xlu0 %1898
  %v1900 = vrcp.pop 2048.0
  %v1901 = vmul.f32 %v1899, %v1900
  %v1902 = vsub.f32 %v1590, %v1901
  %v1903 = vsub.f32 %v1592, %v1901
  %v1904 = vsub.f32 %v1631, %v1901
  %v1905 = vsub.f32 %v1633, %v1901
  %v1906 = vsub.f32 %v1672, %v1901
  %v1907 = vsub.f32 %v1674, %v1901
  %v1908 = vsub.f32 %v1713, %v1901
  %v1909 = vsub.f32 %v1715, %v1901
  %v1910 = vsub.f32 %v1754, %v1901
  %v1911 = vsub.f32 %v1756, %v1901
  %v1912 = vsub.f32 %v1795, %v1901
  %v1913 = vsub.f32 %v1797, %v1901
  %v1914 = vsub.f32 %v1836, %v1901
  %v1915 = vsub.f32 %v1838, %v1901
  %v1916 = vsub.f32 %v1877, %v1901
  %v1917 = vsub.f32 %v1879, %v1901
  %v1918 = vmul.f32 %v1902, %v1902
  %v1919 = vmul.f32 %v1903, %v1903
  %v1920 = vmul.f32 %v1904, %v1904
  %v1921 = vmul.f32 %v1905, %v1905
  %v1922 = vmul.f32 %v1906, %v1906
  %v1923 = vmul.f32 %v1907, %v1907
  %v1924 = vmul.f32 %v1908, %v1908
  %v1925 = vmul.f32 %v1909, %v1909
  %v1926 = vmul.f32 %v1910, %v1910
  %v1927 = vmul.f32 %v1911, %v1911
  %v1928 = vmul.f32 %v1912, %v1912
  %v1929 = vmul.f32 %v1913, %v1913
  %v1930 = vmul.f32 %v1914, %v1914
  %v1931 = vmul.f32 %v1915, %v1915
  %v1932 = vmul.f32 %v1916, %v1916
  %v1933 = vmul.f32 %v1917, %v1917
  %v1934 = vadd.f32 %v1918, %v1919
  %v1935 = vadd.f32 %v1934, %v1920
  %v1936 = vadd.f32 %v1935, %v1921
  %v1937 = vadd.f32 %v1936, %v1922
  %v1938 = vadd.f32 %v1937, %v1923
  %v1939 = vadd.f32 %v1938, %v1924
  %v1940 = vadd.f32 %v1939, %v1925
  %v1941 = vadd.f32 %v1940, %v1926
  %v1942 = vadd.f32 %v1941, %v1927
  %v1943 = vadd.f32 %v1942, %v1928
  %v1944 = vadd.f32 %v1943, %v1929
  %v1945 = vadd.f32 %v1944, %v1930
  %v1946 = vadd.f32 %v1945, %v1931
  %v1947 = vadd.f32 %v1946, %v1932
  %v1948 = vadd.f32 %v1947, %v1933
  %1949 = vadd.xlane.f32.xlu0 %v1948
  %v1950 = vpop.xlane.xlu0 %1949
  %v1951 = vmul.f32 %v1950, %v1900
  %v1952 = vadd.f32 %v1951, 1e-05
  %v1953 = vrsqrt.pop %v1952
  %v1954 = vmul.f32 %v1902, %v1953
  %v1955 = vmul.f32 %v1903, %v1953
  %v1956 = vmul.f32 %v1904, %v1953
  %v1957 = vmul.f32 %v1905, %v1953
  %v1958 = vmul.f32 %v1906, %v1953
  %v1959 = vmul.f32 %v1907, %v1953
  %v1960 = vmul.f32 %v1908, %v1953
  %v1961 = vmul.f32 %v1909, %v1953
  %v1962 = vmul.f32 %v1910, %v1953
  %v1963 = vmul.f32 %v1911, %v1953
  %v1964 = vmul.f32 %v1912, %v1953
  %v1965 = vmul.f32 %v1913, %v1953
  %v1966 = vmul.f32 %v1914, %v1953
  %v1967 = vmul.f32 %v1915, %v1953
  %v1968 = vmul.f32 %v1916, %v1953
  %v1969 = vmul.f32 %v1917, %v1953
  %vm1970 = vcmp.ge.f32.partialorder %v1954, 0.0
  %vm1971 = vcmp.ge.f32.partialorder %v1955, 0.0
  %vm1972 = vcmp.ge.f32.partialorder %v1956, 0.0
  %vm1973 = vcmp.ge.f32.partialorder %v1957, 0.0
  %vm1974 = vcmp.ge.f32.partialorder %v1958, 0.0
  %vm1975 = vcmp.ge.f32.partialorder %v1959, 0.0
  %vm1976 = vcmp.ge.f32.partialorder %v1960, 0.0
  %vm1977 = vcmp.ge.f32.partialorder %v1961, 0.0
  %vm1978 = vcmp.ge.f32.partialorder %v1962, 0.0
  %vm1979 = vcmp.ge.f32.partialorder %v1963, 0.0
  %vm1980 = vcmp.ge.f32.partialorder %v1964, 0.0
  %vm1981 = vcmp.ge.f32.partialorder %v1965, 0.0
  %vm1982 = vcmp.ge.f32.partialorder %v1966, 0.0
  %vm1983 = vcmp.ge.f32.partialorder %v1967, 0.0
  %vm1984 = vcmp.ge.f32.partialorder %v1968, 0.0
  %vm1985 = vcmp.ge.f32.partialorder %v1969, 0.0
  %v1986 = vmul.f32 %v1954, 0.2
  %v1987 = vmul.f32 %v1955, 0.2
  %v1988 = vmul.f32 %v1956, 0.2
  %v1989 = vmul.f32 %v1957, 0.2
  %v1990 = vmul.f32 %v1958, 0.2
  %v1991 = vmul.f32 %v1959, 0.2
  %v1992 = vmul.f32 %v1960, 0.2
  %v1993 = vmul.f32 %v1961, 0.2
  %v1994 = vmul.f32 %v1962, 0.2
  %v1995 = vmul.f32 %v1963, 0.2
  %v1996 = vmul.f32 %v1964, 0.2
  %v1997 = vmul.f32 %v1965, 0.2
  %v1998 = vmul.f32 %v1966, 0.2
  %v1999 = vmul.f32 %v1967, 0.2
  %v2000 = vmul.f32 %v1968, 0.2
  %v2001 = vmul.f32 %v1969, 0.2
  %v2002 = vsel %vm1970, %v1954, %v1986
  %v2003 = vsel %vm1971, %v1955, %v1987
  %v2004 = vsel %vm1972, %v1956, %v1988
  %v2005 = vsel %vm1973, %v1957, %v1989
  %v2006 = vsel %vm1974, %v1958, %v1990
  %v2007 = vsel %vm1975, %v1959, %v1991
  %v2008 = vsel %vm1976, %v1960, %v1992
  %v2009 = vsel %vm1977, %v1961, %v1993
  %v2010 = vsel %vm1978, %v1962, %v1994
  %v2011 = vsel %vm1979, %v1963, %v1995
  %v2012 = vsel %vm1980, %v1964, %v1996
  %v2013 = vsel %vm1981, %v1965, %v1997
  %v2014 = vsel %vm1982, %v1966, %v1998
  %v2015 = vsel %vm1983, %v1967, %v1999
  %v2016 = vsel %vm1984, %v1968, %v2000
  %v2017 = vsel %vm1985, %v1969, %v2001
  %2018 = vst [vmem:[%s2] sm:$0xff] %v2002
  %2019 = vst [vmem:[%s2 + $0x8] sm:$0xff] %v2003
  %2020 = vst [vmem:[%s2 + $0x10] sm:$0xff] %v2004
  %2021 = vst [vmem:[%s2 + $0x18] sm:$0xff] %v2005
  %2022 = vst [vmem:[%s2 + $0x20] sm:$0xff] %v2006
  %2023 = vst [vmem:[%s2 + $0x28] sm:$0xff] %v2007
  %2024 = vst [vmem:[%s2 + $0x30] sm:$0xff] %v2008
  %2025 = vst [vmem:[%s2 + $0x38] sm:$0xff] %v2009
  %2026 = vst [vmem:[%s2 + $0x40] sm:$0xff] %v2010
  %2027 = vst [vmem:[%s2 + $0x48] sm:$0xff] %v2011
  %2028 = vst [vmem:[%s2 + $0x50] sm:$0xff] %v2012
  %2029 = vst [vmem:[%s2 + $0x58] sm:$0xff] %v2013
  %2030 = vst [vmem:[%s2 + $0x60] sm:$0xff] %v2014
  %2031 = vst [vmem:[%s2 + $0x68] sm:$0xff] %v2015
  %2032 = vst [vmem:[%s2 + $0x70] sm:$0xff] %v2016
  %2033 = vst [vmem:[%s2 + $0x78] sm:$0xff] %v2017
  // Predicated region
  $region10: #{generator_forward.7} parent=0 // pred_check
    _
  $region11: #{generator_forward.7} parent=0 // pred_check_branch
    %2035 = sbr.rel (0) target = $region13
  $region12: #{generator_forward.7} parent=0 // pred_region
    _
  $region13: #{generator_forward.7} parent=0 // pred_fallthru
    _
  // Predicated region
  $region14: #{generator_forward.7} parent=0 // pred_check
    _
  $region15: #{generator_forward.7} parent=0 // pred_check_branch
    %2037 = sbr.rel (0) target = $region17
  $region16: #{generator_forward.7} parent=0 // pred_region
    _
  $region17: #{generator_forward.7} parent=0 // pred_fallthru
    _

</llo_original>
